<compile_context>
chip_gen: v6e
topology: v6e:2x2x1
jax: 0.10.0
libtpu: 0.0.40
codegen_flags: <defaults>
</compile_context>

<pallas_src>
import functools

import jax
import jax.numpy as jnp
from jax.experimental import pallas as pl
from jax.experimental.pallas import tpu as pltpu


def _round_up(x, m):
    return ((x + m - 1) // m) * m


def _lut3d_kernel(x_ref, lut_ref, jj_ref, kk_ref, ii_ref, sel_ref, out_ref, *, dim):
    # x_ref:   (3, P)            pixel block, rows = (r, g, b), pixels on lanes
    # lut_ref: (3*dim, dim*dim)  bf16, lut_ref[c*dim + i, j*dim + k] = LUT[c, i, j, k]
    # jj_ref:  (dim*dim, 1) f32  jj[n] = n // dim          (hoisted constant)
    # kk_ref:  (dim*dim, 1) f32  kk[n] = n %  dim          (hoisted constant)
    # ii_ref:  (3*dim, 1)   f32  ii[n] = n %  dim          (hoisted constant)
    # sel_ref: (3, 3*dim)   f32  sel[c, n] = (n // dim == c)  channel selector
    # out_ref: (3, P)       f32
    x = x_ref[...].astype(jnp.float32)                          # (3, P)

    # PyTorch: g = (x - 0.5) * 2 ; grid_sample(align_corners=True) unnormalizes
    # with ((g + 1) / 2) * (dim - 1) == x * (dim - 1).  padding_mode='border'
    # clamps the sample coordinate to the valid range.
    t = jnp.clip(x * (dim - 1.0), 0.0, dim - 1.0)               # (3, P)
    tr = t[0:1, :]   # grid x -> W_in -> k axis of the LUT
    tg = t[1:2, :]   # grid y -> H_in -> j axis of the LUT
    tb = t[2:3, :]   # grid z -> D_in -> i axis of the LUT

    # Separable tent weights over the (j, k) plane, built directly in the
    # (dim*dim, P) layout the MXU consumes.  Tent math stays in f32 (v5e has no
    # bf16 VPU); the result is cast to bf16 only at the MXU boundary.
    w_jk = (jnp.maximum(0.0, 1.0 - jnp.abs(tg - jj_ref[...])) *
            jnp.maximum(0.0, 1.0 - jnp.abs(tr - kk_ref[...]))
            ).astype(jnp.bfloat16)                              # (d2, P) bf16

    # MXU stage: contract the (j, k) plane against the LUT for every (c, i).
    m = jnp.dot(lut_ref[...], w_jk,
                preferred_element_type=jnp.float32)             # (3*dim, P) f32

    # Remaining contraction over i with the per-pixel b-axis tent, done as an
    # elementwise multiply plus a tiny constant channel-selector matmul so no
    # (3*dim, P) -> (3, dim, P) reshape/relayout is needed.
    wb = jnp.maximum(0.0, 1.0 - jnp.abs(tb - ii_ref[...]))      # (3*dim, P) f32
    out_ref[...] = jnp.dot(sel_ref[...], m * wb,
                           preferred_element_type=jnp.float32)  # (3, P)


@functools.partial(jax.jit, static_argnames=("tile_pixels",))
def generator3dlut_hr_lut_forward(x_nchw, lut, *, tile_pixels=2048):
    """x_nchw: (N, 3, H, W) float; lut: (3, dim, dim, dim) float -> (N, 3, H, W) f32."""
    N, C, H, W = x_nchw.shape
    assert C == 3, "Generator3DLUT expects a 3-channel (RGB) input"
    dim = lut.shape[1]
    d2 = dim * dim

    # Lane-dense pixel-major view: (N, 3, H*W).  Contiguous reshape, no transpose,
    # and no full-image dtype cast (the kernel upcasts each (3, tile) block).
    hw = H * W
    x_flat = x_nchw.reshape(N, 3, hw)

    tile = min(tile_pixels, _round_up(hw, 128))                 # lanes per grid step
    hw_pad = _round_up(hw, tile)
    if hw_pad != hw:
        x_flat = jnp.pad(x_flat, ((0, 0), (0, 0), (0, hw_pad - hw)))

    # LUT as (3*dim, dim*dim) bf16: row c*dim + i, column j*dim + k.
    lut2 = lut.reshape(3 * dim, d2).astype(jnp.bfloat16)

    # Hoisted index constants (resident across the whole grid).
    n_jk = jnp.arange(d2, dtype=jnp.int32)
    jj = (n_jk // dim).astype(jnp.float32).reshape(d2, 1)
    kk = (n_jk % dim).astype(jnp.float32).reshape(d2, 1)
    ii = (jnp.arange(3 * dim, dtype=jnp.int32) % dim).astype(jnp.float32).reshape(3 * dim, 1)
    sel = (jnp.arange(3, dtype=jnp.int32)[:, None] ==
           (jnp.arange(3 * dim, dtype=jnp.int32)[None, :] // dim)).astype(jnp.float32)

    const_map = lambda n, t: (0, 0)
    out_flat = pl.pallas_call(
        functools.partial(_lut3d_kernel, dim=dim),
        out_shape=jax.ShapeDtypeStruct((N, 3, hw_pad), jnp.float32),
        grid_spec=pltpu.PrefetchScalarGridSpec(
            num_scalar_prefetch=0,
            grid=(N, hw_pad // tile),
            in_specs=[
                pl.BlockSpec((None, 3, tile), lambda n, t: (n, 0, t)),
                pl.BlockSpec((3 * dim, d2), const_map),
                pl.BlockSpec((d2, 1), const_map),
                pl.BlockSpec((d2, 1), const_map),
                pl.BlockSpec((3 * dim, 1), const_map),
                pl.BlockSpec((3, 3 * dim), const_map),
            ],
            out_specs=pl.BlockSpec((None, 3, tile), lambda n, t: (n, 0, t)),
        ),
        compiler_params=pltpu.CompilerParams(
            dimension_semantics=("parallel", "parallel"),
            vmem_limit_bytes=40 * 1024 * 1024,
        ),
    )(x_flat, lut2, jj, kk, ii, sel)

    return out_flat[:, :, :hw].reshape(N, 3, H, W)


def _reference_forward(x_nchw, lut):
    """Pure-JAX reference: trilinear grid_sample, border padding, align_corners=True."""
    dim = lut.shape[1]
    x = jnp.transpose(x_nchw, (0, 2, 3, 1)).astype(jnp.float32)   # (N, H, W, 3)
    t = jnp.clip(x * (dim - 1.0), 0.0, dim - 1.0)
    tr, tg, tb = t[..., 0], t[..., 1], t[..., 2]                  # -> k, j, i axes
    k0 = jnp.clip(jnp.floor(tr), 0, dim - 2).astype(jnp.int32)
    j0 = jnp.clip(jnp.floor(tg), 0, dim - 2).astype(jnp.int32)
    i0 = jnp.clip(jnp.floor(tb), 0, dim - 2).astype(jnp.int32)
    fr = tr - k0.astype(jnp.float32)
    fg = tg - j0.astype(jnp.float32)
    fb = tb - i0.astype(jnp.float32)
    out = jnp.zeros((3,) + x.shape[:-1], jnp.float32)             # (3, N, H, W)
    for di, wi in ((0, 1.0 - fb), (1, fb)):
        for dj, wj in ((0, 1.0 - fg), (1, fg)):
            for dk, wk in ((0, 1.0 - fr), (1, fr)):
                out = out + (wi * wj * wk)[None] * lut[:, i0 + di, j0 + dj, k0 + dk]
    return jnp.transpose(out, (1, 0, 2, 3))                       # (N, 3, H, W)


def make_identity_lut(dim):
    """Identity 3D LUT: ch0 varies with k, ch1 with j, ch2 with i."""
    r = jnp.arange(dim, dtype=jnp.float32) / float(dim - 1)
    ch_r = jnp.broadcast_to(r[None, None, :], (dim, dim, dim))
    ch_g = jnp.broadcast_to(r[None, :, None], (dim, dim, dim))
    ch_b = jnp.broadcast_to(r[:, None, None], (dim, dim, dim))
    return jnp.stack([ch_r, ch_g, ch_b], axis=0)                  # (3, dim, dim, dim)


if __name__ == "__main__":
    key = jax.random.PRNGKey(0)
    kx, kl = jax.random.split(key)

    N, C, H, W = 2, 3, 16, 16
    dim = 33  # module default

    x = jax.random.uniform(kx, (N, C, H, W), dtype=jnp.float32)
    # TODO(synk): the PyTorch module initializes its LUT from 'lut3d_rgb.txt'
    # (values / 255); file I/O is out of scope here, so the test uses a
    # deterministic in-memory LUT with the same shape and [0, 1] value range.
    lut = jax.random.uniform(kl, (3, dim, dim, dim), dtype=jnp.float32)

    out = jax.block_until_ready(generator3dlut_hr_lut_forward(x, lut))
    assert out.shape == (N, C, H, W) and out.dtype == jnp.float32

    ref = _reference_forward(x, lut)
    err = float(jnp.max(jnp.abs(out - ref)))
    # Tolerance leaves room for the single-pass bf16 MXU contraction (tent
    # weights sum to 1, LUT values in [0, 1] -> abs error <~ 6e-3).
    assert err < 1e-2, f"max abs err vs reference = {err}"

    # Sanity: an identity LUT reproduces the (border-clamped) input.
    out_id = jax.block_until_ready(
        generator3dlut_hr_lut_forward(x, make_identity_lut(dim)))
    err_id = float(jnp.max(jnp.abs(out_id - jnp.clip(x, 0.0, 1.0))))
    assert err_id < 1e-2, f"identity-LUT max abs err = {err_id}"

    print("KERNEL_OK")
</pallas_src>

<mosaic_0001>
module attributes {stable_mosaic.version = 11 : i64} {
  func.func @_lut3d_kernel(%arg0: i32, %arg1: i32, %arg2: memref<1x3x256xf32, #tpu.memory_space<vmem>>, %arg3: memref<99x1089xbf16, #tpu.memory_space<vmem>>, %arg4: memref<1089x1xf32, #tpu.memory_space<vmem>>, %arg5: memref<1089x1xf32, #tpu.memory_space<vmem>>, %arg6: memref<99x1xf32, #tpu.memory_space<vmem>>, %arg7: memref<3x99xf32, #tpu.memory_space<vmem>>, %arg8: memref<1x3x256xf32, #tpu.memory_space<vmem>>) attributes {dimension_semantics = [#tpu.dimension_semantics<parallel>, #tpu.dimension_semantics<parallel>], iteration_bounds = array<i64: 2, 1>, scalar_prefetch = 0 : i64, scratch_operands = 0 : i64, tpu.core_type = #tpu.core_type<tc>, window_params = [{transform_indices = @transform_0, window_bounds = array<i64: 1, 3, 256>}, {pipeline_mode = #tpu.pipeline_mode<synchronous>, transform_indices = @transform_1, window_bounds = array<i64: 99, 1089>}, {pipeline_mode = #tpu.pipeline_mode<synchronous>, transform_indices = @transform_2, window_bounds = array<i64: 1089, 1>}, {pipeline_mode = #tpu.pipeline_mode<synchronous>, transform_indices = @transform_3, window_bounds = array<i64: 1089, 1>}, {pipeline_mode = #tpu.pipeline_mode<synchronous>, transform_indices = @transform_4, window_bounds = array<i64: 99, 1>}, {pipeline_mode = #tpu.pipeline_mode<synchronous>, transform_indices = @transform_5, window_bounds = array<i64: 3, 99>}, {transform_indices = @transform_6, window_bounds = array<i64: 1, 3, 256>}]} {
    %c0 = arith.constant 0 : index
    %c0_0 = arith.constant 0 : index
    %c0_1 = arith.constant 0 : index
    %0 = vector.load %arg2[%c0, %c0_0, %c0_1] : memref<1x3x256xf32, #tpu.memory_space<vmem>>, vector<1x3x256xf32>
    %1 = vector.shape_cast %0 : vector<1x3x256xf32> to vector<3x256xf32>
    %cst = arith.constant 3.200000e+01 : f32
    %2 = vector.broadcast %cst : f32 to vector<3x256xf32>
    %3 = arith.mulf %1, %2 : vector<3x256xf32>
    %cst_2 = arith.constant 0.000000e+00 : f32
    %cst_3 = arith.constant 3.200000e+01 : f32
    %4 = vector.broadcast %cst_2 : f32 to vector<3x256xf32>
    %5 = arith.maximumf %4, %3 : vector<3x256xf32>
    %6 = vector.broadcast %cst_3 : f32 to vector<3x256xf32>
    %7 = arith.minimumf %6, %5 : vector<3x256xf32>
    %8 = vector.extract_strided_slice %7 {offsets = [0, 0], sizes = [1, 256], strides = [1, 1]} : vector<3x256xf32> to vector<1x256xf32>
    %9 = vector.extract_strided_slice %7 {offsets = [1, 0], sizes = [1, 256], strides = [1, 1]} : vector<3x256xf32> to vector<1x256xf32>
    %10 = vector.extract_strided_slice %7 {offsets = [2, 0], sizes = [1, 256], strides = [1, 1]} : vector<3x256xf32> to vector<1x256xf32>
    %c0_4 = arith.constant 0 : index
    %c0_5 = arith.constant 0 : index
    %11 = vector.load %arg4[%c0_4, %c0_5] : memref<1089x1xf32, #tpu.memory_space<vmem>>, vector<1089x1xf32>
    %12 = vector.broadcast %9 : vector<1x256xf32> to vector<1089x256xf32>
    %13 = vector.broadcast %11 : vector<1089x1xf32> to vector<1089x256xf32>
    %14 = arith.subf %12, %13 : vector<1089x256xf32>
    %15 = math.absf %14 : vector<1089x256xf32>
    %cst_6 = arith.constant 1.000000e+00 : f32
    %16 = vector.broadcast %cst_6 : f32 to vector<1089x256xf32>
    %17 = arith.subf %16, %15 : vector<1089x256xf32>
    %cst_7 = arith.constant 0.000000e+00 : f32
    %18 = vector.broadcast %cst_7 : f32 to vector<1089x256xf32>
    %19 = arith.maximumf %18, %17 : vector<1089x256xf32>
    %c0_8 = arith.constant 0 : index
    %c0_9 = arith.constant 0 : index
    %20 = vector.load %arg5[%c0_8, %c0_9] : memref<1089x1xf32, #tpu.memory_space<vmem>>, vector<1089x1xf32>
    %21 = vector.broadcast %8 : vector<1x256xf32> to vector<1089x256xf32>
    %22 = vector.broadcast %20 : vector<1089x1xf32> to vector<1089x256xf32>
    %23 = arith.subf %21, %22 : vector<1089x256xf32>
    %24 = math.absf %23 : vector<1089x256xf32>
    %cst_10 = arith.constant 1.000000e+00 : f32
    %25 = vector.broadcast %cst_10 : f32 to vector<1089x256xf32>
    %26 = arith.subf %25, %24 : vector<1089x256xf32>
    %cst_11 = arith.constant 0.000000e+00 : f32
    %27 = vector.broadcast %cst_11 : f32 to vector<1089x256xf32>
    %28 = arith.maximumf %27, %26 : vector<1089x256xf32>
    %29 = arith.mulf %19, %28 : vector<1089x256xf32>
    %30 = arith.truncf %29 : vector<1089x256xf32> to vector<1089x256xbf16>
    %c0_12 = arith.constant 0 : index
    %c0_13 = arith.constant 0 : index
    %31 = vector.load %arg3[%c0_12, %c0_13] : memref<99x1089xbf16, #tpu.memory_space<vmem>>, vector<99x1089xbf16>
    %cst_14 = arith.constant dense<0.000000e+00> : vector<99x256xf32>
    %32 = tpu.matmul %31, %30, %cst_14 {dimension_numbers = #tpu.dot_dimension_numbers<[1], [0], [0], [1], [0, 0, 1, 1], [], []>} : vector<99x1089xbf16>, vector<1089x256xbf16>, vector<99x256xf32> -> vector<99x256xf32>
    %c0_15 = arith.constant 0 : index
    %c0_16 = arith.constant 0 : index
    %33 = vector.load %arg6[%c0_15, %c0_16] : memref<99x1xf32, #tpu.memory_space<vmem>>, vector<99x1xf32>
    %34 = vector.broadcast %10 : vector<1x256xf32> to vector<99x256xf32>
    %35 = vector.broadcast %33 : vector<99x1xf32> to vector<99x256xf32>
    %36 = arith.subf %34, %35 : vector<99x256xf32>
    %37 = math.absf %36 : vector<99x256xf32>
    %cst_17 = arith.constant 1.000000e+00 : f32
    %38 = vector.broadcast %cst_17 : f32 to vector<99x256xf32>
    %39 = arith.subf %38, %37 : vector<99x256xf32>
    %cst_18 = arith.constant 0.000000e+00 : f32
    %40 = vector.broadcast %cst_18 : f32 to vector<99x256xf32>
    %41 = arith.maximumf %40, %39 : vector<99x256xf32>
    %c0_19 = arith.constant 0 : index
    %c0_20 = arith.constant 0 : index
    %42 = vector.load %arg7[%c0_19, %c0_20] : memref<3x99xf32, #tpu.memory_space<vmem>>, vector<3x99xf32>
    %43 = arith.mulf %32, %41 : vector<99x256xf32>
    %cst_21 = arith.constant dense<0.000000e+00> : vector<3x256xf32>
    %44 = tpu.matmul %42, %43, %cst_21 {dimension_numbers = #tpu.dot_dimension_numbers<[1], [0], [0], [1], [0, 0, 1, 1], [], []>} : vector<3x99xf32>, vector<99x256xf32>, vector<3x256xf32> -> vector<3x256xf32>
    %c0_22 = arith.constant 0 : index
    %c0_23 = arith.constant 0 : index
    %c0_24 = arith.constant 0 : index
    %45 = vector.load %arg8[%c0_22, %c0_23, %c0_24] : memref<1x3x256xf32, #tpu.memory_space<vmem>>, vector<1x3x256xf32>
    %46 = vector.shape_cast %45 : vector<1x3x256xf32> to vector<3x256xf32>
    %47 = vector.shape_cast %44 : vector<3x256xf32> to vector<1x3x256xf32>
    tpu.vector_store %arg8[%c0_22, %c0_23, %c0_24], %47 {strides = array<i32>} : memref<1x3x256xf32, #tpu.memory_space<vmem>>, vector<1x3x256xf32>,
    return
  }
  func.func @transform_0(%arg0: i32, %arg1: i32) -> (i32, i32, i32) {
    %c0_i32 = arith.constant 0 : i32
    %c0_i32_0 = arith.constant 0 : i32
    return %arg0, %c0_i32, %arg1 : i32, i32, i32
  }
  func.func @transform_1(%arg0: i32, %arg1: i32) -> (i32, i32) {
    %c0_i32 = arith.constant 0 : i32
    %c0_i32_0 = arith.constant 0 : i32
    %c0_i32_1 = arith.constant 0 : i32
    return %c0_i32, %c0_i32_0 : i32, i32
  }
  func.func @transform_2(%arg0: i32, %arg1: i32) -> (i32, i32) {
    %c0_i32 = arith.constant 0 : i32
    %c0_i32_0 = arith.constant 0 : i32
    %c0_i32_1 = arith.constant 0 : i32
    return %c0_i32, %c0_i32_0 : i32, i32
  }
  func.func @transform_3(%arg0: i32, %arg1: i32) -> (i32, i32) {
    %c0_i32 = arith.constant 0 : i32
    %c0_i32_0 = arith.constant 0 : i32
    %c0_i32_1 = arith.constant 0 : i32
    return %c0_i32, %c0_i32_0 : i32, i32
  }
  func.func @transform_4(%arg0: i32, %arg1: i32) -> (i32, i32) {
    %c0_i32 = arith.constant 0 : i32
    %c0_i32_0 = arith.constant 0 : i32
    %c0_i32_1 = arith.constant 0 : i32
    return %c0_i32, %c0_i32_0 : i32, i32
  }
  func.func @transform_5(%arg0: i32, %arg1: i32) -> (i32, i32) {
    %c0_i32 = arith.constant 0 : i32
    %c0_i32_0 = arith.constant 0 : i32
    %c0_i32_1 = arith.constant 0 : i32
    return %c0_i32, %c0_i32_0 : i32, i32
  }
  func.func @transform_6(%arg0: i32, %arg1: i32) -> (i32, i32, i32) {
    %c0_i32 = arith.constant 0 : i32
    %c0_i32_0 = arith.constant 0 : i32
    return %arg0, %c0_i32, %arg1 : i32, i32, i32
  }
}

</mosaic_0001>

<llo_original>
// kernel: generator3dlut_hr_lut_forward.1
$region0: #{generator3dlut_hr_lut_forward.1}
  #allocation0 [shape = 'u32[]', space=smem, size = 0x4, offset = 0x4, fixed_abs, tag = 'smem constant byte address 0x4 - core index']
  #allocation1 [shape = 'u32[144,128]{1,0:T(1,128)}', space=vmem, size = 0x12000, scoped, tag = 'internal scratch']
  %s0 = inlined_call_operand.vmem [shape: f32[2,3,256], index: 0, kind: input, shape index: {}]
  %s1 = inlined_call_operand.vmem [shape: bf16[99,1089], index: 1, kind: input, shape index: {}]
  %s2 = inlined_call_operand.vmem [shape: f32[1089,1], index: 2, kind: input, shape index: {}]
  %s3 = inlined_call_operand.vmem [shape: f32[1089,1], index: 3, kind: input, shape index: {}]
  %s4 = inlined_call_operand.vmem [shape: f32[99,1], index: 4, kind: input, shape index: {}]
  %s5 = inlined_call_operand.vmem [shape: f32[3,99], index: 5, kind: input, shape index: {}]
  %s6 = inlined_call_operand.vmem [shape: f32[2,3,256], index: 6, kind: output, shape index: {}]
  %s7 = sld [smem:[#allocation0]]
  $region57: #{generator3dlut_hr_lut_forward.1} parent=0
    _
  %s9 = ssub.s32 1, %s7
  %s10 = scalar_select 0, %s9, %s7
  loop: start=0, step=1, limit=4
  $region2: #{generator3dlut_hr_lut_forward.1} parent=0 // loop_pre_header
    _
  $region3: #{generator3dlut_hr_lut_forward.1} parent=0 // loop_header
    %s12 = sphi 0, %s16
    %p13 = scmp.ge.s32.totalorder %s12, 4
    %s19 = sphi 0, %s31
    %s20 = sphi 0, %s27
    %s21 = sphi 0, %s19
    %s22 = sphi 0, %s20
    %s23 = sphi 0, %s21
    %s24 = sphi 0, %s22
    %s36 = sphi 0, %s38
    %s39 = sphi 0, %s36
    %s40 = sphi 0, %s39
    %s56 = sphi 0, %s40
    %s60 = sphi 0, %s60
    %s62 = sphi 0, %s60
    %s63 = sphi 0, %s62
    %s77 = sphi 0, %s63
    %s81 = sphi 0, %s81
    %s83 = sphi 0, %s81
    %s84 = sphi 0, %s83
    %s98 = sphi 0, %s84
    %s102 = sphi 0, %s102
    %s104 = sphi 0, %s102
    %s105 = sphi 0, %s104
    %s119 = sphi 0, %s105
    %s123 = sphi 0, %s123
    %s125 = sphi 0, %s123
    %s126 = sphi 0, %s125
    %s140 = sphi 0, %s126
    %s144 = sphi 0, %s144
    %s146 = sphi 0, %s144
    %s147 = sphi 0, %s146
    %s161 = sphi 0, %s147
    %s169 = sphi 0, %s171
    %s172 = sphi 0, %s169
    %s173 = sphi 0, %s172
    %s189 = sphi 0, %s173
  $region4: #{generator3dlut_hr_lut_forward.1} parent=0 // loop_header_branch
    %15 = sbr.rel (%p13) target = $region8
  $region5: #{generator3dlut_hr_lut_forward.1} parent=0 // loop_body
    %s17 = ssub.s32 %s12, 1
    %s18 = ssub.s32 %s12, 2
    %s25 = sadd.s32 1, %s20
    %p26 = scmp.ge.s32.totalorder %s25, 1
    %s27 = scalar_select %p26, 0, %s25
    %s28 = sadd.s32 1, %s19
    %s29 = scalar_select %p26, %s28, %s19
    %p30 = scmp.ge.s32.totalorder %s29, 2
    %s31 = scalar_select %p30, 0, %s29
    %s32 = ssub.s32 %s19, %s31
    %s33 = ssub.s32 %s20, %s27
    %s34 = sor.u32 %s32, %s33
    %p35 = scmp.eq.s32.totalorder %s34, 0
    %s37 = sadd.s32 %s36, 1
    %s38 = scalar_select %p35, %s36, %s37
    %p41 = pneg %p35
    %p42 = scmp.eq.s32.totalorder %s12, 1
    %p43 = por %p41, %p42
    %p44 = scmp.ne.s32.totalorder %s36, %s39
    %p45 = scmp.eq.s32.totalorder %s12, 0
    %p46 = por %p44, %p45
    %p47 = scmp.ne.s32.totalorder %s36, %s39
    %p48 = scmp.eq.s32.totalorder %s17, 1
    %p49 = por %p47, %p48
    %p50 = scmp.ne.s32.totalorder %s39, %s40
    %p51 = scmp.eq.s32.totalorder %s17, 0
    %p52 = por %p50, %p51
    %p53 = scmp.ne.s32.totalorder %s39, %s40
    %p54 = scmp.eq.s32.totalorder %s18, 1
    %p55 = por %p53, %p54
    %p57 = scmp.ne.s32.totalorder %s40, %s56
    %p58 = scmp.eq.s32.totalorder %s18, 0
    %p59 = por %p57, %p58
    %s61 = sadd.s32 %s60, 1
    %p64 = scmp.eq.s32.totalorder %s12, 1
    %p65 = scmp.ne.s32.totalorder %s60, %s62
    %p66 = scmp.eq.s32.totalorder %s12, 0
    %p67 = por %p65, %p66
    %p68 = scmp.ne.s32.totalorder %s60, %s62
    %p69 = scmp.eq.s32.totalorder %s17, 1
    %p70 = por %p68, %p69
    %p71 = scmp.ne.s32.totalorder %s62, %s63
    %p72 = scmp.eq.s32.totalorder %s17, 0
    %p73 = por %p71, %p72
    %p74 = scmp.ne.s32.totalorder %s62, %s63
    %p75 = scmp.eq.s32.totalorder %s18, 1
    %p76 = por %p74, %p75
    %p78 = scmp.ne.s32.totalorder %s63, %s77
    %p79 = scmp.eq.s32.totalorder %s18, 0
    %p80 = por %p78, %p79
    %s82 = sadd.s32 %s81, 1
    %p85 = scmp.eq.s32.totalorder %s12, 1
    %p86 = scmp.ne.s32.totalorder %s81, %s83
    %p87 = scmp.eq.s32.totalorder %s12, 0
    %p88 = por %p86, %p87
    %p89 = scmp.ne.s32.totalorder %s81, %s83
    %p90 = scmp.eq.s32.totalorder %s17, 1
    %p91 = por %p89, %p90
    %p92 = scmp.ne.s32.totalorder %s83, %s84
    %p93 = scmp.eq.s32.totalorder %s17, 0
    %p94 = por %p92, %p93
    %p95 = scmp.ne.s32.totalorder %s83, %s84
    %p96 = scmp.eq.s32.totalorder %s18, 1
    %p97 = por %p95, %p96
    %p99 = scmp.ne.s32.totalorder %s84, %s98
    %p100 = scmp.eq.s32.totalorder %s18, 0
    %p101 = por %p99, %p100
    %s103 = sadd.s32 %s102, 1
    %p106 = scmp.eq.s32.totalorder %s12, 1
    %p107 = scmp.ne.s32.totalorder %s102, %s104
    %p108 = scmp.eq.s32.totalorder %s12, 0
    %p109 = por %p107, %p108
    %p110 = scmp.ne.s32.totalorder %s102, %s104
    %p111 = scmp.eq.s32.totalorder %s17, 1
    %p112 = por %p110, %p111
    %p113 = scmp.ne.s32.totalorder %s104, %s105
    %p114 = scmp.eq.s32.totalorder %s17, 0
    %p115 = por %p113, %p114
    %p116 = scmp.ne.s32.totalorder %s104, %s105
    %p117 = scmp.eq.s32.totalorder %s18, 1
    %p118 = por %p116, %p117
    %p120 = scmp.ne.s32.totalorder %s105, %s119
    %p121 = scmp.eq.s32.totalorder %s18, 0
    %p122 = por %p120, %p121
    %s124 = sadd.s32 %s123, 1
    %p127 = scmp.eq.s32.totalorder %s12, 1
    %p128 = scmp.ne.s32.totalorder %s123, %s125
    %p129 = scmp.eq.s32.totalorder %s12, 0
    %p130 = por %p128, %p129
    %p131 = scmp.ne.s32.totalorder %s123, %s125
    %p132 = scmp.eq.s32.totalorder %s17, 1
    %p133 = por %p131, %p132
    %p134 = scmp.ne.s32.totalorder %s125, %s126
    %p135 = scmp.eq.s32.totalorder %s17, 0
    %p136 = por %p134, %p135
    %p137 = scmp.ne.s32.totalorder %s125, %s126
    %p138 = scmp.eq.s32.totalorder %s18, 1
    %p139 = por %p137, %p138
    %p141 = scmp.ne.s32.totalorder %s126, %s140
    %p142 = scmp.eq.s32.totalorder %s18, 0
    %p143 = por %p141, %p142
    %s145 = sadd.s32 %s144, 1
    %p148 = scmp.eq.s32.totalorder %s12, 1
    %p149 = scmp.ne.s32.totalorder %s144, %s146
    %p150 = scmp.eq.s32.totalorder %s12, 0
    %p151 = por %p149, %p150
    %p152 = scmp.ne.s32.totalorder %s144, %s146
    %p153 = scmp.eq.s32.totalorder %s17, 1
    %p154 = por %p152, %p153
    %p155 = scmp.ne.s32.totalorder %s146, %s147
    %p156 = scmp.eq.s32.totalorder %s17, 0
    %p157 = por %p155, %p156
    %p158 = scmp.ne.s32.totalorder %s146, %s147
    %p159 = scmp.eq.s32.totalorder %s18, 1
    %p160 = por %p158, %p159
    %p162 = scmp.ne.s32.totalorder %s147, %s161
    %p163 = scmp.eq.s32.totalorder %s18, 0
    %p164 = por %p162, %p163
    %s165 = ssub.s32 %s19, %s31
    %s166 = ssub.s32 %s20, %s27
    %s167 = sor.u32 %s165, %s166
    %p168 = scmp.eq.s32.totalorder %s167, 0
    %s170 = sadd.s32 %s169, 1
    %s171 = scalar_select %p168, %s169, %s170
    %p174 = pneg %p168
    %p175 = scmp.eq.s32.totalorder %s12, 1
    %p176 = por %p174, %p175
    %p177 = scmp.ne.s32.totalorder %s169, %s172
    %p178 = scmp.eq.s32.totalorder %s12, 0
    %p179 = por %p177, %p178
    %p180 = scmp.ne.s32.totalorder %s169, %s172
    %p181 = scmp.eq.s32.totalorder %s17, 1
    %p182 = por %p180, %p181
    %p183 = scmp.ne.s32.totalorder %s172, %s173
    %p184 = scmp.eq.s32.totalorder %s17, 0
    %p185 = por %p183, %p184
    %p186 = scmp.ne.s32.totalorder %s172, %s173
    %p187 = scmp.eq.s32.totalorder %s18, 1
    %p188 = por %p186, %p187
    %p190 = scmp.ne.s32.totalorder %s173, %s189
    %p191 = scmp.eq.s32.totalorder %s18, 0
    %p192 = por %p190, %p191
    %p193 = scmp.le.s32.totalorder 1, %s12
    %p194 = scmp.lt.s32.totalorder %s12, 3
    %p195 = pnand %p193, %p194
    %p196 = pneg %p195
    // Predicated region
    $region9: #{generator3dlut_hr_lut_forward.1} parent=5 // pred_check
      _
    $region10: #{generator3dlut_hr_lut_forward.1} parent=5 // pred_check_branch
      %198 = sbr.rel (%p195) target = $region12
    $region11: #{generator3dlut_hr_lut_forward.1} parent=5 // pred_region
      %s199 = ssub.s32 %s12, 1
      // Predicated region
      $region13: #{generator3dlut_hr_lut_forward.1} parent=11 // pred_check
        %p200 = pneg %p73
      $region14: #{generator3dlut_hr_lut_forward.1} parent=11 // pred_check_branch
        %202 = sbr.rel (%p200) target = $region16
      $region15: #{generator3dlut_hr_lut_forward.1} parent=11 // pred_region
        _
      $region16: #{generator3dlut_hr_lut_forward.1} parent=11 // pred_fallthru
        _
      // Predicated region
      $region17: #{generator3dlut_hr_lut_forward.1} parent=11 // pred_check
        %p203 = pneg %p94
      $region18: #{generator3dlut_hr_lut_forward.1} parent=11 // pred_check_branch
        %205 = sbr.rel (%p203) target = $region20
      $region19: #{generator3dlut_hr_lut_forward.1} parent=11 // pred_region
        _
      $region20: #{generator3dlut_hr_lut_forward.1} parent=11 // pred_fallthru
        _
      // Predicated region
      $region21: #{generator3dlut_hr_lut_forward.1} parent=11 // pred_check
        %p206 = pneg %p115
      $region22: #{generator3dlut_hr_lut_forward.1} parent=11 // pred_check_branch
        %208 = sbr.rel (%p206) target = $region24
      $region23: #{generator3dlut_hr_lut_forward.1} parent=11 // pred_region
        _
      $region24: #{generator3dlut_hr_lut_forward.1} parent=11 // pred_fallthru
        _
      // Predicated region
      $region25: #{generator3dlut_hr_lut_forward.1} parent=11 // pred_check
        %p209 = pneg %p136
      $region26: #{generator3dlut_hr_lut_forward.1} parent=11 // pred_check_branch
        %211 = sbr.rel (%p209) target = $region28
      $region27: #{generator3dlut_hr_lut_forward.1} parent=11 // pred_region
        _
      $region28: #{generator3dlut_hr_lut_forward.1} parent=11 // pred_fallthru
        _
      // Predicated region
      $region29: #{generator3dlut_hr_lut_forward.1} parent=11 // pred_check
        %p212 = pneg %p157
      $region30: #{generator3dlut_hr_lut_forward.1} parent=11 // pred_check_branch
        %214 = sbr.rel (%p212) target = $region32
      $region31: #{generator3dlut_hr_lut_forward.1} parent=11 // pred_region
        _
      $region32: #{generator3dlut_hr_lut_forward.1} parent=11 // pred_fallthru
        _
    $region12: #{generator3dlut_hr_lut_forward.1} parent=5 // pred_fallthru
      _
    %p215 = scmp.lt.s32.totalorder %s12, 2
    // Predicated region
    $region33: #{generator3dlut_hr_lut_forward.1} parent=5 // pred_check
      %p216 = pneg %p215
    $region34: #{generator3dlut_hr_lut_forward.1} parent=5 // pred_check_branch
      %218 = sbr.rel (%p216) target = $region36
    $region35: #{generator3dlut_hr_lut_forward.1} parent=5 // pred_region
      // Predicated region
      $region37: #{generator3dlut_hr_lut_forward.1} parent=35 // pred_check
        %p219 = pneg %p46
      $region38: #{generator3dlut_hr_lut_forward.1} parent=35 // pred_check_branch
        %221 = sbr.rel (%p219) target = $region40
      $region39: #{generator3dlut_hr_lut_forward.1} parent=35 // pred_region
        %s222 = smul.u32 2, %s20
        %p223 = scmp.lt.s32.totalorder %s19, 1
        %s224 = scalar_select %p223, %s19, 1
        %p225 = scmp.lt.s32.totalorder %s222, 1
        %s226 = scalar_select %p225, %s222, 1
        %s227 = smul.addr %s224, 2
        %s228 = sadd.s32 %s226, %s227
        %s229 = smul.addr %s228, 4
        %s230 = scalar_lea.vmem %s0, %s229
        %s231 = smul.u32 2, %s20
      $region40: #{generator3dlut_hr_lut_forward.1} parent=35 // pred_fallthru
        _
    $region36: #{generator3dlut_hr_lut_forward.1} parent=5 // pred_fallthru
      _
    %p232 = scmp.le.s32.totalorder 1, %s12
    %p233 = scmp.lt.s32.totalorder %s12, 3
    %p234 = pnand %p232, %p233
    %p235 = pneg %p234
    // Predicated region
    $region41: #{generator3dlut_hr_lut_forward.1} parent=5 // pred_check
      _
    $region42: #{generator3dlut_hr_lut_forward.1} parent=5 // pred_check_branch
      %237 = sbr.rel (%p234) target = $region44
    $region43: #{generator3dlut_hr_lut_forward.1} parent=5 // pred_region
      %s238 = ssub.s32 %s12, 1
      %s239 = smul.u32 2, %s22
      %p240 = scmp.lt.s32.totalorder %s21, 1
      %s241 = scalar_select %p240, %s21, 1
      %p242 = scmp.lt.s32.totalorder %s239, 1
      %s243 = scalar_select %p242, %s239, 1
      %s244 = smul.addr %s241, 2
      %s245 = sadd.s32 %s243, %s244
      %s246 = smul.addr %s245, 4
      %s247 = scalar_lea.vmem %s0, %s246
      %p248 = pneg %p52
      %p249 = pneg %p49
      %p250 = pneg %p73
      %p251 = pneg %p70
      %p252 = pneg %p94
      %p253 = pneg %p91
      %p254 = pneg %p115
      %p255 = pneg %p112
      %p256 = pneg %p136
      %p257 = pneg %p133
      %p258 = pneg %p157
      %p259 = pneg %p154
      %p260 = pneg %p185
      %p261 = pneg %p182
      %s262 = smul.u32 2, %s22
      %p263 = scmp.lt.s32.totalorder %s21, 1
      %s264 = scalar_select %p263, %s21, 1
      %p265 = scmp.lt.s32.totalorder %s262, 1
      %s266 = scalar_select %p265, %s262, 1
      %s267 = smul.addr %s264, 2
      %s268 = sadd.s32 %s266, %s267
      %s269 = smul.addr %s268, 4
      %s270 = scalar_lea.vmem %s6, %s269
      %s271 = smul.u32 2, %s22
      %p272 = scmp.lt.s32.totalorder %s21, 1
      %s273 = scalar_select %p272, %s21, 1
      %p274 = scmp.lt.s32.totalorder %s271, 1
      %s275 = scalar_select %p274, %s271, 1
      %s276 = smul.addr %s273, 2
      %s277 = sadd.s32 %s275, %s276
      %s278 = smul.addr %s277, 4
      %s279 = scalar_lea.vmem %s0, %s278
      %s280 = smul.u32 2, %s22
      %s281 = smul.u32 2, %s22
      %p282 = scmp.lt.s32.totalorder %s21, 1
      %s283 = scalar_select %p282, %s21, 1
      %p284 = scmp.lt.s32.totalorder %s281, 1
      %s285 = scalar_select %p284, %s281, 1
      %s286 = smul.addr %s283, 2
      %s287 = sadd.s32 %s285, %s286
      %s288 = smul.addr %s287, 4
      %s289 = scalar_lea.vmem %s6, %s288
      %s290 = smul.u32 2, %s22
      %v292 = vld [vmem:[%s279] sm:$0x77]
      %v293 = vmul.f32 %v292, 32.0
      %v294 = vmax.f32 %v293, 0.0
      %v295 = vmin.f32 %v294, 32.0
      %v296 = vld [vmem:[%s2] sm:$0xff]
      %v297 = vld [vmem:[%s2 + $0x8] sm:$0xff]
      %v298 = vld [vmem:[%s2 + $0x10] sm:$0xff]
      %v299 = vld [vmem:[%s2 + $0x18] sm:$0xff]
      %v300 = vld [vmem:[%s2 + $0x20] sm:$0xff]
      %v301 = vld [vmem:[%s2 + $0x28] sm:$0xff]
      %v302 = vld [vmem:[%s2 + $0x30] sm:$0xff]
      %v303 = vld [vmem:[%s2 + $0x38] sm:$0xff]
      %v304 = vld [vmem:[%s2 + $0x40] sm:$0xff]
      %v305 = vld [vmem:[%s2 + $0x48] sm:$0xff]
      %v306 = vld [vmem:[%s2 + $0x50] sm:$0xff]
      %v307 = vld [vmem:[%s2 + $0x58] sm:$0xff]
      %v308 = vld [vmem:[%s2 + $0x60] sm:$0xff]
      %v309 = vld [vmem:[%s2 + $0x68] sm:$0xff]
      %v310 = vld [vmem:[%s2 + $0x70] sm:$0xff]
      %v311 = vld [vmem:[%s2 + $0x78] sm:$0xff]
      %v312 = vld [vmem:[%s2 + $0x80] sm:$0xff]
      %v313 = vld [vmem:[%s2 + $0x88] sm:$0xff]
      %v314 = vld [vmem:[%s2 + $0x90] sm:$0xff]
      %v315 = vld [vmem:[%s2 + $0x98] sm:$0xff]
      %v316 = vld [vmem:[%s2 + $0xa0] sm:$0xff]
      %v317 = vld [vmem:[%s2 + $0xa8] sm:$0xff]
      %v318 = vld [vmem:[%s2 + $0xb0] sm:$0xff]
      %v319 = vld [vmem:[%s2 + $0xb8] sm:$0xff]
      %v320 = vld [vmem:[%s2 + $0xc0] sm:$0xff]
      %v321 = vld [vmem:[%s2 + $0xc8] sm:$0xff]
      %v322 = vld [vmem:[%s2 + $0xd0] sm:$0xff]
      %v323 = vld [vmem:[%s2 + $0xd8] sm:$0xff]
      %v324 = vld [vmem:[%s2 + $0xe0] sm:$0xff]
      %v325 = vld [vmem:[%s2 + $0xe8] sm:$0xff]
      %v326 = vld [vmem:[%s2 + $0xf0] sm:$0xff]
      %v327 = vld [vmem:[%s2 + $0xf8] sm:$0xff]
      %v328 = vld [vmem:[%s2 + $0x100] sm:$0xff]
      %v329 = vld [vmem:[%s2 + $0x108] sm:$0xff]
      %v330 = vld [vmem:[%s2 + $0x110] sm:$0xff]
      %v331 = vld [vmem:[%s2 + $0x118] sm:$0xff]
      %v332 = vld [vmem:[%s2 + $0x120] sm:$0xff]
      %v333 = vld [vmem:[%s2 + $0x128] sm:$0xff]
      %v334 = vld [vmem:[%s2 + $0x130] sm:$0xff]
      %v335 = vld [vmem:[%s2 + $0x138] sm:$0xff]
      %v336 = vld [vmem:[%s2 + $0x140] sm:$0xff]
      %v337 = vld [vmem:[%s2 + $0x148] sm:$0xff]
      %v338 = vld [vmem:[%s2 + $0x150] sm:$0xff]
      %v339 = vld [vmem:[%s2 + $0x158] sm:$0xff]
      %v340 = vld [vmem:[%s2 + $0x160] sm:$0xff]
      %v341 = vld [vmem:[%s2 + $0x168] sm:$0xff]
      %v342 = vld [vmem:[%s2 + $0x170] sm:$0xff]
      %v343 = vld [vmem:[%s2 + $0x178] sm:$0xff]
      %v344 = vld [vmem:[%s2 + $0x180] sm:$0xff]
      %v345 = vld [vmem:[%s2 + $0x188] sm:$0xff]
      %v346 = vld [vmem:[%s2 + $0x190] sm:$0xff]
      %v347 = vld [vmem:[%s2 + $0x198] sm:$0xff]
      %v348 = vld [vmem:[%s2 + $0x1a0] sm:$0xff]
      %v349 = vld [vmem:[%s2 + $0x1a8] sm:$0xff]
      %v350 = vld [vmem:[%s2 + $0x1b0] sm:$0xff]
      %v351 = vld [vmem:[%s2 + $0x1b8] sm:$0xff]
      %v352 = vld [vmem:[%s2 + $0x1c0] sm:$0xff]
      %v353 = vld [vmem:[%s2 + $0x1c8] sm:$0xff]
      %v354 = vld [vmem:[%s2 + $0x1d0] sm:$0xff]
      %v355 = vld [vmem:[%s2 + $0x1d8] sm:$0xff]
      %v356 = vld [vmem:[%s2 + $0x1e0] sm:$0xff]
      %v357 = vld [vmem:[%s2 + $0x1e8] sm:$0xff]
      %v358 = vld [vmem:[%s2 + $0x1f0] sm:$0xff]
      %v359 = vld [vmem:[%s2 + $0x1f8] sm:$0xff]
      %v360 = vld [vmem:[%s2 + $0x200] sm:$0xff]
      %v361 = vld [vmem:[%s2 + $0x208] sm:$0xff]
      %v362 = vld [vmem:[%s2 + $0x210] sm:$0xff]
      %v363 = vld [vmem:[%s2 + $0x218] sm:$0xff]
      %v364 = vld [vmem:[%s2 + $0x220] sm:$0xff]
      %v365 = vld [vmem:[%s2 + $0x228] sm:$0xff]
      %v366 = vld [vmem:[%s2 + $0x230] sm:$0xff]
      %v367 = vld [vmem:[%s2 + $0x238] sm:$0xff]
      %v368 = vld [vmem:[%s2 + $0x240] sm:$0xff]
      %v369 = vld [vmem:[%s2 + $0x248] sm:$0xff]
      %v370 = vld [vmem:[%s2 + $0x250] sm:$0xff]
      %v371 = vld [vmem:[%s2 + $0x258] sm:$0xff]
      %v372 = vld [vmem:[%s2 + $0x260] sm:$0xff]
      %v373 = vld [vmem:[%s2 + $0x268] sm:$0xff]
      %v374 = vld [vmem:[%s2 + $0x270] sm:$0xff]
      %v375 = vld [vmem:[%s2 + $0x278] sm:$0xff]
      %v376 = vld [vmem:[%s2 + $0x280] sm:$0xff]
      %v377 = vld [vmem:[%s2 + $0x288] sm:$0xff]
      %v378 = vld [vmem:[%s2 + $0x290] sm:$0xff]
      %v379 = vld [vmem:[%s2 + $0x298] sm:$0xff]
      %v380 = vld [vmem:[%s2 + $0x2a0] sm:$0xff]
      %v381 = vld [vmem:[%s2 + $0x2a8] sm:$0xff]
      %v382 = vld [vmem:[%s2 + $0x2b0] sm:$0xff]
      %v383 = vld [vmem:[%s2 + $0x2b8] sm:$0xff]
      %v384 = vld [vmem:[%s2 + $0x2c0] sm:$0xff]
      %v385 = vld [vmem:[%s2 + $0x2c8] sm:$0xff]
      %v386 = vld [vmem:[%s2 + $0x2d0] sm:$0xff]
      %v387 = vld [vmem:[%s2 + $0x2d8] sm:$0xff]
      %v388 = vld [vmem:[%s2 + $0x2e0] sm:$0xff]
      %v389 = vld [vmem:[%s2 + $0x2e8] sm:$0xff]
      %v390 = vld [vmem:[%s2 + $0x2f0] sm:$0xff]
      %v391 = vld [vmem:[%s2 + $0x2f8] sm:$0xff]
      %v392 = vld [vmem:[%s2 + $0x300] sm:$0xff]
      %v393 = vld [vmem:[%s2 + $0x308] sm:$0xff]
      %v394 = vld [vmem:[%s2 + $0x310] sm:$0xff]
      %v395 = vld [vmem:[%s2 + $0x318] sm:$0xff]
      %v396 = vld [vmem:[%s2 + $0x320] sm:$0xff]
      %v397 = vld [vmem:[%s2 + $0x328] sm:$0xff]
      %v398 = vld [vmem:[%s2 + $0x330] sm:$0xff]
      %v399 = vld [vmem:[%s2 + $0x338] sm:$0xff]
      %v400 = vld [vmem:[%s2 + $0x340] sm:$0xff]
      %v401 = vld [vmem:[%s2 + $0x348] sm:$0xff]
      %v402 = vld [vmem:[%s2 + $0x350] sm:$0xff]
      %v403 = vld [vmem:[%s2 + $0x358] sm:$0xff]
      %v404 = vld [vmem:[%s2 + $0x360] sm:$0xff]
      %v405 = vld [vmem:[%s2 + $0x368] sm:$0xff]
      %v406 = vld [vmem:[%s2 + $0x370] sm:$0xff]
      %v407 = vld [vmem:[%s2 + $0x378] sm:$0xff]
      %v408 = vld [vmem:[%s2 + $0x380] sm:$0xff]
      %v409 = vld [vmem:[%s2 + $0x388] sm:$0xff]
      %v410 = vld [vmem:[%s2 + $0x390] sm:$0xff]
      %v411 = vld [vmem:[%s2 + $0x398] sm:$0xff]
      %v412 = vld [vmem:[%s2 + $0x3a0] sm:$0xff]
      %v413 = vld [vmem:[%s2 + $0x3a8] sm:$0xff]
      %v414 = vld [vmem:[%s2 + $0x3b0] sm:$0xff]
      %v415 = vld [vmem:[%s2 + $0x3b8] sm:$0xff]
      %v416 = vld [vmem:[%s2 + $0x3c0] sm:$0xff]
      %v417 = vld [vmem:[%s2 + $0x3c8] sm:$0xff]
      %v418 = vld [vmem:[%s2 + $0x3d0] sm:$0xff]
      %v419 = vld [vmem:[%s2 + $0x3d8] sm:$0xff]
      %v420 = vld [vmem:[%s2 + $0x3e0] sm:$0xff]
      %v421 = vld [vmem:[%s2 + $0x3e8] sm:$0xff]
      %v422 = vld [vmem:[%s2 + $0x3f0] sm:$0xff]
      %v423 = vld [vmem:[%s2 + $0x3f8] sm:$0xff]
      %v424 = vld [vmem:[%s2 + $0x400] sm:$0xff]
      %v425 = vld [vmem:[%s2 + $0x408] sm:$0xff]
      %v426 = vld [vmem:[%s2 + $0x410] sm:$0xff]
      %v427 = vld [vmem:[%s2 + $0x418] sm:$0xff]
      %v428 = vld [vmem:[%s2 + $0x420] sm:$0xff]
      %v429 = vld [vmem:[%s2 + $0x428] sm:$0xff]
      %v430 = vld [vmem:[%s2 + $0x430] sm:$0xff]
      %v431 = vld [vmem:[%s2 + $0x438] sm:$0xff]
      %v432 = vld [vmem:[%s2 + $0x440] sm:$0x1]
      %v434 = vlaneseq
      %v435 = vshrl.u32 %v434, 7
      %v436 = vsub.s32 1, %v435
      %v437 = vrot.slane %v295, %v436
      %v438 = vlaneseq
      %v439 = vshrl.u32 %v438, 7
      %v440 = vsub.s32 5, %v439
      %v441 = vrot.slane %v295, %v440
      %v444 = vlaneseq
      %v445 = vshrl.u32 %v444, 7
      %v446 = vsub.s32 1, %v445
      %v447 = vrot.slane %v437, %v446
      %v448 = vlaneseq
      %v449 = vshrl.u32 %v448, 7
      %v450 = vsub.s32 1, %v449
      %v451 = vrot.slane %v441, %v450
      %453 = vset.pattern.permute.xlu0 0
      %454 = vperm.xlu0 %453, %v296
      %v455 = vpop.permute.xlu0 %454
      %458 = vset.pattern.permute.xlu0 0
      %459 = vperm.xlu0 %458, %v297
      %v460 = vpop.permute.xlu0 %459
      %463 = vset.pattern.permute.xlu0 0
      %464 = vperm.xlu0 %463, %v298
      %v465 = vpop.permute.xlu0 %464
      %468 = vset.pattern.permute.xlu0 0
      %469 = vperm.xlu0 %468, %v299
      %v470 = vpop.permute.xlu0 %469
      %473 = vset.pattern.permute.xlu0 0
      %474 = vperm.xlu0 %473, %v300
      %v475 = vpop.permute.xlu0 %474
      %478 = vset.pattern.permute.xlu0 0
      %479 = vperm.xlu0 %478, %v301
      %v480 = vpop.permute.xlu0 %479
      %483 = vset.pattern.permute.xlu0 0
      %484 = vperm.xlu0 %483, %v302
      %v485 = vpop.permute.xlu0 %484
      %488 = vset.pattern.permute.xlu0 0
      %489 = vperm.xlu0 %488, %v303
      %v490 = vpop.permute.xlu0 %489
      %493 = vset.pattern.permute.xlu0 0
      %494 = vperm.xlu0 %493, %v304
      %v495 = vpop.permute.xlu0 %494
      %498 = vset.pattern.permute.xlu0 0
      %499 = vperm.xlu0 %498, %v305
      %v500 = vpop.permute.xlu0 %499
      %503 = vset.pattern.permute.xlu0 0
      %504 = vperm.xlu0 %503, %v306
      %v505 = vpop.permute.xlu0 %504
      %508 = vset.pattern.permute.xlu0 0
      %509 = vperm.xlu0 %508, %v307
      %v510 = vpop.permute.xlu0 %509
      %513 = vset.pattern.permute.xlu0 0
      %514 = vperm.xlu0 %513, %v308
      %v515 = vpop.permute.xlu0 %514
      %518 = vset.pattern.permute.xlu0 0
      %519 = vperm.xlu0 %518, %v309
      %v520 = vpop.permute.xlu0 %519
      %523 = vset.pattern.permute.xlu0 0
      %524 = vperm.xlu0 %523, %v310
      %v525 = vpop.permute.xlu0 %524
      %528 = vset.pattern.permute.xlu0 0
      %529 = vperm.xlu0 %528, %v311
      %v530 = vpop.permute.xlu0 %529
      %533 = vset.pattern.permute.xlu0 0
      %534 = vperm.xlu0 %533, %v312
      %v535 = vpop.permute.xlu0 %534
      %538 = vset.pattern.permute.xlu0 0
      %539 = vperm.xlu0 %538, %v313
      %v540 = vpop.permute.xlu0 %539
      %543 = vset.pattern.permute.xlu0 0
      %544 = vperm.xlu0 %543, %v314
      %v545 = vpop.permute.xlu0 %544
      %548 = vset.pattern.permute.xlu0 0
      %549 = vperm.xlu0 %548, %v315
      %v550 = vpop.permute.xlu0 %549
      %553 = vset.pattern.permute.xlu0 0
      %554 = vperm.xlu0 %553, %v316
      %v555 = vpop.permute.xlu0 %554
      %558 = vset.pattern.permute.xlu0 0
      %559 = vperm.xlu0 %558, %v317
      %v560 = vpop.permute.xlu0 %559
      %563 = vset.pattern.permute.xlu0 0
      %564 = vperm.xlu0 %563, %v318
      %v565 = vpop.permute.xlu0 %564
      %568 = vset.pattern.permute.xlu0 0
      %569 = vperm.xlu0 %568, %v319
      %v570 = vpop.permute.xlu0 %569
      %573 = vset.pattern.permute.xlu0 0
      %574 = vperm.xlu0 %573, %v320
      %v575 = vpop.permute.xlu0 %574
      %578 = vset.pattern.permute.xlu0 0
      %579 = vperm.xlu0 %578, %v321
      %v580 = vpop.permute.xlu0 %579
      %583 = vset.pattern.permute.xlu0 0
      %584 = vperm.xlu0 %583, %v322
      %v585 = vpop.permute.xlu0 %584
      %588 = vset.pattern.permute.xlu0 0
      %589 = vperm.xlu0 %588, %v323
      %v590 = vpop.permute.xlu0 %589
      %593 = vset.pattern.permute.xlu0 0
      %594 = vperm.xlu0 %593, %v324
      %v595 = vpop.permute.xlu0 %594
      %598 = vset.pattern.permute.xlu0 0
      %599 = vperm.xlu0 %598, %v325
      %v600 = vpop.permute.xlu0 %599
      %603 = vset.pattern.permute.xlu0 0
      %604 = vperm.xlu0 %603, %v326
      %v605 = vpop.permute.xlu0 %604
      %608 = vset.pattern.permute.xlu0 0
      %609 = vperm.xlu0 %608, %v327
      %v610 = vpop.permute.xlu0 %609
      %613 = vset.pattern.permute.xlu0 0
      %614 = vperm.xlu0 %613, %v328
      %v615 = vpop.permute.xlu0 %614
      %618 = vset.pattern.permute.xlu0 0
      %619 = vperm.xlu0 %618, %v329
      %v620 = vpop.permute.xlu0 %619
      %623 = vset.pattern.permute.xlu0 0
      %624 = vperm.xlu0 %623, %v330
      %v625 = vpop.permute.xlu0 %624
      %628 = vset.pattern.permute.xlu0 0
      %629 = vperm.xlu0 %628, %v331
      %v630 = vpop.permute.xlu0 %629
      %633 = vset.pattern.permute.xlu0 0
      %634 = vperm.xlu0 %633, %v332
      %v635 = vpop.permute.xlu0 %634
      %638 = vset.pattern.permute.xlu0 0
      %639 = vperm.xlu0 %638, %v333
      %v640 = vpop.permute.xlu0 %639
      %643 = vset.pattern.permute.xlu0 0
      %644 = vperm.xlu0 %643, %v334
      %v645 = vpop.permute.xlu0 %644
      %648 = vset.pattern.permute.xlu0 0
      %649 = vperm.xlu0 %648, %v335
      %v650 = vpop.permute.xlu0 %649
      %653 = vset.pattern.permute.xlu0 0
      %654 = vperm.xlu0 %653, %v336
      %v655 = vpop.permute.xlu0 %654
      %658 = vset.pattern.permute.xlu0 0
      %659 = vperm.xlu0 %658, %v337
      %v660 = vpop.permute.xlu0 %659
      %663 = vset.pattern.permute.xlu0 0
      %664 = vperm.xlu0 %663, %v338
      %v665 = vpop.permute.xlu0 %664
      %668 = vset.pattern.permute.xlu0 0
      %669 = vperm.xlu0 %668, %v339
      %v670 = vpop.permute.xlu0 %669
      %673 = vset.pattern.permute.xlu0 0
      %674 = vperm.xlu0 %673, %v340
      %v675 = vpop.permute.xlu0 %674
      %678 = vset.pattern.permute.xlu0 0
      %679 = vperm.xlu0 %678, %v341
      %v680 = vpop.permute.xlu0 %679
      %683 = vset.pattern.permute.xlu0 0
      %684 = vperm.xlu0 %683, %v342
      %v685 = vpop.permute.xlu0 %684
      %688 = vset.pattern.permute.xlu0 0
      %689 = vperm.xlu0 %688, %v343
      %v690 = vpop.permute.xlu0 %689
      %693 = vset.pattern.permute.xlu0 0
      %694 = vperm.xlu0 %693, %v344
      %v695 = vpop.permute.xlu0 %694
      %698 = vset.pattern.permute.xlu0 0
      %699 = vperm.xlu0 %698, %v345
      %v700 = vpop.permute.xlu0 %699
      %703 = vset.pattern.permute.xlu0 0
      %704 = vperm.xlu0 %703, %v346
      %v705 = vpop.permute.xlu0 %704
      %708 = vset.pattern.permute.xlu0 0
      %709 = vperm.xlu0 %708, %v347
      %v710 = vpop.permute.xlu0 %709
      %713 = vset.pattern.permute.xlu0 0
      %714 = vperm.xlu0 %713, %v348
      %v715 = vpop.permute.xlu0 %714
      %718 = vset.pattern.permute.xlu0 0
      %719 = vperm.xlu0 %718, %v349
      %v720 = vpop.permute.xlu0 %719
      %723 = vset.pattern.permute.xlu0 0
      %724 = vperm.xlu0 %723, %v350
      %v725 = vpop.permute.xlu0 %724
      %728 = vset.pattern.permute.xlu0 0
      %729 = vperm.xlu0 %728, %v351
      %v730 = vpop.permute.xlu0 %729
      %733 = vset.pattern.permute.xlu0 0
      %734 = vperm.xlu0 %733, %v352
      %v735 = vpop.permute.xlu0 %734
      %738 = vset.pattern.permute.xlu0 0
      %739 = vperm.xlu0 %738, %v353
      %v740 = vpop.permute.xlu0 %739
      %743 = vset.pattern.permute.xlu0 0
      %744 = vperm.xlu0 %743, %v354
      %v745 = vpop.permute.xlu0 %744
      %748 = vset.pattern.permute.xlu0 0
      %749 = vperm.xlu0 %748, %v355
      %v750 = vpop.permute.xlu0 %749
      %753 = vset.pattern.permute.xlu0 0
      %754 = vperm.xlu0 %753, %v356
      %v755 = vpop.permute.xlu0 %754
      %758 = vset.pattern.permute.xlu0 0
      %759 = vperm.xlu0 %758, %v357
      %v760 = vpop.permute.xlu0 %759
      %763 = vset.pattern.permute.xlu0 0
      %764 = vperm.xlu0 %763, %v358
      %v765 = vpop.permute.xlu0 %764
      %768 = vset.pattern.permute.xlu0 0
      %769 = vperm.xlu0 %768, %v359
      %v770 = vpop.permute.xlu0 %769
      %773 = vset.pattern.permute.xlu0 0
      %774 = vperm.xlu0 %773, %v360
      %v775 = vpop.permute.xlu0 %774
      %778 = vset.pattern.permute.xlu0 0
      %779 = vperm.xlu0 %778, %v361
      %v780 = vpop.permute.xlu0 %779
      %783 = vset.pattern.permute.xlu0 0
      %784 = vperm.xlu0 %783, %v362
      %v785 = vpop.permute.xlu0 %784
      %788 = vset.pattern.permute.xlu0 0
      %789 = vperm.xlu0 %788, %v363
      %v790 = vpop.permute.xlu0 %789
      %793 = vset.pattern.permute.xlu0 0
      %794 = vperm.xlu0 %793, %v364
      %v795 = vpop.permute.xlu0 %794
      %798 = vset.pattern.permute.xlu0 0
      %799 = vperm.xlu0 %798, %v365
      %v800 = vpop.permute.xlu0 %799
      %803 = vset.pattern.permute.xlu0 0
      %804 = vperm.xlu0 %803, %v366
      %v805 = vpop.permute.xlu0 %804
      %808 = vset.pattern.permute.xlu0 0
      %809 = vperm.xlu0 %808, %v367
      %v810 = vpop.permute.xlu0 %809
      %813 = vset.pattern.permute.xlu0 0
      %814 = vperm.xlu0 %813, %v368
      %v815 = vpop.permute.xlu0 %814
      %818 = vset.pattern.permute.xlu0 0
      %819 = vperm.xlu0 %818, %v369
      %v820 = vpop.permute.xlu0 %819
      %823 = vset.pattern.permute.xlu0 0
      %824 = vperm.xlu0 %823, %v370
      %v825 = vpop.permute.xlu0 %824
      %828 = vset.pattern.permute.xlu0 0
      %829 = vperm.xlu0 %828, %v371
      %v830 = vpop.permute.xlu0 %829
      %833 = vset.pattern.permute.xlu0 0
      %834 = vperm.xlu0 %833, %v372
      %v835 = vpop.permute.xlu0 %834
      %838 = vset.pattern.permute.xlu0 0
      %839 = vperm.xlu0 %838, %v373
      %v840 = vpop.permute.xlu0 %839
      %843 = vset.pattern.permute.xlu0 0
      %844 = vperm.xlu0 %843, %v374
      %v845 = vpop.permute.xlu0 %844
      %848 = vset.pattern.permute.xlu0 0
      %849 = vperm.xlu0 %848, %v375
      %v850 = vpop.permute.xlu0 %849
      %853 = vset.pattern.permute.xlu0 0
      %854 = vperm.xlu0 %853, %v376
      %v855 = vpop.permute.xlu0 %854
      %858 = vset.pattern.permute.xlu0 0
      %859 = vperm.xlu0 %858, %v377
      %v860 = vpop.permute.xlu0 %859
      %863 = vset.pattern.permute.xlu0 0
      %864 = vperm.xlu0 %863, %v378
      %v865 = vpop.permute.xlu0 %864
      %868 = vset.pattern.permute.xlu0 0
      %869 = vperm.xlu0 %868, %v379
      %v870 = vpop.permute.xlu0 %869
      %873 = vset.pattern.permute.xlu0 0
      %874 = vperm.xlu0 %873, %v380
      %v875 = vpop.permute.xlu0 %874
      %878 = vset.pattern.permute.xlu0 0
      %879 = vperm.xlu0 %878, %v381
      %v880 = vpop.permute.xlu0 %879
      %883 = vset.pattern.permute.xlu0 0
      %884 = vperm.xlu0 %883, %v382
      %v885 = vpop.permute.xlu0 %884
      %888 = vset.pattern.permute.xlu0 0
      %889 = vperm.xlu0 %888, %v383
      %v890 = vpop.permute.xlu0 %889
      %893 = vset.pattern.permute.xlu0 0
      %894 = vperm.xlu0 %893, %v384
      %v895 = vpop.permute.xlu0 %894
      %898 = vset.pattern.permute.xlu0 0
      %899 = vperm.xlu0 %898, %v385
      %v900 = vpop.permute.xlu0 %899
      %903 = vset.pattern.permute.xlu0 0
      %904 = vperm.xlu0 %903, %v386
      %v905 = vpop.permute.xlu0 %904
      %908 = vset.pattern.permute.xlu0 0
      %909 = vperm.xlu0 %908, %v387
      %v910 = vpop.permute.xlu0 %909
      %913 = vset.pattern.permute.xlu0 0
      %914 = vperm.xlu0 %913, %v388
      %v915 = vpop.permute.xlu0 %914
      %918 = vset.pattern.permute.xlu0 0
      %919 = vperm.xlu0 %918, %v389
      %v920 = vpop.permute.xlu0 %919
      %923 = vset.pattern.permute.xlu0 0
      %924 = vperm.xlu0 %923, %v390
      %v925 = vpop.permute.xlu0 %924
      %928 = vset.pattern.permute.xlu0 0
      %929 = vperm.xlu0 %928, %v391
      %v930 = vpop.permute.xlu0 %929
      %933 = vset.pattern.permute.xlu0 0
      %934 = vperm.xlu0 %933, %v392
      %v935 = vpop.permute.xlu0 %934
      %938 = vset.pattern.permute.xlu0 0
      %939 = vperm.xlu0 %938, %v393
      %v940 = vpop.permute.xlu0 %939
      %943 = vset.pattern.permute.xlu0 0
      %944 = vperm.xlu0 %943, %v394
      %v945 = vpop.permute.xlu0 %944
      %948 = vset.pattern.permute.xlu0 0
      %949 = vperm.xlu0 %948, %v395
      %v950 = vpop.permute.xlu0 %949
      %953 = vset.pattern.permute.xlu0 0
      %954 = vperm.xlu0 %953, %v396
      %v955 = vpop.permute.xlu0 %954
      %958 = vset.pattern.permute.xlu0 0
      %959 = vperm.xlu0 %958, %v397
      %v960 = vpop.permute.xlu0 %959
      %963 = vset.pattern.permute.xlu0 0
      %964 = vperm.xlu0 %963, %v398
      %v965 = vpop.permute.xlu0 %964
      %968 = vset.pattern.permute.xlu0 0
      %969 = vperm.xlu0 %968, %v399
      %v970 = vpop.permute.xlu0 %969
      %973 = vset.pattern.permute.xlu0 0
      %974 = vperm.xlu0 %973, %v400
      %v975 = vpop.permute.xlu0 %974
      %978 = vset.pattern.permute.xlu0 0
      %979 = vperm.xlu0 %978, %v401
      %v980 = vpop.permute.xlu0 %979
      %983 = vset.pattern.permute.xlu0 0
      %984 = vperm.xlu0 %983, %v402
      %v985 = vpop.permute.xlu0 %984
      %988 = vset.pattern.permute.xlu0 0
      %989 = vperm.xlu0 %988, %v403
      %v990 = vpop.permute.xlu0 %989
      %993 = vset.pattern.permute.xlu0 0
      %994 = vperm.xlu0 %993, %v404
      %v995 = vpop.permute.xlu0 %994
      %998 = vset.pattern.permute.xlu0 0
      %999 = vperm.xlu0 %998, %v405
      %v1000 = vpop.permute.xlu0 %999
      %1003 = vset.pattern.permute.xlu0 0
      %1004 = vperm.xlu0 %1003, %v406
      %v1005 = vpop.permute.xlu0 %1004
      %1008 = vset.pattern.permute.xlu0 0
      %1009 = vperm.xlu0 %1008, %v407
      %v1010 = vpop.permute.xlu0 %1009
      %1013 = vset.pattern.permute.xlu0 0
      %1014 = vperm.xlu0 %1013, %v408
      %v1015 = vpop.permute.xlu0 %1014
      %1018 = vset.pattern.permute.xlu0 0
      %1019 = vperm.xlu0 %1018, %v409
      %v1020 = vpop.permute.xlu0 %1019
      %1023 = vset.pattern.permute.xlu0 0
      %1024 = vperm.xlu0 %1023, %v410
      %v1025 = vpop.permute.xlu0 %1024
      %1028 = vset.pattern.permute.xlu0 0
      %1029 = vperm.xlu0 %1028, %v411
      %v1030 = vpop.permute.xlu0 %1029
      %1033 = vset.pattern.permute.xlu0 0
      %1034 = vperm.xlu0 %1033, %v412
      %v1035 = vpop.permute.xlu0 %1034
      %1038 = vset.pattern.permute.xlu0 0
      %1039 = vperm.xlu0 %1038, %v413
      %v1040 = vpop.permute.xlu0 %1039
      %1043 = vset.pattern.permute.xlu0 0
      %1044 = vperm.xlu0 %1043, %v414
      %v1045 = vpop.permute.xlu0 %1044
      %1048 = vset.pattern.permute.xlu0 0
      %1049 = vperm.xlu0 %1048, %v415
      %v1050 = vpop.permute.xlu0 %1049
      %1053 = vset.pattern.permute.xlu0 0
      %1054 = vperm.xlu0 %1053, %v416
      %v1055 = vpop.permute.xlu0 %1054
      %1058 = vset.pattern.permute.xlu0 0
      %1059 = vperm.xlu0 %1058, %v417
      %v1060 = vpop.permute.xlu0 %1059
      %1063 = vset.pattern.permute.xlu0 0
      %1064 = vperm.xlu0 %1063, %v418
      %v1065 = vpop.permute.xlu0 %1064
      %1068 = vset.pattern.permute.xlu0 0
      %1069 = vperm.xlu0 %1068, %v419
      %v1070 = vpop.permute.xlu0 %1069
      %1073 = vset.pattern.permute.xlu0 0
      %1074 = vperm.xlu0 %1073, %v420
      %v1075 = vpop.permute.xlu0 %1074
      %1078 = vset.pattern.permute.xlu0 0
      %1079 = vperm.xlu0 %1078, %v421
      %v1080 = vpop.permute.xlu0 %1079
      %1083 = vset.pattern.permute.xlu0 0
      %1084 = vperm.xlu0 %1083, %v422
      %v1085 = vpop.permute.xlu0 %1084
      %1088 = vset.pattern.permute.xlu0 0
      %1089 = vperm.xlu0 %1088, %v423
      %v1090 = vpop.permute.xlu0 %1089
      %1093 = vset.pattern.permute.xlu0 0
      %1094 = vperm.xlu0 %1093, %v424
      %v1095 = vpop.permute.xlu0 %1094
      %1098 = vset.pattern.permute.xlu0 0
      %1099 = vperm.xlu0 %1098, %v425
      %v1100 = vpop.permute.xlu0 %1099
      %1103 = vset.pattern.permute.xlu0 0
      %1104 = vperm.xlu0 %1103, %v426
      %v1105 = vpop.permute.xlu0 %1104
      %1108 = vset.pattern.permute.xlu0 0
      %1109 = vperm.xlu0 %1108, %v427
      %v1110 = vpop.permute.xlu0 %1109
      %1113 = vset.pattern.permute.xlu0 0
      %1114 = vperm.xlu0 %1113, %v428
      %v1115 = vpop.permute.xlu0 %1114
      %1118 = vset.pattern.permute.xlu0 0
      %1119 = vperm.xlu0 %1118, %v429
      %v1120 = vpop.permute.xlu0 %1119
      %1123 = vset.pattern.permute.xlu0 0
      %1124 = vperm.xlu0 %1123, %v430
      %v1125 = vpop.permute.xlu0 %1124
      %1128 = vset.pattern.permute.xlu0 0
      %1129 = vperm.xlu0 %1128, %v431
      %v1130 = vpop.permute.xlu0 %1129
      %1133 = vset.pattern.permute.xlu0 0
      %1134 = vperm.xlu0 %1133, %v432
      %v1135 = vpop.permute.xlu0 %1134
      %v1137 = vsub.f32 %v447, %v455
      %v1138 = vsub.f32 %v451, %v455
      %v1139 = vsub.f32 %v447, %v460
      %v1140 = vsub.f32 %v451, %v460
      %v1141 = vsub.f32 %v447, %v465
      %v1142 = vsub.f32 %v451, %v465
      %v1143 = vsub.f32 %v447, %v470
      %v1144 = vsub.f32 %v451, %v470
      %v1145 = vsub.f32 %v447, %v475
      %v1146 = vsub.f32 %v451, %v475
      %v1147 = vsub.f32 %v447, %v480
      %v1148 = vsub.f32 %v451, %v480
      %v1149 = vsub.f32 %v447, %v485
      %v1150 = vsub.f32 %v451, %v485
      %v1151 = vsub.f32 %v447, %v490
      %v1152 = vsub.f32 %v451, %v490
      %v1153 = vsub.f32 %v447, %v495
      %v1154 = vsub.f32 %v451, %v495
      %v1155 = vsub.f32 %v447, %v500
      %v1156 = vsub.f32 %v451, %v500
      %v1157 = vsub.f32 %v447, %v505
      %v1158 = vsub.f32 %v451, %v505
      %v1159 = vsub.f32 %v447, %v510
      %v1160 = vsub.f32 %v451, %v510
      %v1161 = vsub.f32 %v447, %v515
      %v1162 = vsub.f32 %v451, %v515
      %v1163 = vsub.f32 %v447, %v520
      %v1164 = vsub.f32 %v451, %v520
      %v1165 = vsub.f32 %v447, %v525
      %v1166 = vsub.f32 %v451, %v525
      %v1167 = vsub.f32 %v447, %v530
      %v1168 = vsub.f32 %v451, %v530
      %v1169 = vsub.f32 %v447, %v535
      %v1170 = vsub.f32 %v451, %v535
      %v1171 = vsub.f32 %v447, %v540
      %v1172 = vsub.f32 %v451, %v540
      %v1173 = vsub.f32 %v447, %v545
      %v1174 = vsub.f32 %v451, %v545
      %v1175 = vsub.f32 %v447, %v550
      %v1176 = vsub.f32 %v451, %v550
      %v1177 = vsub.f32 %v447, %v555
      %v1178 = vsub.f32 %v451, %v555
      %v1179 = vsub.f32 %v447, %v560
      %v1180 = vsub.f32 %v451, %v560
      %v1181 = vsub.f32 %v447, %v565
      %v1182 = vsub.f32 %v451, %v565
      %v1183 = vsub.f32 %v447, %v570
      %v1184 = vsub.f32 %v451, %v570
      %v1185 = vsub.f32 %v447, %v575
      %v1186 = vsub.f32 %v451, %v575
      %v1187 = vsub.f32 %v447, %v580
      %v1188 = vsub.f32 %v451, %v580
      %v1189 = vsub.f32 %v447, %v585
      %v1190 = vsub.f32 %v451, %v585
      %v1191 = vsub.f32 %v447, %v590
      %v1192 = vsub.f32 %v451, %v590
      %v1193 = vsub.f32 %v447, %v595
      %v1194 = vsub.f32 %v451, %v595
      %v1195 = vsub.f32 %v447, %v600
      %v1196 = vsub.f32 %v451, %v600
      %v1197 = vsub.f32 %v447, %v605
      %v1198 = vsub.f32 %v451, %v605
      %v1199 = vsub.f32 %v447, %v610
      %v1200 = vsub.f32 %v451, %v610
      %v1201 = vsub.f32 %v447, %v615
      %v1202 = vsub.f32 %v451, %v615
      %v1203 = vsub.f32 %v447, %v620
      %v1204 = vsub.f32 %v451, %v620
      %v1205 = vsub.f32 %v447, %v625
      %v1206 = vsub.f32 %v451, %v625
      %v1207 = vsub.f32 %v447, %v630
      %v1208 = vsub.f32 %v451, %v630
      %v1209 = vsub.f32 %v447, %v635
      %v1210 = vsub.f32 %v451, %v635
      %v1211 = vsub.f32 %v447, %v640
      %v1212 = vsub.f32 %v451, %v640
      %v1213 = vsub.f32 %v447, %v645
      %v1214 = vsub.f32 %v451, %v645
      %v1215 = vsub.f32 %v447, %v650
      %v1216 = vsub.f32 %v451, %v650
      %v1217 = vsub.f32 %v447, %v655
      %v1218 = vsub.f32 %v451, %v655
      %v1219 = vsub.f32 %v447, %v660
      %v1220 = vsub.f32 %v451, %v660
      %v1221 = vsub.f32 %v447, %v665
      %v1222 = vsub.f32 %v451, %v665
      %v1223 = vsub.f32 %v447, %v670
      %v1224 = vsub.f32 %v451, %v670
      %v1225 = vsub.f32 %v447, %v675
      %v1226 = vsub.f32 %v451, %v675
      %v1227 = vsub.f32 %v447, %v680
      %v1228 = vsub.f32 %v451, %v680
      %v1229 = vsub.f32 %v447, %v685
      %v1230 = vsub.f32 %v451, %v685
      %v1231 = vsub.f32 %v447, %v690
      %v1232 = vsub.f32 %v451, %v690
      %v1233 = vsub.f32 %v447, %v695
      %v1234 = vsub.f32 %v451, %v695
      %v1235 = vsub.f32 %v447, %v700
      %v1236 = vsub.f32 %v451, %v700
      %v1237 = vsub.f32 %v447, %v705
      %v1238 = vsub.f32 %v451, %v705
      %v1239 = vsub.f32 %v447, %v710
      %v1240 = vsub.f32 %v451, %v710
      %v1241 = vsub.f32 %v447, %v715
      %v1242 = vsub.f32 %v451, %v715
      %v1243 = vsub.f32 %v447, %v720
      %v1244 = vsub.f32 %v451, %v720
      %v1245 = vsub.f32 %v447, %v725
      %v1246 = vsub.f32 %v451, %v725
      %v1247 = vsub.f32 %v447, %v730
      %v1248 = vsub.f32 %v451, %v730
      %v1249 = vsub.f32 %v447, %v735
      %v1250 = vsub.f32 %v451, %v735
      %v1251 = vsub.f32 %v447, %v740
      %v1252 = vsub.f32 %v451, %v740
      %v1253 = vsub.f32 %v447, %v745
      %v1254 = vsub.f32 %v451, %v745
      %v1255 = vsub.f32 %v447, %v750
      %v1256 = vsub.f32 %v451, %v750
      %v1257 = vsub.f32 %v447, %v755
      %v1258 = vsub.f32 %v451, %v755
      %v1259 = vsub.f32 %v447, %v760
      %v1260 = vsub.f32 %v451, %v760
      %v1261 = vsub.f32 %v447, %v765
      %v1262 = vsub.f32 %v451, %v765
      %v1263 = vsub.f32 %v447, %v770
      %v1264 = vsub.f32 %v451, %v770
      %v1265 = vsub.f32 %v447, %v775
      %v1266 = vsub.f32 %v451, %v775
      %v1267 = vsub.f32 %v447, %v780
      %v1268 = vsub.f32 %v451, %v780
      %v1269 = vsub.f32 %v447, %v785
      %v1270 = vsub.f32 %v451, %v785
      %v1271 = vsub.f32 %v447, %v790
      %v1272 = vsub.f32 %v451, %v790
      %v1273 = vsub.f32 %v447, %v795
      %v1274 = vsub.f32 %v451, %v795
      %v1275 = vsub.f32 %v447, %v800
      %v1276 = vsub.f32 %v451, %v800
      %v1277 = vsub.f32 %v447, %v805
      %v1278 = vsub.f32 %v451, %v805
      %v1279 = vsub.f32 %v447, %v810
      %v1280 = vsub.f32 %v451, %v810
      %v1281 = vsub.f32 %v447, %v815
      %v1282 = vsub.f32 %v451, %v815
      %v1283 = vsub.f32 %v447, %v820
      %v1284 = vsub.f32 %v451, %v820
      %v1285 = vsub.f32 %v447, %v825
      %v1286 = vsub.f32 %v451, %v825
      %v1287 = vsub.f32 %v447, %v830
      %v1288 = vsub.f32 %v451, %v830
      %v1289 = vsub.f32 %v447, %v835
      %v1290 = vsub.f32 %v451, %v835
      %v1291 = vsub.f32 %v447, %v840
      %v1292 = vsub.f32 %v451, %v840
      %v1293 = vsub.f32 %v447, %v845
      %v1294 = vsub.f32 %v451, %v845
      %v1295 = vsub.f32 %v447, %v850
      %v1296 = vsub.f32 %v451, %v850
      %v1297 = vsub.f32 %v447, %v855
      %v1298 = vsub.f32 %v451, %v855
      %v1299 = vsub.f32 %v447, %v860
      %v1300 = vsub.f32 %v451, %v860
      %v1301 = vsub.f32 %v447, %v865
      %v1302 = vsub.f32 %v451, %v865
      %v1303 = vsub.f32 %v447, %v870
      %v1304 = vsub.f32 %v451, %v870
      %v1305 = vsub.f32 %v447, %v875
      %v1306 = vsub.f32 %v451, %v875
      %v1307 = vsub.f32 %v447, %v880
      %v1308 = vsub.f32 %v451, %v880
      %v1309 = vsub.f32 %v447, %v885
      %v1310 = vsub.f32 %v451, %v885
      %v1311 = vsub.f32 %v447, %v890
      %v1312 = vsub.f32 %v451, %v890
      %v1313 = vsub.f32 %v447, %v895
      %v1314 = vsub.f32 %v451, %v895
      %v1315 = vsub.f32 %v447, %v900
      %v1316 = vsub.f32 %v451, %v900
      %v1317 = vsub.f32 %v447, %v905
      %v1318 = vsub.f32 %v451, %v905
      %v1319 = vsub.f32 %v447, %v910
      %v1320 = vsub.f32 %v451, %v910
      %v1321 = vsub.f32 %v447, %v915
      %v1322 = vsub.f32 %v451, %v915
      %v1323 = vsub.f32 %v447, %v920
      %v1324 = vsub.f32 %v451, %v920
      %v1325 = vsub.f32 %v447, %v925
      %v1326 = vsub.f32 %v451, %v925
      %v1327 = vsub.f32 %v447, %v930
      %v1328 = vsub.f32 %v451, %v930
      %v1329 = vsub.f32 %v447, %v935
      %v1330 = vsub.f32 %v451, %v935
      %v1331 = vsub.f32 %v447, %v940
      %v1332 = vsub.f32 %v451, %v940
      %v1333 = vsub.f32 %v447, %v945
      %v1334 = vsub.f32 %v451, %v945
      %v1335 = vsub.f32 %v447, %v950
      %v1336 = vsub.f32 %v451, %v950
      %v1337 = vsub.f32 %v447, %v955
      %v1338 = vsub.f32 %v451, %v955
      %v1339 = vsub.f32 %v447, %v960
      %v1340 = vsub.f32 %v451, %v960
      %v1341 = vsub.f32 %v447, %v965
      %v1342 = vsub.f32 %v451, %v965
      %v1343 = vsub.f32 %v447, %v970
      %v1344 = vsub.f32 %v451, %v970
      %v1345 = vsub.f32 %v447, %v975
      %v1346 = vsub.f32 %v451, %v975
      %v1347 = vsub.f32 %v447, %v980
      %v1348 = vsub.f32 %v451, %v980
      %v1349 = vsub.f32 %v447, %v985
      %v1350 = vsub.f32 %v451, %v985
      %v1351 = vsub.f32 %v447, %v990
      %v1352 = vsub.f32 %v451, %v990
      %v1353 = vsub.f32 %v447, %v995
      %v1354 = vsub.f32 %v451, %v995
      %v1355 = vsub.f32 %v447, %v1000
      %v1356 = vsub.f32 %v451, %v1000
      %v1357 = vsub.f32 %v447, %v1005
      %v1358 = vsub.f32 %v451, %v1005
      %v1359 = vsub.f32 %v447, %v1010
      %v1360 = vsub.f32 %v451, %v1010
      %v1361 = vsub.f32 %v447, %v1015
      %v1362 = vsub.f32 %v451, %v1015
      %v1363 = vsub.f32 %v447, %v1020
      %v1364 = vsub.f32 %v451, %v1020
      %v1365 = vsub.f32 %v447, %v1025
      %v1366 = vsub.f32 %v451, %v1025
      %v1367 = vsub.f32 %v447, %v1030
      %v1368 = vsub.f32 %v451, %v1030
      %v1369 = vsub.f32 %v447, %v1035
      %v1370 = vsub.f32 %v451, %v1035
      %v1371 = vsub.f32 %v447, %v1040
      %v1372 = vsub.f32 %v451, %v1040
      %v1373 = vsub.f32 %v447, %v1045
      %v1374 = vsub.f32 %v451, %v1045
      %v1375 = vsub.f32 %v447, %v1050
      %v1376 = vsub.f32 %v451, %v1050
      %v1377 = vsub.f32 %v447, %v1055
      %v1378 = vsub.f32 %v451, %v1055
      %v1379 = vsub.f32 %v447, %v1060
      %v1380 = vsub.f32 %v451, %v1060
      %v1381 = vsub.f32 %v447, %v1065
      %v1382 = vsub.f32 %v451, %v1065
      %v1383 = vsub.f32 %v447, %v1070
      %v1384 = vsub.f32 %v451, %v1070
      %v1385 = vsub.f32 %v447, %v1075
      %v1386 = vsub.f32 %v451, %v1075
      %v1387 = vsub.f32 %v447, %v1080
      %v1388 = vsub.f32 %v451, %v1080
      %v1389 = vsub.f32 %v447, %v1085
      %v1390 = vsub.f32 %v451, %v1085
      %v1391 = vsub.f32 %v447, %v1090
      %v1392 = vsub.f32 %v451, %v1090
      %v1393 = vsub.f32 %v447, %v1095
      %v1394 = vsub.f32 %v451, %v1095
      %v1395 = vsub.f32 %v447, %v1100
      %v1396 = vsub.f32 %v451, %v1100
      %v1397 = vsub.f32 %v447, %v1105
      %v1398 = vsub.f32 %v451, %v1105
      %v1399 = vsub.f32 %v447, %v1110
      %v1400 = vsub.f32 %v451, %v1110
      %v1401 = vsub.f32 %v447, %v1115
      %v1402 = vsub.f32 %v451, %v1115
      %v1403 = vsub.f32 %v447, %v1120
      %v1404 = vsub.f32 %v451, %v1120
      %v1405 = vsub.f32 %v447, %v1125
      %v1406 = vsub.f32 %v451, %v1125
      %v1407 = vsub.f32 %v447, %v1130
      %v1408 = vsub.f32 %v451, %v1130
      %v1409 = vsub.f32 %v447, %v1135
      %v1410 = vsub.f32 %v451, %v1135
      %v1411 = vand.u32 2147483647, %v1137
      %v1412 = vand.u32 2147483647, %v1138
      %v1413 = vand.u32 2147483647, %v1139
      %v1414 = vand.u32 2147483647, %v1140
      %v1415 = vand.u32 2147483647, %v1141
      %v1416 = vand.u32 2147483647, %v1142
      %v1417 = vand.u32 2147483647, %v1143
      %v1418 = vand.u32 2147483647, %v1144
      %v1419 = vand.u32 2147483647, %v1145
      %v1420 = vand.u32 2147483647, %v1146
      %v1421 = vand.u32 2147483647, %v1147
      %v1422 = vand.u32 2147483647, %v1148
      %v1423 = vand.u32 2147483647, %v1149
      %v1424 = vand.u32 2147483647, %v1150
      %v1425 = vand.u32 2147483647, %v1151
      %v1426 = vand.u32 2147483647, %v1152
      %v1427 = vand.u32 2147483647, %v1153
      %v1428 = vand.u32 2147483647, %v1154
      %v1429 = vand.u32 2147483647, %v1155
      %v1430 = vand.u32 2147483647, %v1156
      %v1431 = vand.u32 2147483647, %v1157
      %v1432 = vand.u32 2147483647, %v1158
      %v1433 = vand.u32 2147483647, %v1159
      %v1434 = vand.u32 2147483647, %v1160
      %v1435 = vand.u32 2147483647, %v1161
      %v1436 = vand.u32 2147483647, %v1162
      %v1437 = vand.u32 2147483647, %v1163
      %v1438 = vand.u32 2147483647, %v1164
      %v1439 = vand.u32 2147483647, %v1165
      %v1440 = vand.u32 2147483647, %v1166
      %v1441 = vand.u32 2147483647, %v1167
      %v1442 = vand.u32 2147483647, %v1168
      %v1443 = vand.u32 2147483647, %v1169
      %v1444 = vand.u32 2147483647, %v1170
      %v1445 = vand.u32 2147483647, %v1171
      %v1446 = vand.u32 2147483647, %v1172
      %v1447 = vand.u32 2147483647, %v1173
      %v1448 = vand.u32 2147483647, %v1174
      %v1449 = vand.u32 2147483647, %v1175
      %v1450 = vand.u32 2147483647, %v1176
      %v1451 = vand.u32 2147483647, %v1177
      %v1452 = vand.u32 2147483647, %v1178
      %v1453 = vand.u32 2147483647, %v1179
      %v1454 = vand.u32 2147483647, %v1180
      %v1455 = vand.u32 2147483647, %v1181
      %v1456 = vand.u32 2147483647, %v1182
      %v1457 = vand.u32 2147483647, %v1183
      %v1458 = vand.u32 2147483647, %v1184
      %v1459 = vand.u32 2147483647, %v1185
      %v1460 = vand.u32 2147483647, %v1186
      %v1461 = vand.u32 2147483647, %v1187
      %v1462 = vand.u32 2147483647, %v1188
      %v1463 = vand.u32 2147483647, %v1189
      %v1464 = vand.u32 2147483647, %v1190
      %v1465 = vand.u32 2147483647, %v1191
      %v1466 = vand.u32 2147483647, %v1192
      %v1467 = vand.u32 2147483647, %v1193
      %v1468 = vand.u32 2147483647, %v1194
      %v1469 = vand.u32 2147483647, %v1195
      %v1470 = vand.u32 2147483647, %v1196
      %v1471 = vand.u32 2147483647, %v1197
      %v1472 = vand.u32 2147483647, %v1198
      %v1473 = vand.u32 2147483647, %v1199
      %v1474 = vand.u32 2147483647, %v1200
      %v1475 = vand.u32 2147483647, %v1201
      %v1476 = vand.u32 2147483647, %v1202
      %v1477 = vand.u32 2147483647, %v1203
      %v1478 = vand.u32 2147483647, %v1204
      %v1479 = vand.u32 2147483647, %v1205
      %v1480 = vand.u32 2147483647, %v1206
      %v1481 = vand.u32 2147483647, %v1207
      %v1482 = vand.u32 2147483647, %v1208
      %v1483 = vand.u32 2147483647, %v1209
      %v1484 = vand.u32 2147483647, %v1210
      %v1485 = vand.u32 2147483647, %v1211
      %v1486 = vand.u32 2147483647, %v1212
      %v1487 = vand.u32 2147483647, %v1213
      %v1488 = vand.u32 2147483647, %v1214
      %v1489 = vand.u32 2147483647, %v1215
      %v1490 = vand.u32 2147483647, %v1216
      %v1491 = vand.u32 2147483647, %v1217
      %v1492 = vand.u32 2147483647, %v1218
      %v1493 = vand.u32 2147483647, %v1219
      %v1494 = vand.u32 2147483647, %v1220
      %v1495 = vand.u32 2147483647, %v1221
      %v1496 = vand.u32 2147483647, %v1222
      %v1497 = vand.u32 2147483647, %v1223
      %v1498 = vand.u32 2147483647, %v1224
      %v1499 = vand.u32 2147483647, %v1225
      %v1500 = vand.u32 2147483647, %v1226
      %v1501 = vand.u32 2147483647, %v1227
      %v1502 = vand.u32 2147483647, %v1228
      %v1503 = vand.u32 2147483647, %v1229
      %v1504 = vand.u32 2147483647, %v1230
      %v1505 = vand.u32 2147483647, %v1231
      %v1506 = vand.u32 2147483647, %v1232
      %v1507 = vand.u32 2147483647, %v1233
      %v1508 = vand.u32 2147483647, %v1234
      %v1509 = vand.u32 2147483647, %v1235
      %v1510 = vand.u32 2147483647, %v1236
      %v1511 = vand.u32 2147483647, %v1237
      %v1512 = vand.u32 2147483647, %v1238
      %v1513 = vand.u32 2147483647, %v1239
      %v1514 = vand.u32 2147483647, %v1240
      %v1515 = vand.u32 2147483647, %v1241
      %v1516 = vand.u32 2147483647, %v1242
      %v1517 = vand.u32 2147483647, %v1243
      %v1518 = vand.u32 2147483647, %v1244
      %v1519 = vand.u32 2147483647, %v1245
      %v1520 = vand.u32 2147483647, %v1246
      %v1521 = vand.u32 2147483647, %v1247
      %v1522 = vand.u32 2147483647, %v1248
      %v1523 = vand.u32 2147483647, %v1249
      %v1524 = vand.u32 2147483647, %v1250
      %v1525 = vand.u32 2147483647, %v1251
      %v1526 = vand.u32 2147483647, %v1252
      %v1527 = vand.u32 2147483647, %v1253
      %v1528 = vand.u32 2147483647, %v1254
      %v1529 = vand.u32 2147483647, %v1255
      %v1530 = vand.u32 2147483647, %v1256
      %v1531 = vand.u32 2147483647, %v1257
      %v1532 = vand.u32 2147483647, %v1258
      %v1533 = vand.u32 2147483647, %v1259
      %v1534 = vand.u32 2147483647, %v1260
      %v1535 = vand.u32 2147483647, %v1261
      %v1536 = vand.u32 2147483647, %v1262
      %v1537 = vand.u32 2147483647, %v1263
      %v1538 = vand.u32 2147483647, %v1264
      %v1539 = vand.u32 2147483647, %v1265
      %v1540 = vand.u32 2147483647, %v1266
      %v1541 = vand.u32 2147483647, %v1267
      %v1542 = vand.u32 2147483647, %v1268
      %v1543 = vand.u32 2147483647, %v1269
      %v1544 = vand.u32 2147483647, %v1270
      %v1545 = vand.u32 2147483647, %v1271
      %v1546 = vand.u32 2147483647, %v1272
      %v1547 = vand.u32 2147483647, %v1273
      %v1548 = vand.u32 2147483647, %v1274
      %v1549 = vand.u32 2147483647, %v1275
      %v1550 = vand.u32 2147483647, %v1276
      %v1551 = vand.u32 2147483647, %v1277
      %v1552 = vand.u32 2147483647, %v1278
      %v1553 = vand.u32 2147483647, %v1279
      %v1554 = vand.u32 2147483647, %v1280
      %v1555 = vand.u32 2147483647, %v1281
      %v1556 = vand.u32 2147483647, %v1282
      %v1557 = vand.u32 2147483647, %v1283
      %v1558 = vand.u32 2147483647, %v1284
      %v1559 = vand.u32 2147483647, %v1285
      %v1560 = vand.u32 2147483647, %v1286
      %v1561 = vand.u32 2147483647, %v1287
      %v1562 = vand.u32 2147483647, %v1288
      %v1563 = vand.u32 2147483647, %v1289
      %v1564 = vand.u32 2147483647, %v1290
      %v1565 = vand.u32 2147483647, %v1291
      %v1566 = vand.u32 2147483647, %v1292
      %v1567 = vand.u32 2147483647, %v1293
      %v1568 = vand.u32 2147483647, %v1294
      %v1569 = vand.u32 2147483647, %v1295
      %v1570 = vand.u32 2147483647, %v1296
      %v1571 = vand.u32 2147483647, %v1297
      %v1572 = vand.u32 2147483647, %v1298
      %v1573 = vand.u32 2147483647, %v1299
      %v1574 = vand.u32 2147483647, %v1300
      %v1575 = vand.u32 2147483647, %v1301
      %v1576 = vand.u32 2147483647, %v1302
      %v1577 = vand.u32 2147483647, %v1303
      %v1578 = vand.u32 2147483647, %v1304
      %v1579 = vand.u32 2147483647, %v1305
      %v1580 = vand.u32 2147483647, %v1306
      %v1581 = vand.u32 2147483647, %v1307
      %v1582 = vand.u32 2147483647, %v1308
      %v1583 = vand.u32 2147483647, %v1309
      %v1584 = vand.u32 2147483647, %v1310
      %v1585 = vand.u32 2147483647, %v1311
      %v1586 = vand.u32 2147483647, %v1312
      %v1587 = vand.u32 2147483647, %v1313
      %v1588 = vand.u32 2147483647, %v1314
      %v1589 = vand.u32 2147483647, %v1315
      %v1590 = vand.u32 2147483647, %v1316
      %v1591 = vand.u32 2147483647, %v1317
      %v1592 = vand.u32 2147483647, %v1318
      %v1593 = vand.u32 2147483647, %v1319
      %v1594 = vand.u32 2147483647, %v1320
      %v1595 = vand.u32 2147483647, %v1321
      %v1596 = vand.u32 2147483647, %v1322
      %v1597 = vand.u32 2147483647, %v1323
      %v1598 = vand.u32 2147483647, %v1324
      %v1599 = vand.u32 2147483647, %v1325
      %v1600 = vand.u32 2147483647, %v1326
      %v1601 = vand.u32 2147483647, %v1327
      %v1602 = vand.u32 2147483647, %v1328
      %v1603 = vand.u32 2147483647, %v1329
      %v1604 = vand.u32 2147483647, %v1330
      %v1605 = vand.u32 2147483647, %v1331
      %v1606 = vand.u32 2147483647, %v1332
      %v1607 = vand.u32 2147483647, %v1333
      %v1608 = vand.u32 2147483647, %v1334
      %v1609 = vand.u32 2147483647, %v1335
      %v1610 = vand.u32 2147483647, %v1336
      %v1611 = vand.u32 2147483647, %v1337
      %v1612 = vand.u32 2147483647, %v1338
      %v1613 = vand.u32 2147483647, %v1339
      %v1614 = vand.u32 2147483647, %v1340
      %v1615 = vand.u32 2147483647, %v1341
      %v1616 = vand.u32 2147483647, %v1342
      %v1617 = vand.u32 2147483647, %v1343
      %v1618 = vand.u32 2147483647, %v1344
      %v1619 = vand.u32 2147483647, %v1345
      %v1620 = vand.u32 2147483647, %v1346
      %v1621 = vand.u32 2147483647, %v1347
      %v1622 = vand.u32 2147483647, %v1348
      %v1623 = vand.u32 2147483647, %v1349
      %v1624 = vand.u32 2147483647, %v1350
      %v1625 = vand.u32 2147483647, %v1351
      %v1626 = vand.u32 2147483647, %v1352
      %v1627 = vand.u32 2147483647, %v1353
      %v1628 = vand.u32 2147483647, %v1354
      %v1629 = vand.u32 2147483647, %v1355
      %v1630 = vand.u32 2147483647, %v1356
      %v1631 = vand.u32 2147483647, %v1357
      %v1632 = vand.u32 2147483647, %v1358
      %v1633 = vand.u32 2147483647, %v1359
      %v1634 = vand.u32 2147483647, %v1360
      %v1635 = vand.u32 2147483647, %v1361
      %v1636 = vand.u32 2147483647, %v1362
      %v1637 = vand.u32 2147483647, %v1363
      %v1638 = vand.u32 2147483647, %v1364
      %v1639 = vand.u32 2147483647, %v1365
      %v1640 = vand.u32 2147483647, %v1366
      %v1641 = vand.u32 2147483647, %v1367
      %v1642 = vand.u32 2147483647, %v1368
      %v1643 = vand.u32 2147483647, %v1369
      %v1644 = vand.u32 2147483647, %v1370
      %v1645 = vand.u32 2147483647, %v1371
      %v1646 = vand.u32 2147483647, %v1372
      %v1647 = vand.u32 2147483647, %v1373
      %v1648 = vand.u32 2147483647, %v1374
      %v1649 = vand.u32 2147483647, %v1375
      %v1650 = vand.u32 2147483647, %v1376
      %v1651 = vand.u32 2147483647, %v1377
      %v1652 = vand.u32 2147483647, %v1378
      %v1653 = vand.u32 2147483647, %v1379
      %v1654 = vand.u32 2147483647, %v1380
      %v1655 = vand.u32 2147483647, %v1381
      %v1656 = vand.u32 2147483647, %v1382
      %v1657 = vand.u32 2147483647, %v1383
      %v1658 = vand.u32 2147483647, %v1384
      %v1659 = vand.u32 2147483647, %v1385
      %v1660 = vand.u32 2147483647, %v1386
      %v1661 = vand.u32 2147483647, %v1387
      %v1662 = vand.u32 2147483647, %v1388
      %v1663 = vand.u32 2147483647, %v1389
      %v1664 = vand.u32 2147483647, %v1390
      %v1665 = vand.u32 2147483647, %v1391
      %v1666 = vand.u32 2147483647, %v1392
      %v1667 = vand.u32 2147483647, %v1393
      %v1668 = vand.u32 2147483647, %v1394
      %v1669 = vand.u32 2147483647, %v1395
      %v1670 = vand.u32 2147483647, %v1396
      %v1671 = vand.u32 2147483647, %v1397
      %v1672 = vand.u32 2147483647, %v1398
      %v1673 = vand.u32 2147483647, %v1399
      %v1674 = vand.u32 2147483647, %v1400
      %v1675 = vand.u32 2147483647, %v1401
      %v1676 = vand.u32 2147483647, %v1402
      %v1677 = vand.u32 2147483647, %v1403
      %v1678 = vand.u32 2147483647, %v1404
      %v1679 = vand.u32 2147483647, %v1405
      %v1680 = vand.u32 2147483647, %v1406
      %v1681 = vand.u32 2147483647, %v1407
      %v1682 = vand.u32 2147483647, %v1408
      %v1683 = vand.u32 2147483647, %v1409
      %v1684 = vand.u32 2147483647, %v1410
      %v1685 = vsub.f32 1.0, %v1411
      %v1686 = vsub.f32 1.0, %v1412
      %v1687 = vsub.f32 1.0, %v1413
      %v1688 = vsub.f32 1.0, %v1414
      %v1689 = vsub.f32 1.0, %v1415
      %v1690 = vsub.f32 1.0, %v1416
      %v1691 = vsub.f32 1.0, %v1417
      %v1692 = vsub.f32 1.0, %v1418
      %v1693 = vsub.f32 1.0, %v1419
      %v1694 = vsub.f32 1.0, %v1420
      %v1695 = vsub.f32 1.0, %v1421
      %v1696 = vsub.f32 1.0, %v1422
      %v1697 = vsub.f32 1.0, %v1423
      %v1698 = vsub.f32 1.0, %v1424
      %v1699 = vsub.f32 1.0, %v1425
      %v1700 = vsub.f32 1.0, %v1426
      %v1701 = vsub.f32 1.0, %v1427
      %v1702 = vsub.f32 1.0, %v1428
      %v1703 = vsub.f32 1.0, %v1429
      %v1704 = vsub.f32 1.0, %v1430
      %v1705 = vsub.f32 1.0, %v1431
      %v1706 = vsub.f32 1.0, %v1432
      %v1707 = vsub.f32 1.0, %v1433
      %v1708 = vsub.f32 1.0, %v1434
      %v1709 = vsub.f32 1.0, %v1435
      %v1710 = vsub.f32 1.0, %v1436
      %v1711 = vsub.f32 1.0, %v1437
      %v1712 = vsub.f32 1.0, %v1438
      %v1713 = vsub.f32 1.0, %v1439
      %v1714 = vsub.f32 1.0, %v1440
      %v1715 = vsub.f32 1.0, %v1441
      %v1716 = vsub.f32 1.0, %v1442
      %v1717 = vsub.f32 1.0, %v1443
      %v1718 = vsub.f32 1.0, %v1444
      %v1719 = vsub.f32 1.0, %v1445
      %v1720 = vsub.f32 1.0, %v1446
      %v1721 = vsub.f32 1.0, %v1447
      %v1722 = vsub.f32 1.0, %v1448
      %v1723 = vsub.f32 1.0, %v1449
      %v1724 = vsub.f32 1.0, %v1450
      %v1725 = vsub.f32 1.0, %v1451
      %v1726 = vsub.f32 1.0, %v1452
      %v1727 = vsub.f32 1.0, %v1453
      %v1728 = vsub.f32 1.0, %v1454
      %v1729 = vsub.f32 1.0, %v1455
      %v1730 = vsub.f32 1.0, %v1456
      %v1731 = vsub.f32 1.0, %v1457
      %v1732 = vsub.f32 1.0, %v1458
      %v1733 = vsub.f32 1.0, %v1459
      %v1734 = vsub.f32 1.0, %v1460
      %v1735 = vsub.f32 1.0, %v1461
      %v1736 = vsub.f32 1.0, %v1462
      %v1737 = vsub.f32 1.0, %v1463
      %v1738 = vsub.f32 1.0, %v1464
      %v1739 = vsub.f32 1.0, %v1465
      %v1740 = vsub.f32 1.0, %v1466
      %v1741 = vsub.f32 1.0, %v1467
      %v1742 = vsub.f32 1.0, %v1468
      %v1743 = vsub.f32 1.0, %v1469
      %v1744 = vsub.f32 1.0, %v1470
      %v1745 = vsub.f32 1.0, %v1471
      %v1746 = vsub.f32 1.0, %v1472
      %v1747 = vsub.f32 1.0, %v1473
      %v1748 = vsub.f32 1.0, %v1474
      %v1749 = vsub.f32 1.0, %v1475
      %v1750 = vsub.f32 1.0, %v1476
      %v1751 = vsub.f32 1.0, %v1477
      %v1752 = vsub.f32 1.0, %v1478
      %v1753 = vsub.f32 1.0, %v1479
      %v1754 = vsub.f32 1.0, %v1480
      %v1755 = vsub.f32 1.0, %v1481
      %v1756 = vsub.f32 1.0, %v1482
      %v1757 = vsub.f32 1.0, %v1483
      %v1758 = vsub.f32 1.0, %v1484
      %v1759 = vsub.f32 1.0, %v1485
      %v1760 = vsub.f32 1.0, %v1486
      %v1761 = vsub.f32 1.0, %v1487
      %v1762 = vsub.f32 1.0, %v1488
      %v1763 = vsub.f32 1.0, %v1489
      %v1764 = vsub.f32 1.0, %v1490
      %v1765 = vsub.f32 1.0, %v1491
      %v1766 = vsub.f32 1.0, %v1492
      %v1767 = vsub.f32 1.0, %v1493
      %v1768 = vsub.f32 1.0, %v1494
      %v1769 = vsub.f32 1.0, %v1495
      %v1770 = vsub.f32 1.0, %v1496
      %v1771 = vsub.f32 1.0, %v1497
      %v1772 = vsub.f32 1.0, %v1498
      %v1773 = vsub.f32 1.0, %v1499
      %v1774 = vsub.f32 1.0, %v1500
      %v1775 = vsub.f32 1.0, %v1501
      %v1776 = vsub.f32 1.0, %v1502
      %v1777 = vsub.f32 1.0, %v1503
      %v1778 = vsub.f32 1.0, %v1504
      %v1779 = vsub.f32 1.0, %v1505
      %v1780 = vsub.f32 1.0, %v1506
      %v1781 = vsub.f32 1.0, %v1507
      %v1782 = vsub.f32 1.0, %v1508
      %v1783 = vsub.f32 1.0, %v1509
      %v1784 = vsub.f32 1.0, %v1510
      %v1785 = vsub.f32 1.0, %v1511
      %v1786 = vsub.f32 1.0, %v1512
      %v1787 = vsub.f32 1.0, %v1513
      %v1788 = vsub.f32 1.0, %v1514
      %v1789 = vsub.f32 1.0, %v1515
      %v1790 = vsub.f32 1.0, %v1516
      %v1791 = vsub.f32 1.0, %v1517
      %v1792 = vsub.f32 1.0, %v1518
      %v1793 = vsub.f32 1.0, %v1519
      %v1794 = vsub.f32 1.0, %v1520
      %v1795 = vsub.f32 1.0, %v1521
      %v1796 = vsub.f32 1.0, %v1522
      %v1797 = vsub.f32 1.0, %v1523
      %v1798 = vsub.f32 1.0, %v1524
      %v1799 = vsub.f32 1.0, %v1525
      %v1800 = vsub.f32 1.0, %v1526
      %v1801 = vsub.f32 1.0, %v1527
      %v1802 = vsub.f32 1.0, %v1528
      %v1803 = vsub.f32 1.0, %v1529
      %v1804 = vsub.f32 1.0, %v1530
      %v1805 = vsub.f32 1.0, %v1531
      %v1806 = vsub.f32 1.0, %v1532
      %v1807 = vsub.f32 1.0, %v1533
      %v1808 = vsub.f32 1.0, %v1534
      %v1809 = vsub.f32 1.0, %v1535
      %v1810 = vsub.f32 1.0, %v1536
      %v1811 = vsub.f32 1.0, %v1537
      %v1812 = vsub.f32 1.0, %v1538
      %v1813 = vsub.f32 1.0, %v1539
      %v1814 = vsub.f32 1.0, %v1540
      %v1815 = vsub.f32 1.0, %v1541
      %v1816 = vsub.f32 1.0, %v1542
      %v1817 = vsub.f32 1.0, %v1543
      %v1818 = vsub.f32 1.0, %v1544
      %v1819 = vsub.f32 1.0, %v1545
      %v1820 = vsub.f32 1.0, %v1546
      %v1821 = vsub.f32 1.0, %v1547
      %v1822 = vsub.f32 1.0, %v1548
      %v1823 = vsub.f32 1.0, %v1549
      %v1824 = vsub.f32 1.0, %v1550
      %v1825 = vsub.f32 1.0, %v1551
      %v1826 = vsub.f32 1.0, %v1552
      %v1827 = vsub.f32 1.0, %v1553
      %v1828 = vsub.f32 1.0, %v1554
      %v1829 = vsub.f32 1.0, %v1555
      %v1830 = vsub.f32 1.0, %v1556
      %v1831 = vsub.f32 1.0, %v1557
      %v1832 = vsub.f32 1.0, %v1558
      %v1833 = vsub.f32 1.0, %v1559
      %v1834 = vsub.f32 1.0, %v1560
      %v1835 = vsub.f32 1.0, %v1561
      %v1836 = vsub.f32 1.0, %v1562
      %v1837 = vsub.f32 1.0, %v1563
      %v1838 = vsub.f32 1.0, %v1564
      %v1839 = vsub.f32 1.0, %v1565
      %v1840 = vsub.f32 1.0, %v1566
      %v1841 = vsub.f32 1.0, %v1567
      %v1842 = vsub.f32 1.0, %v1568
      %v1843 = vsub.f32 1.0, %v1569
      %v1844 = vsub.f32 1.0, %v1570
      %v1845 = vsub.f32 1.0, %v1571
      %v1846 = vsub.f32 1.0, %v1572
      %v1847 = vsub.f32 1.0, %v1573
      %v1848 = vsub.f32 1.0, %v1574
      %v1849 = vsub.f32 1.0, %v1575
      %v1850 = vsub.f32 1.0, %v1576
      %v1851 = vsub.f32 1.0, %v1577
      %v1852 = vsub.f32 1.0, %v1578
      %v1853 = vsub.f32 1.0, %v1579
      %v1854 = vsub.f32 1.0, %v1580
      %v1855 = vsub.f32 1.0, %v1581
      %v1856 = vsub.f32 1.0, %v1582
      %v1857 = vsub.f32 1.0, %v1583
      %v1858 = vsub.f32 1.0, %v1584
      %v1859 = vsub.f32 1.0, %v1585
      %v1860 = vsub.f32 1.0, %v1586
      %v1861 = vsub.f32 1.0, %v1587
      %v1862 = vsub.f32 1.0, %v1588
      %v1863 = vsub.f32 1.0, %v1589
      %v1864 = vsub.f32 1.0, %v1590
      %v1865 = vsub.f32 1.0, %v1591
      %v1866 = vsub.f32 1.0, %v1592
      %v1867 = vsub.f32 1.0, %v1593
      %v1868 = vsub.f32 1.0, %v1594
      %v1869 = vsub.f32 1.0, %v1595
      %v1870 = vsub.f32 1.0, %v1596
      %v1871 = vsub.f32 1.0, %v1597
      %v1872 = vsub.f32 1.0, %v1598
      %v1873 = vsub.f32 1.0, %v1599
      %v1874 = vsub.f32 1.0, %v1600
      %v1875 = vsub.f32 1.0, %v1601
      %v1876 = vsub.f32 1.0, %v1602
      %v1877 = vsub.f32 1.0, %v1603
      %v1878 = vsub.f32 1.0, %v1604
      %v1879 = vsub.f32 1.0, %v1605
      %v1880 = vsub.f32 1.0, %v1606
      %v1881 = vsub.f32 1.0, %v1607
      %v1882 = vsub.f32 1.0, %v1608
      %v1883 = vsub.f32 1.0, %v1609
      %v1884 = vsub.f32 1.0, %v1610
      %v1885 = vsub.f32 1.0, %v1611
      %v1886 = vsub.f32 1.0, %v1612
      %v1887 = vsub.f32 1.0, %v1613
      %v1888 = vsub.f32 1.0, %v1614
      %v1889 = vsub.f32 1.0, %v1615
      %v1890 = vsub.f32 1.0, %v1616
      %v1891 = vsub.f32 1.0, %v1617
      %v1892 = vsub.f32 1.0, %v1618
      %v1893 = vsub.f32 1.0, %v1619
      %v1894 = vsub.f32 1.0, %v1620
      %v1895 = vsub.f32 1.0, %v1621
      %v1896 = vsub.f32 1.0, %v1622
      %v1897 = vsub.f32 1.0, %v1623
      %v1898 = vsub.f32 1.0, %v1624
      %v1899 = vsub.f32 1.0, %v1625
      %v1900 = vsub.f32 1.0, %v1626
      %v1901 = vsub.f32 1.0, %v1627
      %v1902 = vsub.f32 1.0, %v1628
      %v1903 = vsub.f32 1.0, %v1629
      %v1904 = vsub.f32 1.0, %v1630
      %v1905 = vsub.f32 1.0, %v1631
      %v1906 = vsub.f32 1.0, %v1632
      %v1907 = vsub.f32 1.0, %v1633
      %v1908 = vsub.f32 1.0, %v1634
      %v1909 = vsub.f32 1.0, %v1635
      %v1910 = vsub.f32 1.0, %v1636
      %v1911 = vsub.f32 1.0, %v1637
      %v1912 = vsub.f32 1.0, %v1638
      %v1913 = vsub.f32 1.0, %v1639
      %v1914 = vsub.f32 1.0, %v1640
      %v1915 = vsub.f32 1.0, %v1641
      %v1916 = vsub.f32 1.0, %v1642
      %v1917 = vsub.f32 1.0, %v1643
      %v1918 = vsub.f32 1.0, %v1644
      %v1919 = vsub.f32 1.0, %v1645
      %v1920 = vsub.f32 1.0, %v1646
      %v1921 = vsub.f32 1.0, %v1647
      %v1922 = vsub.f32 1.0, %v1648
      %v1923 = vsub.f32 1.0, %v1649
      %v1924 = vsub.f32 1.0, %v1650
      %v1925 = vsub.f32 1.0, %v1651
      %v1926 = vsub.f32 1.0, %v1652
      %v1927 = vsub.f32 1.0, %v1653
      %v1928 = vsub.f32 1.0, %v1654
      %v1929 = vsub.f32 1.0, %v1655
      %v1930 = vsub.f32 1.0, %v1656
      %v1931 = vsub.f32 1.0, %v1657
      %v1932 = vsub.f32 1.0, %v1658
      %v1933 = vsub.f32 1.0, %v1659
      %v1934 = vsub.f32 1.0, %v1660
      %v1935 = vsub.f32 1.0, %v1661
      %v1936 = vsub.f32 1.0, %v1662
      %v1937 = vsub.f32 1.0, %v1663
      %v1938 = vsub.f32 1.0, %v1664
      %v1939 = vsub.f32 1.0, %v1665
      %v1940 = vsub.f32 1.0, %v1666
      %v1941 = vsub.f32 1.0, %v1667
      %v1942 = vsub.f32 1.0, %v1668
      %v1943 = vsub.f32 1.0, %v1669
      %v1944 = vsub.f32 1.0, %v1670
      %v1945 = vsub.f32 1.0, %v1671
      %v1946 = vsub.f32 1.0, %v1672
      %v1947 = vsub.f32 1.0, %v1673
      %v1948 = vsub.f32 1.0, %v1674
      %v1949 = vsub.f32 1.0, %v1675
      %v1950 = vsub.f32 1.0, %v1676
      %v1951 = vsub.f32 1.0, %v1677
      %v1952 = vsub.f32 1.0, %v1678
      %v1953 = vsub.f32 1.0, %v1679
      %v1954 = vsub.f32 1.0, %v1680
      %v1955 = vsub.f32 1.0, %v1681
      %v1956 = vsub.f32 1.0, %v1682
      %v1957 = vsub.f32 1.0, %v1683
      %v1958 = vsub.f32 1.0, %v1684
      %v1959 = vmax.f32 %v1685, 0.0
      %v1960 = vmax.f32 %v1686, 0.0
      %v1961 = vmax.f32 %v1687, 0.0
      %v1962 = vmax.f32 %v1688, 0.0
      %v1963 = vmax.f32 %v1689, 0.0
      %v1964 = vmax.f32 %v1690, 0.0
      %v1965 = vmax.f32 %v1691, 0.0
      %v1966 = vmax.f32 %v1692, 0.0
      %v1967 = vmax.f32 %v1693, 0.0
      %v1968 = vmax.f32 %v1694, 0.0
      %v1969 = vmax.f32 %v1695, 0.0
      %v1970 = vmax.f32 %v1696, 0.0
      %v1971 = vmax.f32 %v1697, 0.0
      %v1972 = vmax.f32 %v1698, 0.0
      %v1973 = vmax.f32 %v1699, 0.0
      %v1974 = vmax.f32 %v1700, 0.0
      %v1975 = vmax.f32 %v1701, 0.0
      %v1976 = vmax.f32 %v1702, 0.0
      %v1977 = vmax.f32 %v1703, 0.0
      %v1978 = vmax.f32 %v1704, 0.0
      %v1979 = vmax.f32 %v1705, 0.0
      %v1980 = vmax.f32 %v1706, 0.0
      %v1981 = vmax.f32 %v1707, 0.0
      %v1982 = vmax.f32 %v1708, 0.0
      %v1983 = vmax.f32 %v1709, 0.0
      %v1984 = vmax.f32 %v1710, 0.0
      %v1985 = vmax.f32 %v1711, 0.0
      %v1986 = vmax.f32 %v1712, 0.0
      %v1987 = vmax.f32 %v1713, 0.0
      %v1988 = vmax.f32 %v1714, 0.0
      %v1989 = vmax.f32 %v1715, 0.0
      %v1990 = vmax.f32 %v1716, 0.0
      %v1991 = vmax.f32 %v1717, 0.0
      %v1992 = vmax.f32 %v1718, 0.0
      %v1993 = vmax.f32 %v1719, 0.0
      %v1994 = vmax.f32 %v1720, 0.0
      %v1995 = vmax.f32 %v1721, 0.0
      %v1996 = vmax.f32 %v1722, 0.0
      %v1997 = vmax.f32 %v1723, 0.0
      %v1998 = vmax.f32 %v1724, 0.0
      %v1999 = vmax.f32 %v1725, 0.0
      %v2000 = vmax.f32 %v1726, 0.0
      %v2001 = vmax.f32 %v1727, 0.0
      %v2002 = vmax.f32 %v1728, 0.0
      %v2003 = vmax.f32 %v1729, 0.0
      %v2004 = vmax.f32 %v1730, 0.0
      %v2005 = vmax.f32 %v1731, 0.0
      %v2006 = vmax.f32 %v1732, 0.0
      %v2007 = vmax.f32 %v1733, 0.0
      %v2008 = vmax.f32 %v1734, 0.0
      %v2009 = vmax.f32 %v1735, 0.0
      %v2010 = vmax.f32 %v1736, 0.0
      %v2011 = vmax.f32 %v1737, 0.0
      %v2012 = vmax.f32 %v1738, 0.0
      %v2013 = vmax.f32 %v1739, 0.0
      %v2014 = vmax.f32 %v1740, 0.0
      %v2015 = vmax.f32 %v1741, 0.0
      %v2016 = vmax.f32 %v1742, 0.0
      %v2017 = vmax.f32 %v1743, 0.0
      %v2018 = vmax.f32 %v1744, 0.0
      %v2019 = vmax.f32 %v1745, 0.0
      %v2020 = vmax.f32 %v1746, 0.0
      %v2021 = vmax.f32 %v1747, 0.0
      %v2022 = vmax.f32 %v1748, 0.0
      %v2023 = vmax.f32 %v1749, 0.0
      %v2024 = vmax.f32 %v1750, 0.0
      %v2025 = vmax.f32 %v1751, 0.0
      %v2026 = vmax.f32 %v1752, 0.0
      %v2027 = vmax.f32 %v1753, 0.0
      %v2028 = vmax.f32 %v1754, 0.0
      %v2029 = vmax.f32 %v1755, 0.0
      %v2030 = vmax.f32 %v1756, 0.0
      %v2031 = vmax.f32 %v1757, 0.0
      %v2032 = vmax.f32 %v1758, 0.0
      %v2033 = vmax.f32 %v1759, 0.0
      %v2034 = vmax.f32 %v1760, 0.0
      %v2035 = vmax.f32 %v1761, 0.0
      %v2036 = vmax.f32 %v1762, 0.0
      %v2037 = vmax.f32 %v1763, 0.0
      %v2038 = vmax.f32 %v1764, 0.0
      %v2039 = vmax.f32 %v1765, 0.0
      %v2040 = vmax.f32 %v1766, 0.0
      %v2041 = vmax.f32 %v1767, 0.0
      %v2042 = vmax.f32 %v1768, 0.0
      %v2043 = vmax.f32 %v1769, 0.0
      %v2044 = vmax.f32 %v1770, 0.0
      %v2045 = vmax.f32 %v1771, 0.0
      %v2046 = vmax.f32 %v1772, 0.0
      %v2047 = vmax.f32 %v1773, 0.0
      %v2048 = vmax.f32 %v1774, 0.0
      %v2049 = vmax.f32 %v1775, 0.0
      %v2050 = vmax.f32 %v1776, 0.0
      %v2051 = vmax.f32 %v1777, 0.0
      %v2052 = vmax.f32 %v1778, 0.0
      %v2053 = vmax.f32 %v1779, 0.0
      %v2054 = vmax.f32 %v1780, 0.0
      %v2055 = vmax.f32 %v1781, 0.0
      %v2056 = vmax.f32 %v1782, 0.0
      %v2057 = vmax.f32 %v1783, 0.0
      %v2058 = vmax.f32 %v1784, 0.0
      %v2059 = vmax.f32 %v1785, 0.0
      %v2060 = vmax.f32 %v1786, 0.0
      %v2061 = vmax.f32 %v1787, 0.0
      %v2062 = vmax.f32 %v1788, 0.0
      %v2063 = vmax.f32 %v1789, 0.0
      %v2064 = vmax.f32 %v1790, 0.0
      %v2065 = vmax.f32 %v1791, 0.0
      %v2066 = vmax.f32 %v1792, 0.0
      %v2067 = vmax.f32 %v1793, 0.0
      %v2068 = vmax.f32 %v1794, 0.0
      %v2069 = vmax.f32 %v1795, 0.0
      %v2070 = vmax.f32 %v1796, 0.0
      %v2071 = vmax.f32 %v1797, 0.0
      %v2072 = vmax.f32 %v1798, 0.0
      %v2073 = vmax.f32 %v1799, 0.0
      %v2074 = vmax.f32 %v1800, 0.0
      %v2075 = vmax.f32 %v1801, 0.0
      %v2076 = vmax.f32 %v1802, 0.0
      %v2077 = vmax.f32 %v1803, 0.0
      %v2078 = vmax.f32 %v1804, 0.0
      %v2079 = vmax.f32 %v1805, 0.0
      %v2080 = vmax.f32 %v1806, 0.0
      %v2081 = vmax.f32 %v1807, 0.0
      %v2082 = vmax.f32 %v1808, 0.0
      %v2083 = vmax.f32 %v1809, 0.0
      %v2084 = vmax.f32 %v1810, 0.0
      %v2085 = vmax.f32 %v1811, 0.0
      %v2086 = vmax.f32 %v1812, 0.0
      %v2087 = vmax.f32 %v1813, 0.0
      %v2088 = vmax.f32 %v1814, 0.0
      %v2089 = vmax.f32 %v1815, 0.0
      %v2090 = vmax.f32 %v1816, 0.0
      %v2091 = vmax.f32 %v1817, 0.0
      %v2092 = vmax.f32 %v1818, 0.0
      %v2093 = vmax.f32 %v1819, 0.0
      %v2094 = vmax.f32 %v1820, 0.0
      %v2095 = vmax.f32 %v1821, 0.0
      %v2096 = vmax.f32 %v1822, 0.0
      %v2097 = vmax.f32 %v1823, 0.0
      %v2098 = vmax.f32 %v1824, 0.0
      %v2099 = vmax.f32 %v1825, 0.0
      %v2100 = vmax.f32 %v1826, 0.0
      %v2101 = vmax.f32 %v1827, 0.0
      %v2102 = vmax.f32 %v1828, 0.0
      %v2103 = vmax.f32 %v1829, 0.0
      %v2104 = vmax.f32 %v1830, 0.0
      %v2105 = vmax.f32 %v1831, 0.0
      %v2106 = vmax.f32 %v1832, 0.0
      %v2107 = vmax.f32 %v1833, 0.0
      %v2108 = vmax.f32 %v1834, 0.0
      %v2109 = vmax.f32 %v1835, 0.0
      %v2110 = vmax.f32 %v1836, 0.0
      %v2111 = vmax.f32 %v1837, 0.0
      %v2112 = vmax.f32 %v1838, 0.0
      %v2113 = vmax.f32 %v1839, 0.0
      %v2114 = vmax.f32 %v1840, 0.0
      %v2115 = vmax.f32 %v1841, 0.0
      %v2116 = vmax.f32 %v1842, 0.0
      %v2117 = vmax.f32 %v1843, 0.0
      %v2118 = vmax.f32 %v1844, 0.0
      %v2119 = vmax.f32 %v1845, 0.0
      %v2120 = vmax.f32 %v1846, 0.0
      %v2121 = vmax.f32 %v1847, 0.0
      %v2122 = vmax.f32 %v1848, 0.0
      %v2123 = vmax.f32 %v1849, 0.0
      %v2124 = vmax.f32 %v1850, 0.0
      %v2125 = vmax.f32 %v1851, 0.0
      %v2126 = vmax.f32 %v1852, 0.0
      %v2127 = vmax.f32 %v1853, 0.0
      %v2128 = vmax.f32 %v1854, 0.0
      %v2129 = vmax.f32 %v1855, 0.0
      %v2130 = vmax.f32 %v1856, 0.0
      %v2131 = vmax.f32 %v1857, 0.0
      %v2132 = vmax.f32 %v1858, 0.0
      %v2133 = vmax.f32 %v1859, 0.0
      %v2134 = vmax.f32 %v1860, 0.0
      %v2135 = vmax.f32 %v1861, 0.0
      %v2136 = vmax.f32 %v1862, 0.0
      %v2137 = vmax.f32 %v1863, 0.0
      %v2138 = vmax.f32 %v1864, 0.0
      %v2139 = vmax.f32 %v1865, 0.0
      %v2140 = vmax.f32 %v1866, 0.0
      %v2141 = vmax.f32 %v1867, 0.0
      %v2142 = vmax.f32 %v1868, 0.0
      %v2143 = vmax.f32 %v1869, 0.0
      %v2144 = vmax.f32 %v1870, 0.0
      %v2145 = vmax.f32 %v1871, 0.0
      %v2146 = vmax.f32 %v1872, 0.0
      %v2147 = vmax.f32 %v1873, 0.0
      %v2148 = vmax.f32 %v1874, 0.0
      %v2149 = vmax.f32 %v1875, 0.0
      %v2150 = vmax.f32 %v1876, 0.0
      %v2151 = vmax.f32 %v1877, 0.0
      %v2152 = vmax.f32 %v1878, 0.0
      %v2153 = vmax.f32 %v1879, 0.0
      %v2154 = vmax.f32 %v1880, 0.0
      %v2155 = vmax.f32 %v1881, 0.0
      %v2156 = vmax.f32 %v1882, 0.0
      %v2157 = vmax.f32 %v1883, 0.0
      %v2158 = vmax.f32 %v1884, 0.0
      %v2159 = vmax.f32 %v1885, 0.0
      %v2160 = vmax.f32 %v1886, 0.0
      %v2161 = vmax.f32 %v1887, 0.0
      %v2162 = vmax.f32 %v1888, 0.0
      %v2163 = vmax.f32 %v1889, 0.0
      %v2164 = vmax.f32 %v1890, 0.0
      %v2165 = vmax.f32 %v1891, 0.0
      %v2166 = vmax.f32 %v1892, 0.0
      %v2167 = vmax.f32 %v1893, 0.0
      %v2168 = vmax.f32 %v1894, 0.0
      %v2169 = vmax.f32 %v1895, 0.0
      %v2170 = vmax.f32 %v1896, 0.0
      %v2171 = vmax.f32 %v1897, 0.0
      %v2172 = vmax.f32 %v1898, 0.0
      %v2173 = vmax.f32 %v1899, 0.0
      %v2174 = vmax.f32 %v1900, 0.0
      %v2175 = vmax.f32 %v1901, 0.0
      %v2176 = vmax.f32 %v1902, 0.0
      %v2177 = vmax.f32 %v1903, 0.0
      %v2178 = vmax.f32 %v1904, 0.0
      %v2179 = vmax.f32 %v1905, 0.0
      %v2180 = vmax.f32 %v1906, 0.0
      %v2181 = vmax.f32 %v1907, 0.0
      %v2182 = vmax.f32 %v1908, 0.0
      %v2183 = vmax.f32 %v1909, 0.0
      %v2184 = vmax.f32 %v1910, 0.0
      %v2185 = vmax.f32 %v1911, 0.0
      %v2186 = vmax.f32 %v1912, 0.0
      %v2187 = vmax.f32 %v1913, 0.0
      %v2188 = vmax.f32 %v1914, 0.0
      %v2189 = vmax.f32 %v1915, 0.0
      %v2190 = vmax.f32 %v1916, 0.0
      %v2191 = vmax.f32 %v1917, 0.0
      %v2192 = vmax.f32 %v1918, 0.0
      %v2193 = vmax.f32 %v1919, 0.0
      %v2194 = vmax.f32 %v1920, 0.0
      %v2195 = vmax.f32 %v1921, 0.0
      %v2196 = vmax.f32 %v1922, 0.0
      %v2197 = vmax.f32 %v1923, 0.0
      %v2198 = vmax.f32 %v1924, 0.0
      %v2199 = vmax.f32 %v1925, 0.0
      %v2200 = vmax.f32 %v1926, 0.0
      %v2201 = vmax.f32 %v1927, 0.0
      %v2202 = vmax.f32 %v1928, 0.0
      %v2203 = vmax.f32 %v1929, 0.0
      %v2204 = vmax.f32 %v1930, 0.0
      %v2205 = vmax.f32 %v1931, 0.0
      %v2206 = vmax.f32 %v1932, 0.0
      %v2207 = vmax.f32 %v1933, 0.0
      %v2208 = vmax.f32 %v1934, 0.0
      %v2209 = vmax.f32 %v1935, 0.0
      %v2210 = vmax.f32 %v1936, 0.0
      %v2211 = vmax.f32 %v1937, 0.0
      %v2212 = vmax.f32 %v1938, 0.0
      %v2213 = vmax.f32 %v1939, 0.0
      %v2214 = vmax.f32 %v1940, 0.0
      %v2215 = vmax.f32 %v1941, 0.0
      %v2216 = vmax.f32 %v1942, 0.0
      %v2217 = vmax.f32 %v1943, 0.0
      %v2218 = vmax.f32 %v1944, 0.0
      %v2219 = vmax.f32 %v1945, 0.0
      %v2220 = vmax.f32 %v1946, 0.0
      %v2221 = vmax.f32 %v1947, 0.0
      %v2222 = vmax.f32 %v1948, 0.0
      %v2223 = vmax.f32 %v1949, 0.0
      %v2224 = vmax.f32 %v1950, 0.0
      %v2225 = vmax.f32 %v1951, 0.0
      %v2226 = vmax.f32 %v1952, 0.0
      %v2227 = vmax.f32 %v1953, 0.0
      %v2228 = vmax.f32 %v1954, 0.0
      %v2229 = vmax.f32 %v1955, 0.0
      %v2230 = vmax.f32 %v1956, 0.0
      %v2231 = vmax.f32 %v1957, 0.0
      %v2232 = vmax.f32 %v1958, 0.0
      %v2233 = vld [vmem:[%s3] sm:$0xff]
      %v2234 = vld [vmem:[%s3 + $0x8] sm:$0xff]
      %v2235 = vld [vmem:[%s3 + $0x10] sm:$0xff]
      %v2236 = vld [vmem:[%s3 + $0x18] sm:$0xff]
      %v2237 = vld [vmem:[%s3 + $0x20] sm:$0xff]
      %v2238 = vld [vmem:[%s3 + $0x28] sm:$0xff]
      %v2239 = vld [vmem:[%s3 + $0x30] sm:$0xff]
      %v2240 = vld [vmem:[%s3 + $0x38] sm:$0xff]
      %v2241 = vld [vmem:[%s3 + $0x40] sm:$0xff]
      %v2242 = vld [vmem:[%s3 + $0x48] sm:$0xff]
      %v2243 = vld [vmem:[%s3 + $0x50] sm:$0xff]
      %v2244 = vld [vmem:[%s3 + $0x58] sm:$0xff]
      %v2245 = vld [vmem:[%s3 + $0x60] sm:$0xff]
      %v2246 = vld [vmem:[%s3 + $0x68] sm:$0xff]
      %v2247 = vld [vmem:[%s3 + $0x70] sm:$0xff]
      %v2248 = vld [vmem:[%s3 + $0x78] sm:$0xff]
      %v2249 = vld [vmem:[%s3 + $0x80] sm:$0xff]
      %v2250 = vld [vmem:[%s3 + $0x88] sm:$0xff]
      %v2251 = vld [vmem:[%s3 + $0x90] sm:$0xff]
      %v2252 = vld [vmem:[%s3 + $0x98] sm:$0xff]
      %v2253 = vld [vmem:[%s3 + $0xa0] sm:$0xff]
      %v2254 = vld [vmem:[%s3 + $0xa8] sm:$0xff]
      %v2255 = vld [vmem:[%s3 + $0xb0] sm:$0xff]
      %v2256 = vld [vmem:[%s3 + $0xb8] sm:$0xff]
      %v2257 = vld [vmem:[%s3 + $0xc0] sm:$0xff]
      %v2258 = vld [vmem:[%s3 + $0xc8] sm:$0xff]
      %v2259 = vld [vmem:[%s3 + $0xd0] sm:$0xff]
      %v2260 = vld [vmem:[%s3 + $0xd8] sm:$0xff]
      %v2261 = vld [vmem:[%s3 + $0xe0] sm:$0xff]
      %v2262 = vld [vmem:[%s3 + $0xe8] sm:$0xff]
      %v2263 = vld [vmem:[%s3 + $0xf0] sm:$0xff]
      %v2264 = vld [vmem:[%s3 + $0xf8] sm:$0xff]
      %v2265 = vld [vmem:[%s3 + $0x100] sm:$0xff]
      %v2266 = vld [vmem:[%s3 + $0x108] sm:$0xff]
      %v2267 = vld [vmem:[%s3 + $0x110] sm:$0xff]
      %v2268 = vld [vmem:[%s3 + $0x118] sm:$0xff]
      %v2269 = vld [vmem:[%s3 + $0x120] sm:$0xff]
      %v2270 = vld [vmem:[%s3 + $0x128] sm:$0xff]
      %v2271 = vld [vmem:[%s3 + $0x130] sm:$0xff]
      %v2272 = vld [vmem:[%s3 + $0x138] sm:$0xff]
      %v2273 = vld [vmem:[%s3 + $0x140] sm:$0xff]
      %v2274 = vld [vmem:[%s3 + $0x148] sm:$0xff]
      %v2275 = vld [vmem:[%s3 + $0x150] sm:$0xff]
      %v2276 = vld [vmem:[%s3 + $0x158] sm:$0xff]
      %v2277 = vld [vmem:[%s3 + $0x160] sm:$0xff]
      %v2278 = vld [vmem:[%s3 + $0x168] sm:$0xff]
      %v2279 = vld [vmem:[%s3 + $0x170] sm:$0xff]
      %v2280 = vld [vmem:[%s3 + $0x178] sm:$0xff]
      %v2281 = vld [vmem:[%s3 + $0x180] sm:$0xff]
      %v2282 = vld [vmem:[%s3 + $0x188] sm:$0xff]
      %v2283 = vld [vmem:[%s3 + $0x190] sm:$0xff]
      %v2284 = vld [vmem:[%s3 + $0x198] sm:$0xff]
      %v2285 = vld [vmem:[%s3 + $0x1a0] sm:$0xff]
      %v2286 = vld [vmem:[%s3 + $0x1a8] sm:$0xff]
      %v2287 = vld [vmem:[%s3 + $0x1b0] sm:$0xff]
      %v2288 = vld [vmem:[%s3 + $0x1b8] sm:$0xff]
      %v2289 = vld [vmem:[%s3 + $0x1c0] sm:$0xff]
      %v2290 = vld [vmem:[%s3 + $0x1c8] sm:$0xff]
      %v2291 = vld [vmem:[%s3 + $0x1d0] sm:$0xff]
      %v2292 = vld [vmem:[%s3 + $0x1d8] sm:$0xff]
      %v2293 = vld [vmem:[%s3 + $0x1e0] sm:$0xff]
      %v2294 = vld [vmem:[%s3 + $0x1e8] sm:$0xff]
      %v2295 = vld [vmem:[%s3 + $0x1f0] sm:$0xff]
      %v2296 = vld [vmem:[%s3 + $0x1f8] sm:$0xff]
      %v2297 = vld [vmem:[%s3 + $0x200] sm:$0xff]
      %v2298 = vld [vmem:[%s3 + $0x208] sm:$0xff]
      %v2299 = vld [vmem:[%s3 + $0x210] sm:$0xff]
      %v2300 = vld [vmem:[%s3 + $0x218] sm:$0xff]
      %v2301 = vld [vmem:[%s3 + $0x220] sm:$0xff]
      %v2302 = vld [vmem:[%s3 + $0x228] sm:$0xff]
      %v2303 = vld [vmem:[%s3 + $0x230] sm:$0xff]
      %v2304 = vld [vmem:[%s3 + $0x238] sm:$0xff]
      %v2305 = vld [vmem:[%s3 + $0x240] sm:$0xff]
      %v2306 = vld [vmem:[%s3 + $0x248] sm:$0xff]
      %v2307 = vld [vmem:[%s3 + $0x250] sm:$0xff]
      %v2308 = vld [vmem:[%s3 + $0x258] sm:$0xff]
      %v2309 = vld [vmem:[%s3 + $0x260] sm:$0xff]
      %v2310 = vld [vmem:[%s3 + $0x268] sm:$0xff]
      %v2311 = vld [vmem:[%s3 + $0x270] sm:$0xff]
      %v2312 = vld [vmem:[%s3 + $0x278] sm:$0xff]
      %v2313 = vld [vmem:[%s3 + $0x280] sm:$0xff]
      %v2314 = vld [vmem:[%s3 + $0x288] sm:$0xff]
      %v2315 = vld [vmem:[%s3 + $0x290] sm:$0xff]
      %v2316 = vld [vmem:[%s3 + $0x298] sm:$0xff]
      %v2317 = vld [vmem:[%s3 + $0x2a0] sm:$0xff]
      %v2318 = vld [vmem:[%s3 + $0x2a8] sm:$0xff]
      %v2319 = vld [vmem:[%s3 + $0x2b0] sm:$0xff]
      %v2320 = vld [vmem:[%s3 + $0x2b8] sm:$0xff]
      %v2321 = vld [vmem:[%s3 + $0x2c0] sm:$0xff]
      %v2322 = vld [vmem:[%s3 + $0x2c8] sm:$0xff]
      %v2323 = vld [vmem:[%s3 + $0x2d0] sm:$0xff]
      %v2324 = vld [vmem:[%s3 + $0x2d8] sm:$0xff]
      %v2325 = vld [vmem:[%s3 + $0x2e0] sm:$0xff]
      %v2326 = vld [vmem:[%s3 + $0x2e8] sm:$0xff]
      %v2327 = vld [vmem:[%s3 + $0x2f0] sm:$0xff]
      %v2328 = vld [vmem:[%s3 + $0x2f8] sm:$0xff]
      %v2329 = vld [vmem:[%s3 + $0x300] sm:$0xff]
      %v2330 = vld [vmem:[%s3 + $0x308] sm:$0xff]
      %v2331 = vld [vmem:[%s3 + $0x310] sm:$0xff]
      %v2332 = vld [vmem:[%s3 + $0x318] sm:$0xff]
      %v2333 = vld [vmem:[%s3 + $0x320] sm:$0xff]
      %v2334 = vld [vmem:[%s3 + $0x328] sm:$0xff]
      %v2335 = vld [vmem:[%s3 + $0x330] sm:$0xff]
      %v2336 = vld [vmem:[%s3 + $0x338] sm:$0xff]
      %v2337 = vld [vmem:[%s3 + $0x340] sm:$0xff]
      %v2338 = vld [vmem:[%s3 + $0x348] sm:$0xff]
      %v2339 = vld [vmem:[%s3 + $0x350] sm:$0xff]
      %v2340 = vld [vmem:[%s3 + $0x358] sm:$0xff]
      %v2341 = vld [vmem:[%s3 + $0x360] sm:$0xff]
      %v2342 = vld [vmem:[%s3 + $0x368] sm:$0xff]
      %v2343 = vld [vmem:[%s3 + $0x370] sm:$0xff]
      %v2344 = vld [vmem:[%s3 + $0x378] sm:$0xff]
      %v2345 = vld [vmem:[%s3 + $0x380] sm:$0xff]
      %v2346 = vld [vmem:[%s3 + $0x388] sm:$0xff]
      %v2347 = vld [vmem:[%s3 + $0x390] sm:$0xff]
      %v2348 = vld [vmem:[%s3 + $0x398] sm:$0xff]
      %v2349 = vld [vmem:[%s3 + $0x3a0] sm:$0xff]
      %v2350 = vld [vmem:[%s3 + $0x3a8] sm:$0xff]
      %v2351 = vld [vmem:[%s3 + $0x3b0] sm:$0xff]
      %v2352 = vld [vmem:[%s3 + $0x3b8] sm:$0xff]
      %v2353 = vld [vmem:[%s3 + $0x3c0] sm:$0xff]
      %v2354 = vld [vmem:[%s3 + $0x3c8] sm:$0xff]
      %v2355 = vld [vmem:[%s3 + $0x3d0] sm:$0xff]
      %v2356 = vld [vmem:[%s3 + $0x3d8] sm:$0xff]
      %v2357 = vld [vmem:[%s3 + $0x3e0] sm:$0xff]
      %v2358 = vld [vmem:[%s3 + $0x3e8] sm:$0xff]
      %v2359 = vld [vmem:[%s3 + $0x3f0] sm:$0xff]
      %v2360 = vld [vmem:[%s3 + $0x3f8] sm:$0xff]
      %v2361 = vld [vmem:[%s3 + $0x400] sm:$0xff]
      %v2362 = vld [vmem:[%s3 + $0x408] sm:$0xff]
      %v2363 = vld [vmem:[%s3 + $0x410] sm:$0xff]
      %v2364 = vld [vmem:[%s3 + $0x418] sm:$0xff]
      %v2365 = vld [vmem:[%s3 + $0x420] sm:$0xff]
      %v2366 = vld [vmem:[%s3 + $0x428] sm:$0xff]
      %v2367 = vld [vmem:[%s3 + $0x430] sm:$0xff]
      %v2368 = vld [vmem:[%s3 + $0x438] sm:$0xff]
      %v2369 = vld [vmem:[%s3 + $0x440] sm:$0x1]
      %v2370 = vlaneseq
      %v2371 = vshrl.u32 %v2370, 7
      %v2372 = vsub.s32 0, %v2371
      %v2373 = vrot.slane %v295, %v2372
      %v2374 = vlaneseq
      %v2375 = vshrl.u32 %v2374, 7
      %v2376 = vsub.s32 4, %v2375
      %v2377 = vrot.slane %v295, %v2376
      %v2380 = vlaneseq
      %v2381 = vshrl.u32 %v2380, 7
      %v2382 = vsub.s32 0, %v2381
      %v2383 = vrot.slane %v2373, %v2382
      %v2384 = vlaneseq
      %v2385 = vshrl.u32 %v2384, 7
      %v2386 = vsub.s32 0, %v2385
      %v2387 = vrot.slane %v2377, %v2386
      %2389 = vset.pattern.permute.xlu0 0
      %2390 = vperm.xlu0 %2389, %v2233
      %v2391 = vpop.permute.xlu0 %2390
      %2394 = vset.pattern.permute.xlu0 0
      %2395 = vperm.xlu0 %2394, %v2234
      %v2396 = vpop.permute.xlu0 %2395
      %2399 = vset.pattern.permute.xlu0 0
      %2400 = vperm.xlu0 %2399, %v2235
      %v2401 = vpop.permute.xlu0 %2400
      %2404 = vset.pattern.permute.xlu0 0
      %2405 = vperm.xlu0 %2404, %v2236
      %v2406 = vpop.permute.xlu0 %2405
      %2409 = vset.pattern.permute.xlu0 0
      %2410 = vperm.xlu0 %2409, %v2237
      %v2411 = vpop.permute.xlu0 %2410
      %2414 = vset.pattern.permute.xlu0 0
      %2415 = vperm.xlu0 %2414, %v2238
      %v2416 = vpop.permute.xlu0 %2415
      %2419 = vset.pattern.permute.xlu0 0
      %2420 = vperm.xlu0 %2419, %v2239
      %v2421 = vpop.permute.xlu0 %2420
      %2424 = vset.pattern.permute.xlu0 0
      %2425 = vperm.xlu0 %2424, %v2240
      %v2426 = vpop.permute.xlu0 %2425
      %2429 = vset.pattern.permute.xlu0 0
      %2430 = vperm.xlu0 %2429, %v2241
      %v2431 = vpop.permute.xlu0 %2430
      %2434 = vset.pattern.permute.xlu0 0
      %2435 = vperm.xlu0 %2434, %v2242
      %v2436 = vpop.permute.xlu0 %2435
      %2439 = vset.pattern.permute.xlu0 0
      %2440 = vperm.xlu0 %2439, %v2243
      %v2441 = vpop.permute.xlu0 %2440
      %2444 = vset.pattern.permute.xlu0 0
      %2445 = vperm.xlu0 %2444, %v2244
      %v2446 = vpop.permute.xlu0 %2445
      %2449 = vset.pattern.permute.xlu0 0
      %2450 = vperm.xlu0 %2449, %v2245
      %v2451 = vpop.permute.xlu0 %2450
      %2454 = vset.pattern.permute.xlu0 0
      %2455 = vperm.xlu0 %2454, %v2246
      %v2456 = vpop.permute.xlu0 %2455
      %2459 = vset.pattern.permute.xlu0 0
      %2460 = vperm.xlu0 %2459, %v2247
      %v2461 = vpop.permute.xlu0 %2460
      %2464 = vset.pattern.permute.xlu0 0
      %2465 = vperm.xlu0 %2464, %v2248
      %v2466 = vpop.permute.xlu0 %2465
      %2469 = vset.pattern.permute.xlu0 0
      %2470 = vperm.xlu0 %2469, %v2249
      %v2471 = vpop.permute.xlu0 %2470
      %2474 = vset.pattern.permute.xlu0 0
      %2475 = vperm.xlu0 %2474, %v2250
      %v2476 = vpop.permute.xlu0 %2475
      %2479 = vset.pattern.permute.xlu0 0
      %2480 = vperm.xlu0 %2479, %v2251
      %v2481 = vpop.permute.xlu0 %2480
      %2484 = vset.pattern.permute.xlu0 0
      %2485 = vperm.xlu0 %2484, %v2252
      %v2486 = vpop.permute.xlu0 %2485
      %2489 = vset.pattern.permute.xlu0 0
      %2490 = vperm.xlu0 %2489, %v2253
      %v2491 = vpop.permute.xlu0 %2490
      %2494 = vset.pattern.permute.xlu0 0
      %2495 = vperm.xlu0 %2494, %v2254
      %v2496 = vpop.permute.xlu0 %2495
      %2499 = vset.pattern.permute.xlu0 0
      %2500 = vperm.xlu0 %2499, %v2255
      %v2501 = vpop.permute.xlu0 %2500
      %2504 = vset.pattern.permute.xlu0 0
      %2505 = vperm.xlu0 %2504, %v2256
      %v2506 = vpop.permute.xlu0 %2505
      %2509 = vset.pattern.permute.xlu0 0
      %2510 = vperm.xlu0 %2509, %v2257
      %v2511 = vpop.permute.xlu0 %2510
      %2514 = vset.pattern.permute.xlu0 0
      %2515 = vperm.xlu0 %2514, %v2258
      %v2516 = vpop.permute.xlu0 %2515
      %2519 = vset.pattern.permute.xlu0 0
      %2520 = vperm.xlu0 %2519, %v2259
      %v2521 = vpop.permute.xlu0 %2520
      %2524 = vset.pattern.permute.xlu0 0
      %2525 = vperm.xlu0 %2524, %v2260
      %v2526 = vpop.permute.xlu0 %2525
      %2529 = vset.pattern.permute.xlu0 0
      %2530 = vperm.xlu0 %2529, %v2261
      %v2531 = vpop.permute.xlu0 %2530
      %2534 = vset.pattern.permute.xlu0 0
      %2535 = vperm.xlu0 %2534, %v2262
      %v2536 = vpop.permute.xlu0 %2535
      %2539 = vset.pattern.permute.xlu0 0
      %2540 = vperm.xlu0 %2539, %v2263
      %v2541 = vpop.permute.xlu0 %2540
      %2544 = vset.pattern.permute.xlu0 0
      %2545 = vperm.xlu0 %2544, %v2264
      %v2546 = vpop.permute.xlu0 %2545
      %2549 = vset.pattern.permute.xlu0 0
      %2550 = vperm.xlu0 %2549, %v2265
      %v2551 = vpop.permute.xlu0 %2550
      %2554 = vset.pattern.permute.xlu0 0
      %2555 = vperm.xlu0 %2554, %v2266
      %v2556 = vpop.permute.xlu0 %2555
      %2559 = vset.pattern.permute.xlu0 0
      %2560 = vperm.xlu0 %2559, %v2267
      %v2561 = vpop.permute.xlu0 %2560
      %2564 = vset.pattern.permute.xlu0 0
      %2565 = vperm.xlu0 %2564, %v2268
      %v2566 = vpop.permute.xlu0 %2565
      %2569 = vset.pattern.permute.xlu0 0
      %2570 = vperm.xlu0 %2569, %v2269
      %v2571 = vpop.permute.xlu0 %2570
      %2574 = vset.pattern.permute.xlu0 0
      %2575 = vperm.xlu0 %2574, %v2270
      %v2576 = vpop.permute.xlu0 %2575
      %2579 = vset.pattern.permute.xlu0 0
      %2580 = vperm.xlu0 %2579, %v2271
      %v2581 = vpop.permute.xlu0 %2580
      %2584 = vset.pattern.permute.xlu0 0
      %2585 = vperm.xlu0 %2584, %v2272
      %v2586 = vpop.permute.xlu0 %2585
      %2589 = vset.pattern.permute.xlu0 0
      %2590 = vperm.xlu0 %2589, %v2273
      %v2591 = vpop.permute.xlu0 %2590
      %2594 = vset.pattern.permute.xlu0 0
      %2595 = vperm.xlu0 %2594, %v2274
      %v2596 = vpop.permute.xlu0 %2595
      %2599 = vset.pattern.permute.xlu0 0
      %2600 = vperm.xlu0 %2599, %v2275
      %v2601 = vpop.permute.xlu0 %2600
      %2604 = vset.pattern.permute.xlu0 0
      %2605 = vperm.xlu0 %2604, %v2276
      %v2606 = vpop.permute.xlu0 %2605
      %2609 = vset.pattern.permute.xlu0 0
      %2610 = vperm.xlu0 %2609, %v2277
      %v2611 = vpop.permute.xlu0 %2610
      %2614 = vset.pattern.permute.xlu0 0
      %2615 = vperm.xlu0 %2614, %v2278
      %v2616 = vpop.permute.xlu0 %2615
      %2619 = vset.pattern.permute.xlu0 0
      %2620 = vperm.xlu0 %2619, %v2279
      %v2621 = vpop.permute.xlu0 %2620
      %2624 = vset.pattern.permute.xlu0 0
      %2625 = vperm.xlu0 %2624, %v2280
      %v2626 = vpop.permute.xlu0 %2625
      %2629 = vset.pattern.permute.xlu0 0
      %2630 = vperm.xlu0 %2629, %v2281
      %v2631 = vpop.permute.xlu0 %2630
      %2634 = vset.pattern.permute.xlu0 0
      %2635 = vperm.xlu0 %2634, %v2282
      %v2636 = vpop.permute.xlu0 %2635
      %2639 = vset.pattern.permute.xlu0 0
      %2640 = vperm.xlu0 %2639, %v2283
      %v2641 = vpop.permute.xlu0 %2640
      %2644 = vset.pattern.permute.xlu0 0
      %2645 = vperm.xlu0 %2644, %v2284
      %v2646 = vpop.permute.xlu0 %2645
      %2649 = vset.pattern.permute.xlu0 0
      %2650 = vperm.xlu0 %2649, %v2285
      %v2651 = vpop.permute.xlu0 %2650
      %2654 = vset.pattern.permute.xlu0 0
      %2655 = vperm.xlu0 %2654, %v2286
      %v2656 = vpop.permute.xlu0 %2655
      %2659 = vset.pattern.permute.xlu0 0
      %2660 = vperm.xlu0 %2659, %v2287
      %v2661 = vpop.permute.xlu0 %2660
      %2664 = vset.pattern.permute.xlu0 0
      %2665 = vperm.xlu0 %2664, %v2288
      %v2666 = vpop.permute.xlu0 %2665
      %2669 = vset.pattern.permute.xlu0 0
      %2670 = vperm.xlu0 %2669, %v2289
      %v2671 = vpop.permute.xlu0 %2670
      %2674 = vset.pattern.permute.xlu0 0
      %2675 = vperm.xlu0 %2674, %v2290
      %v2676 = vpop.permute.xlu0 %2675
      %2679 = vset.pattern.permute.xlu0 0
      %2680 = vperm.xlu0 %2679, %v2291
      %v2681 = vpop.permute.xlu0 %2680
      %2684 = vset.pattern.permute.xlu0 0
      %2685 = vperm.xlu0 %2684, %v2292
      %v2686 = vpop.permute.xlu0 %2685
      %2689 = vset.pattern.permute.xlu0 0
      %2690 = vperm.xlu0 %2689, %v2293
      %v2691 = vpop.permute.xlu0 %2690
      %2694 = vset.pattern.permute.xlu0 0
      %2695 = vperm.xlu0 %2694, %v2294
      %v2696 = vpop.permute.xlu0 %2695
      %2699 = vset.pattern.permute.xlu0 0
      %2700 = vperm.xlu0 %2699, %v2295
      %v2701 = vpop.permute.xlu0 %2700
      %2704 = vset.pattern.permute.xlu0 0
      %2705 = vperm.xlu0 %2704, %v2296
      %v2706 = vpop.permute.xlu0 %2705
      %2709 = vset.pattern.permute.xlu0 0
      %2710 = vperm.xlu0 %2709, %v2297
      %v2711 = vpop.permute.xlu0 %2710
      %2714 = vset.pattern.permute.xlu0 0
      %2715 = vperm.xlu0 %2714, %v2298
      %v2716 = vpop.permute.xlu0 %2715
      %2719 = vset.pattern.permute.xlu0 0
      %2720 = vperm.xlu0 %2719, %v2299
      %v2721 = vpop.permute.xlu0 %2720
      %2724 = vset.pattern.permute.xlu0 0
      %2725 = vperm.xlu0 %2724, %v2300
      %v2726 = vpop.permute.xlu0 %2725
      %2729 = vset.pattern.permute.xlu0 0
      %2730 = vperm.xlu0 %2729, %v2301
      %v2731 = vpop.permute.xlu0 %2730
      %2734 = vset.pattern.permute.xlu0 0
      %2735 = vperm.xlu0 %2734, %v2302
      %v2736 = vpop.permute.xlu0 %2735
      %2739 = vset.pattern.permute.xlu0 0
      %2740 = vperm.xlu0 %2739, %v2303
      %v2741 = vpop.permute.xlu0 %2740
      %2744 = vset.pattern.permute.xlu0 0
      %2745 = vperm.xlu0 %2744, %v2304
      %v2746 = vpop.permute.xlu0 %2745
      %2749 = vset.pattern.permute.xlu0 0
      %2750 = vperm.xlu0 %2749, %v2305
      %v2751 = vpop.permute.xlu0 %2750
      %2754 = vset.pattern.permute.xlu0 0
      %2755 = vperm.xlu0 %2754, %v2306
      %v2756 = vpop.permute.xlu0 %2755
      %2759 = vset.pattern.permute.xlu0 0
      %2760 = vperm.xlu0 %2759, %v2307
      %v2761 = vpop.permute.xlu0 %2760
      %2764 = vset.pattern.permute.xlu0 0
      %2765 = vperm.xlu0 %2764, %v2308
      %v2766 = vpop.permute.xlu0 %2765
      %2769 = vset.pattern.permute.xlu0 0
      %2770 = vperm.xlu0 %2769, %v2309
      %v2771 = vpop.permute.xlu0 %2770
      %2774 = vset.pattern.permute.xlu0 0
      %2775 = vperm.xlu0 %2774, %v2310
      %v2776 = vpop.permute.xlu0 %2775
      %2779 = vset.pattern.permute.xlu0 0
      %2780 = vperm.xlu0 %2779, %v2311
      %v2781 = vpop.permute.xlu0 %2780
      %2784 = vset.pattern.permute.xlu0 0
      %2785 = vperm.xlu0 %2784, %v2312
      %v2786 = vpop.permute.xlu0 %2785
      %2789 = vset.pattern.permute.xlu0 0
      %2790 = vperm.xlu0 %2789, %v2313
      %v2791 = vpop.permute.xlu0 %2790
      %2794 = vset.pattern.permute.xlu0 0
      %2795 = vperm.xlu0 %2794, %v2314
      %v2796 = vpop.permute.xlu0 %2795
      %2799 = vset.pattern.permute.xlu0 0
      %2800 = vperm.xlu0 %2799, %v2315
      %v2801 = vpop.permute.xlu0 %2800
      %2804 = vset.pattern.permute.xlu0 0
      %2805 = vperm.xlu0 %2804, %v2316
      %v2806 = vpop.permute.xlu0 %2805
      %2809 = vset.pattern.permute.xlu0 0
      %2810 = vperm.xlu0 %2809, %v2317
      %v2811 = vpop.permute.xlu0 %2810
      %2814 = vset.pattern.permute.xlu0 0
      %2815 = vperm.xlu0 %2814, %v2318
      %v2816 = vpop.permute.xlu0 %2815
      %2819 = vset.pattern.permute.xlu0 0
      %2820 = vperm.xlu0 %2819, %v2319
      %v2821 = vpop.permute.xlu0 %2820
      %2824 = vset.pattern.permute.xlu0 0
      %2825 = vperm.xlu0 %2824, %v2320
      %v2826 = vpop.permute.xlu0 %2825
      %2829 = vset.pattern.permute.xlu0 0
      %2830 = vperm.xlu0 %2829, %v2321
      %v2831 = vpop.permute.xlu0 %2830
      %2834 = vset.pattern.permute.xlu0 0
      %2835 = vperm.xlu0 %2834, %v2322
      %v2836 = vpop.permute.xlu0 %2835
      %2839 = vset.pattern.permute.xlu0 0
      %2840 = vperm.xlu0 %2839, %v2323
      %v2841 = vpop.permute.xlu0 %2840
      %2844 = vset.pattern.permute.xlu0 0
      %2845 = vperm.xlu0 %2844, %v2324
      %v2846 = vpop.permute.xlu0 %2845
      %2849 = vset.pattern.permute.xlu0 0
      %2850 = vperm.xlu0 %2849, %v2325
      %v2851 = vpop.permute.xlu0 %2850
      %2854 = vset.pattern.permute.xlu0 0
      %2855 = vperm.xlu0 %2854, %v2326
      %v2856 = vpop.permute.xlu0 %2855
      %2859 = vset.pattern.permute.xlu0 0
      %2860 = vperm.xlu0 %2859, %v2327
      %v2861 = vpop.permute.xlu0 %2860
      %2864 = vset.pattern.permute.xlu0 0
      %2865 = vperm.xlu0 %2864, %v2328
      %v2866 = vpop.permute.xlu0 %2865
      %2869 = vset.pattern.permute.xlu0 0
      %2870 = vperm.xlu0 %2869, %v2329
      %v2871 = vpop.permute.xlu0 %2870
      %2874 = vset.pattern.permute.xlu0 0
      %2875 = vperm.xlu0 %2874, %v2330
      %v2876 = vpop.permute.xlu0 %2875
      %2879 = vset.pattern.permute.xlu0 0
      %2880 = vperm.xlu0 %2879, %v2331
      %v2881 = vpop.permute.xlu0 %2880
      %2884 = vset.pattern.permute.xlu0 0
      %2885 = vperm.xlu0 %2884, %v2332
      %v2886 = vpop.permute.xlu0 %2885
      %2889 = vset.pattern.permute.xlu0 0
      %2890 = vperm.xlu0 %2889, %v2333
      %v2891 = vpop.permute.xlu0 %2890
      %2894 = vset.pattern.permute.xlu0 0
      %2895 = vperm.xlu0 %2894, %v2334
      %v2896 = vpop.permute.xlu0 %2895
      %2899 = vset.pattern.permute.xlu0 0
      %2900 = vperm.xlu0 %2899, %v2335
      %v2901 = vpop.permute.xlu0 %2900
      %2904 = vset.pattern.permute.xlu0 0
      %2905 = vperm.xlu0 %2904, %v2336
      %v2906 = vpop.permute.xlu0 %2905
      %2909 = vset.pattern.permute.xlu0 0
      %2910 = vperm.xlu0 %2909, %v2337
      %v2911 = vpop.permute.xlu0 %2910
      %2914 = vset.pattern.permute.xlu0 0
      %2915 = vperm.xlu0 %2914, %v2338
      %v2916 = vpop.permute.xlu0 %2915
      %2919 = vset.pattern.permute.xlu0 0
      %2920 = vperm.xlu0 %2919, %v2339
      %v2921 = vpop.permute.xlu0 %2920
      %2924 = vset.pattern.permute.xlu0 0
      %2925 = vperm.xlu0 %2924, %v2340
      %v2926 = vpop.permute.xlu0 %2925
      %2929 = vset.pattern.permute.xlu0 0
      %2930 = vperm.xlu0 %2929, %v2341
      %v2931 = vpop.permute.xlu0 %2930
      %2934 = vset.pattern.permute.xlu0 0
      %2935 = vperm.xlu0 %2934, %v2342
      %v2936 = vpop.permute.xlu0 %2935
      %2939 = vset.pattern.permute.xlu0 0
      %2940 = vperm.xlu0 %2939, %v2343
      %v2941 = vpop.permute.xlu0 %2940
      %2944 = vset.pattern.permute.xlu0 0
      %2945 = vperm.xlu0 %2944, %v2344
      %v2946 = vpop.permute.xlu0 %2945
      %2949 = vset.pattern.permute.xlu0 0
      %2950 = vperm.xlu0 %2949, %v2345
      %v2951 = vpop.permute.xlu0 %2950
      %2954 = vset.pattern.permute.xlu0 0
      %2955 = vperm.xlu0 %2954, %v2346
      %v2956 = vpop.permute.xlu0 %2955
      %2959 = vset.pattern.permute.xlu0 0
      %2960 = vperm.xlu0 %2959, %v2347
      %v2961 = vpop.permute.xlu0 %2960
      %2964 = vset.pattern.permute.xlu0 0
      %2965 = vperm.xlu0 %2964, %v2348
      %v2966 = vpop.permute.xlu0 %2965
      %2969 = vset.pattern.permute.xlu0 0
      %2970 = vperm.xlu0 %2969, %v2349
      %v2971 = vpop.permute.xlu0 %2970
      %2974 = vset.pattern.permute.xlu0 0
      %2975 = vperm.xlu0 %2974, %v2350
      %v2976 = vpop.permute.xlu0 %2975
      %2979 = vset.pattern.permute.xlu0 0
      %2980 = vperm.xlu0 %2979, %v2351
      %v2981 = vpop.permute.xlu0 %2980
      %2984 = vset.pattern.permute.xlu0 0
      %2985 = vperm.xlu0 %2984, %v2352
      %v2986 = vpop.permute.xlu0 %2985
      %2989 = vset.pattern.permute.xlu0 0
      %2990 = vperm.xlu0 %2989, %v2353
      %v2991 = vpop.permute.xlu0 %2990
      %2994 = vset.pattern.permute.xlu0 0
      %2995 = vperm.xlu0 %2994, %v2354
      %v2996 = vpop.permute.xlu0 %2995
      %2999 = vset.pattern.permute.xlu0 0
      %3000 = vperm.xlu0 %2999, %v2355
      %v3001 = vpop.permute.xlu0 %3000
      %3004 = vset.pattern.permute.xlu0 0
      %3005 = vperm.xlu0 %3004, %v2356
      %v3006 = vpop.permute.xlu0 %3005
      %3009 = vset.pattern.permute.xlu0 0
      %3010 = vperm.xlu0 %3009, %v2357
      %v3011 = vpop.permute.xlu0 %3010
      %3014 = vset.pattern.permute.xlu0 0
      %3015 = vperm.xlu0 %3014, %v2358
      %v3016 = vpop.permute.xlu0 %3015
      %3019 = vset.pattern.permute.xlu0 0
      %3020 = vperm.xlu0 %3019, %v2359
      %v3021 = vpop.permute.xlu0 %3020
      %3024 = vset.pattern.permute.xlu0 0
      %3025 = vperm.xlu0 %3024, %v2360
      %v3026 = vpop.permute.xlu0 %3025
      %3029 = vset.pattern.permute.xlu0 0
      %3030 = vperm.xlu0 %3029, %v2361
      %v3031 = vpop.permute.xlu0 %3030
      %3034 = vset.pattern.permute.xlu0 0
      %3035 = vperm.xlu0 %3034, %v2362
      %v3036 = vpop.permute.xlu0 %3035
      %3039 = vset.pattern.permute.xlu0 0
      %3040 = vperm.xlu0 %3039, %v2363
      %v3041 = vpop.permute.xlu0 %3040
      %3044 = vset.pattern.permute.xlu0 0
      %3045 = vperm.xlu0 %3044, %v2364
      %v3046 = vpop.permute.xlu0 %3045
      %3049 = vset.pattern.permute.xlu0 0
      %3050 = vperm.xlu0 %3049, %v2365
      %v3051 = vpop.permute.xlu0 %3050
      %3054 = vset.pattern.permute.xlu0 0
      %3055 = vperm.xlu0 %3054, %v2366
      %v3056 = vpop.permute.xlu0 %3055
      %3059 = vset.pattern.permute.xlu0 0
      %3060 = vperm.xlu0 %3059, %v2367
      %v3061 = vpop.permute.xlu0 %3060
      %3064 = vset.pattern.permute.xlu0 0
      %3065 = vperm.xlu0 %3064, %v2368
      %v3066 = vpop.permute.xlu0 %3065
      %3069 = vset.pattern.permute.xlu0 0
      %3070 = vperm.xlu0 %3069, %v2369
      %v3071 = vpop.permute.xlu0 %3070
      %v3073 = vsub.f32 %v2383, %v2391
      %v3074 = vsub.f32 %v2387, %v2391
      %v3075 = vsub.f32 %v2383, %v2396
      %v3076 = vsub.f32 %v2387, %v2396
      %v3077 = vsub.f32 %v2383, %v2401
      %v3078 = vsub.f32 %v2387, %v2401
      %v3079 = vsub.f32 %v2383, %v2406
      %v3080 = vsub.f32 %v2387, %v2406
      %v3081 = vsub.f32 %v2383, %v2411
      %v3082 = vsub.f32 %v2387, %v2411
      %v3083 = vsub.f32 %v2383, %v2416
      %v3084 = vsub.f32 %v2387, %v2416
      %v3085 = vsub.f32 %v2383, %v2421
      %v3086 = vsub.f32 %v2387, %v2421
      %v3087 = vsub.f32 %v2383, %v2426
      %v3088 = vsub.f32 %v2387, %v2426
      %v3089 = vsub.f32 %v2383, %v2431
      %v3090 = vsub.f32 %v2387, %v2431
      %v3091 = vsub.f32 %v2383, %v2436
      %v3092 = vsub.f32 %v2387, %v2436
      %v3093 = vsub.f32 %v2383, %v2441
      %v3094 = vsub.f32 %v2387, %v2441
      %v3095 = vsub.f32 %v2383, %v2446
      %v3096 = vsub.f32 %v2387, %v2446
      %v3097 = vsub.f32 %v2383, %v2451
      %v3098 = vsub.f32 %v2387, %v2451
      %v3099 = vsub.f32 %v2383, %v2456
      %v3100 = vsub.f32 %v2387, %v2456
      %v3101 = vsub.f32 %v2383, %v2461
      %v3102 = vsub.f32 %v2387, %v2461
      %v3103 = vsub.f32 %v2383, %v2466
      %v3104 = vsub.f32 %v2387, %v2466
      %v3105 = vsub.f32 %v2383, %v2471
      %v3106 = vsub.f32 %v2387, %v2471
      %v3107 = vsub.f32 %v2383, %v2476
      %v3108 = vsub.f32 %v2387, %v2476
      %v3109 = vsub.f32 %v2383, %v2481
      %v3110 = vsub.f32 %v2387, %v2481
      %v3111 = vsub.f32 %v2383, %v2486
      %v3112 = vsub.f32 %v2387, %v2486
      %v3113 = vsub.f32 %v2383, %v2491
      %v3114 = vsub.f32 %v2387, %v2491
      %v3115 = vsub.f32 %v2383, %v2496
      %v3116 = vsub.f32 %v2387, %v2496
      %v3117 = vsub.f32 %v2383, %v2501
      %v3118 = vsub.f32 %v2387, %v2501
      %v3119 = vsub.f32 %v2383, %v2506
      %v3120 = vsub.f32 %v2387, %v2506
      %v3121 = vsub.f32 %v2383, %v2511
      %v3122 = vsub.f32 %v2387, %v2511
      %v3123 = vsub.f32 %v2383, %v2516
      %v3124 = vsub.f32 %v2387, %v2516
      %v3125 = vsub.f32 %v2383, %v2521
      %v3126 = vsub.f32 %v2387, %v2521
      %v3127 = vsub.f32 %v2383, %v2526
      %v3128 = vsub.f32 %v2387, %v2526
      %v3129 = vsub.f32 %v2383, %v2531
      %v3130 = vsub.f32 %v2387, %v2531
      %v3131 = vsub.f32 %v2383, %v2536
      %v3132 = vsub.f32 %v2387, %v2536
      %v3133 = vsub.f32 %v2383, %v2541
      %v3134 = vsub.f32 %v2387, %v2541
      %v3135 = vsub.f32 %v2383, %v2546
      %v3136 = vsub.f32 %v2387, %v2546
      %v3137 = vsub.f32 %v2383, %v2551
      %v3138 = vsub.f32 %v2387, %v2551
      %v3139 = vsub.f32 %v2383, %v2556
      %v3140 = vsub.f32 %v2387, %v2556
      %v3141 = vsub.f32 %v2383, %v2561
      %v3142 = vsub.f32 %v2387, %v2561
      %v3143 = vsub.f32 %v2383, %v2566
      %v3144 = vsub.f32 %v2387, %v2566
      %v3145 = vsub.f32 %v2383, %v2571
      %v3146 = vsub.f32 %v2387, %v2571
      %v3147 = vsub.f32 %v2383, %v2576
      %v3148 = vsub.f32 %v2387, %v2576
      %v3149 = vsub.f32 %v2383, %v2581
      %v3150 = vsub.f32 %v2387, %v2581
      %v3151 = vsub.f32 %v2383, %v2586
      %v3152 = vsub.f32 %v2387, %v2586
      %v3153 = vsub.f32 %v2383, %v2591
      %v3154 = vsub.f32 %v2387, %v2591
      %v3155 = vsub.f32 %v2383, %v2596
      %v3156 = vsub.f32 %v2387, %v2596
      %v3157 = vsub.f32 %v2383, %v2601
      %v3158 = vsub.f32 %v2387, %v2601
      %v3159 = vsub.f32 %v2383, %v2606
      %v3160 = vsub.f32 %v2387, %v2606
      %v3161 = vsub.f32 %v2383, %v2611
      %v3162 = vsub.f32 %v2387, %v2611
      %v3163 = vsub.f32 %v2383, %v2616
      %v3164 = vsub.f32 %v2387, %v2616
      %v3165 = vsub.f32 %v2383, %v2621
      %v3166 = vsub.f32 %v2387, %v2621
      %v3167 = vsub.f32 %v2383, %v2626
      %v3168 = vsub.f32 %v2387, %v2626
      %v3169 = vsub.f32 %v2383, %v2631
      %v3170 = vsub.f32 %v2387, %v2631
      %v3171 = vsub.f32 %v2383, %v2636
      %v3172 = vsub.f32 %v2387, %v2636
      %v3173 = vsub.f32 %v2383, %v2641
      %v3174 = vsub.f32 %v2387, %v2641
      %v3175 = vsub.f32 %v2383, %v2646
      %v3176 = vsub.f32 %v2387, %v2646
      %v3177 = vsub.f32 %v2383, %v2651
      %v3178 = vsub.f32 %v2387, %v2651
      %v3179 = vsub.f32 %v2383, %v2656
      %v3180 = vsub.f32 %v2387, %v2656
      %v3181 = vsub.f32 %v2383, %v2661
      %v3182 = vsub.f32 %v2387, %v2661
      %v3183 = vsub.f32 %v2383, %v2666
      %v3184 = vsub.f32 %v2387, %v2666
      %v3185 = vsub.f32 %v2383, %v2671
      %v3186 = vsub.f32 %v2387, %v2671
      %v3187 = vsub.f32 %v2383, %v2676
      %v3188 = vsub.f32 %v2387, %v2676
      %v3189 = vsub.f32 %v2383, %v2681
      %v3190 = vsub.f32 %v2387, %v2681
      %v3191 = vsub.f32 %v2383, %v2686
      %v3192 = vsub.f32 %v2387, %v2686
      %v3193 = vsub.f32 %v2383, %v2691
      %v3194 = vsub.f32 %v2387, %v2691
      %v3195 = vsub.f32 %v2383, %v2696
      %v3196 = vsub.f32 %v2387, %v2696
      %v3197 = vsub.f32 %v2383, %v2701
      %v3198 = vsub.f32 %v2387, %v2701
      %v3199 = vsub.f32 %v2383, %v2706
      %v3200 = vsub.f32 %v2387, %v2706
      %v3201 = vsub.f32 %v2383, %v2711
      %v3202 = vsub.f32 %v2387, %v2711
      %v3203 = vsub.f32 %v2383, %v2716
      %v3204 = vsub.f32 %v2387, %v2716
      %v3205 = vsub.f32 %v2383, %v2721
      %v3206 = vsub.f32 %v2387, %v2721
      %v3207 = vsub.f32 %v2383, %v2726
      %v3208 = vsub.f32 %v2387, %v2726
      %v3209 = vsub.f32 %v2383, %v2731
      %v3210 = vsub.f32 %v2387, %v2731
      %v3211 = vsub.f32 %v2383, %v2736
      %v3212 = vsub.f32 %v2387, %v2736
      %v3213 = vsub.f32 %v2383, %v2741
      %v3214 = vsub.f32 %v2387, %v2741
      %v3215 = vsub.f32 %v2383, %v2746
      %v3216 = vsub.f32 %v2387, %v2746
      %v3217 = vsub.f32 %v2383, %v2751
      %v3218 = vsub.f32 %v2387, %v2751
      %v3219 = vsub.f32 %v2383, %v2756
      %v3220 = vsub.f32 %v2387, %v2756
      %v3221 = vsub.f32 %v2383, %v2761
      %v3222 = vsub.f32 %v2387, %v2761
      %v3223 = vsub.f32 %v2383, %v2766
      %v3224 = vsub.f32 %v2387, %v2766
      %v3225 = vsub.f32 %v2383, %v2771
      %v3226 = vsub.f32 %v2387, %v2771
      %v3227 = vsub.f32 %v2383, %v2776
      %v3228 = vsub.f32 %v2387, %v2776
      %v3229 = vsub.f32 %v2383, %v2781
      %v3230 = vsub.f32 %v2387, %v2781
      %v3231 = vsub.f32 %v2383, %v2786
      %v3232 = vsub.f32 %v2387, %v2786
      %v3233 = vsub.f32 %v2383, %v2791
      %v3234 = vsub.f32 %v2387, %v2791
      %v3235 = vsub.f32 %v2383, %v2796
      %v3236 = vsub.f32 %v2387, %v2796
      %v3237 = vsub.f32 %v2383, %v2801
      %v3238 = vsub.f32 %v2387, %v2801
      %v3239 = vsub.f32 %v2383, %v2806
      %v3240 = vsub.f32 %v2387, %v2806
      %v3241 = vsub.f32 %v2383, %v2811
      %v3242 = vsub.f32 %v2387, %v2811
      %v3243 = vsub.f32 %v2383, %v2816
      %v3244 = vsub.f32 %v2387, %v2816
      %v3245 = vsub.f32 %v2383, %v2821
      %v3246 = vsub.f32 %v2387, %v2821
      %v3247 = vsub.f32 %v2383, %v2826
      %v3248 = vsub.f32 %v2387, %v2826
      %v3249 = vsub.f32 %v2383, %v2831
      %v3250 = vsub.f32 %v2387, %v2831
      %v3251 = vsub.f32 %v2383, %v2836
      %v3252 = vsub.f32 %v2387, %v2836
      %v3253 = vsub.f32 %v2383, %v2841
      %v3254 = vsub.f32 %v2387, %v2841
      %v3255 = vsub.f32 %v2383, %v2846
      %v3256 = vsub.f32 %v2387, %v2846
      %v3257 = vsub.f32 %v2383, %v2851
      %v3258 = vsub.f32 %v2387, %v2851
      %v3259 = vsub.f32 %v2383, %v2856
      %v3260 = vsub.f32 %v2387, %v2856
      %v3261 = vsub.f32 %v2383, %v2861
      %v3262 = vsub.f32 %v2387, %v2861
      %v3263 = vsub.f32 %v2383, %v2866
      %v3264 = vsub.f32 %v2387, %v2866
      %v3265 = vsub.f32 %v2383, %v2871
      %v3266 = vsub.f32 %v2387, %v2871
      %v3267 = vsub.f32 %v2383, %v2876
      %v3268 = vsub.f32 %v2387, %v2876
      %v3269 = vsub.f32 %v2383, %v2881
      %v3270 = vsub.f32 %v2387, %v2881
      %v3271 = vsub.f32 %v2383, %v2886
      %v3272 = vsub.f32 %v2387, %v2886
      %v3273 = vsub.f32 %v2383, %v2891
      %v3274 = vsub.f32 %v2387, %v2891
      %v3275 = vsub.f32 %v2383, %v2896
      %v3276 = vsub.f32 %v2387, %v2896
      %v3277 = vsub.f32 %v2383, %v2901
      %v3278 = vsub.f32 %v2387, %v2901
      %v3279 = vsub.f32 %v2383, %v2906
      %v3280 = vsub.f32 %v2387, %v2906
      %v3281 = vsub.f32 %v2383, %v2911
      %v3282 = vsub.f32 %v2387, %v2911
      %v3283 = vsub.f32 %v2383, %v2916
      %v3284 = vsub.f32 %v2387, %v2916
      %v3285 = vsub.f32 %v2383, %v2921
      %v3286 = vsub.f32 %v2387, %v2921
      %v3287 = vsub.f32 %v2383, %v2926
      %v3288 = vsub.f32 %v2387, %v2926
      %v3289 = vsub.f32 %v2383, %v2931
      %v3290 = vsub.f32 %v2387, %v2931
      %v3291 = vsub.f32 %v2383, %v2936
      %v3292 = vsub.f32 %v2387, %v2936
      %v3293 = vsub.f32 %v2383, %v2941
      %v3294 = vsub.f32 %v2387, %v2941
      %v3295 = vsub.f32 %v2383, %v2946
      %v3296 = vsub.f32 %v2387, %v2946
      %v3297 = vsub.f32 %v2383, %v2951
      %v3298 = vsub.f32 %v2387, %v2951
      %v3299 = vsub.f32 %v2383, %v2956
      %v3300 = vsub.f32 %v2387, %v2956
      %v3301 = vsub.f32 %v2383, %v2961
      %v3302 = vsub.f32 %v2387, %v2961
      %v3303 = vsub.f32 %v2383, %v2966
      %v3304 = vsub.f32 %v2387, %v2966
      %v3305 = vsub.f32 %v2383, %v2971
      %v3306 = vsub.f32 %v2387, %v2971
      %v3307 = vsub.f32 %v2383, %v2976
      %v3308 = vsub.f32 %v2387, %v2976
      %v3309 = vsub.f32 %v2383, %v2981
      %v3310 = vsub.f32 %v2387, %v2981
      %v3311 = vsub.f32 %v2383, %v2986
      %v3312 = vsub.f32 %v2387, %v2986
      %v3313 = vsub.f32 %v2383, %v2991
      %v3314 = vsub.f32 %v2387, %v2991
      %v3315 = vsub.f32 %v2383, %v2996
      %v3316 = vsub.f32 %v2387, %v2996
      %v3317 = vsub.f32 %v2383, %v3001
      %v3318 = vsub.f32 %v2387, %v3001
      %v3319 = vsub.f32 %v2383, %v3006
      %v3320 = vsub.f32 %v2387, %v3006
      %v3321 = vsub.f32 %v2383, %v3011
      %v3322 = vsub.f32 %v2387, %v3011
      %v3323 = vsub.f32 %v2383, %v3016
      %v3324 = vsub.f32 %v2387, %v3016
      %v3325 = vsub.f32 %v2383, %v3021
      %v3326 = vsub.f32 %v2387, %v3021
      %v3327 = vsub.f32 %v2383, %v3026
      %v3328 = vsub.f32 %v2387, %v3026
      %v3329 = vsub.f32 %v2383, %v3031
      %v3330 = vsub.f32 %v2387, %v3031
      %v3331 = vsub.f32 %v2383, %v3036
      %v3332 = vsub.f32 %v2387, %v3036
      %v3333 = vsub.f32 %v2383, %v3041
      %v3334 = vsub.f32 %v2387, %v3041
      %v3335 = vsub.f32 %v2383, %v3046
      %v3336 = vsub.f32 %v2387, %v3046
      %v3337 = vsub.f32 %v2383, %v3051
      %v3338 = vsub.f32 %v2387, %v3051
      %v3339 = vsub.f32 %v2383, %v3056
      %v3340 = vsub.f32 %v2387, %v3056
      %v3341 = vsub.f32 %v2383, %v3061
      %v3342 = vsub.f32 %v2387, %v3061
      %v3343 = vsub.f32 %v2383, %v3066
      %v3344 = vsub.f32 %v2387, %v3066
      %v3345 = vsub.f32 %v2383, %v3071
      %v3346 = vsub.f32 %v2387, %v3071
      %v3347 = vand.u32 2147483647, %v3073
      %v3348 = vand.u32 2147483647, %v3074
      %v3349 = vand.u32 2147483647, %v3075
      %v3350 = vand.u32 2147483647, %v3076
      %v3351 = vand.u32 2147483647, %v3077
      %v3352 = vand.u32 2147483647, %v3078
      %v3353 = vand.u32 2147483647, %v3079
      %v3354 = vand.u32 2147483647, %v3080
      %v3355 = vand.u32 2147483647, %v3081
      %v3356 = vand.u32 2147483647, %v3082
      %v3357 = vand.u32 2147483647, %v3083
      %v3358 = vand.u32 2147483647, %v3084
      %v3359 = vand.u32 2147483647, %v3085
      %v3360 = vand.u32 2147483647, %v3086
      %v3361 = vand.u32 2147483647, %v3087
      %v3362 = vand.u32 2147483647, %v3088
      %v3363 = vand.u32 2147483647, %v3089
      %v3364 = vand.u32 2147483647, %v3090
      %v3365 = vand.u32 2147483647, %v3091
      %v3366 = vand.u32 2147483647, %v3092
      %v3367 = vand.u32 2147483647, %v3093
      %v3368 = vand.u32 2147483647, %v3094
      %v3369 = vand.u32 2147483647, %v3095
      %v3370 = vand.u32 2147483647, %v3096
      %v3371 = vand.u32 2147483647, %v3097
      %v3372 = vand.u32 2147483647, %v3098
      %v3373 = vand.u32 2147483647, %v3099
      %v3374 = vand.u32 2147483647, %v3100
      %v3375 = vand.u32 2147483647, %v3101
      %v3376 = vand.u32 2147483647, %v3102
      %v3377 = vand.u32 2147483647, %v3103
      %v3378 = vand.u32 2147483647, %v3104
      %v3379 = vand.u32 2147483647, %v3105
      %v3380 = vand.u32 2147483647, %v3106
      %v3381 = vand.u32 2147483647, %v3107
      %v3382 = vand.u32 2147483647, %v3108
      %v3383 = vand.u32 2147483647, %v3109
      %v3384 = vand.u32 2147483647, %v3110
      %v3385 = vand.u32 2147483647, %v3111
      %v3386 = vand.u32 2147483647, %v3112
      %v3387 = vand.u32 2147483647, %v3113
      %v3388 = vand.u32 2147483647, %v3114
      %v3389 = vand.u32 2147483647, %v3115
      %v3390 = vand.u32 2147483647, %v3116
      %v3391 = vand.u32 2147483647, %v3117
      %v3392 = vand.u32 2147483647, %v3118
      %v3393 = vand.u32 2147483647, %v3119
      %v3394 = vand.u32 2147483647, %v3120
      %v3395 = vand.u32 2147483647, %v3121
      %v3396 = vand.u32 2147483647, %v3122
      %v3397 = vand.u32 2147483647, %v3123
      %v3398 = vand.u32 2147483647, %v3124
      %v3399 = vand.u32 2147483647, %v3125
      %v3400 = vand.u32 2147483647, %v3126
      %v3401 = vand.u32 2147483647, %v3127
      %v3402 = vand.u32 2147483647, %v3128
      %v3403 = vand.u32 2147483647, %v3129
      %v3404 = vand.u32 2147483647, %v3130
      %v3405 = vand.u32 2147483647, %v3131
      %v3406 = vand.u32 2147483647, %v3132
      %v3407 = vand.u32 2147483647, %v3133
      %v3408 = vand.u32 2147483647, %v3134
      %v3409 = vand.u32 2147483647, %v3135
      %v3410 = vand.u32 2147483647, %v3136
      %v3411 = vand.u32 2147483647, %v3137
      %v3412 = vand.u32 2147483647, %v3138
      %v3413 = vand.u32 2147483647, %v3139
      %v3414 = vand.u32 2147483647, %v3140
      %v3415 = vand.u32 2147483647, %v3141
      %v3416 = vand.u32 2147483647, %v3142
      %v3417 = vand.u32 2147483647, %v3143
      %v3418 = vand.u32 2147483647, %v3144
      %v3419 = vand.u32 2147483647, %v3145
      %v3420 = vand.u32 2147483647, %v3146
      %v3421 = vand.u32 2147483647, %v3147
      %v3422 = vand.u32 2147483647, %v3148
      %v3423 = vand.u32 2147483647, %v3149
      %v3424 = vand.u32 2147483647, %v3150
      %v3425 = vand.u32 2147483647, %v3151
      %v3426 = vand.u32 2147483647, %v3152
      %v3427 = vand.u32 2147483647, %v3153
      %v3428 = vand.u32 2147483647, %v3154
      %v3429 = vand.u32 2147483647, %v3155
      %v3430 = vand.u32 2147483647, %v3156
      %v3431 = vand.u32 2147483647, %v3157
      %v3432 = vand.u32 2147483647, %v3158
      %v3433 = vand.u32 2147483647, %v3159
      %v3434 = vand.u32 2147483647, %v3160
      %v3435 = vand.u32 2147483647, %v3161
      %v3436 = vand.u32 2147483647, %v3162
      %v3437 = vand.u32 2147483647, %v3163
      %v3438 = vand.u32 2147483647, %v3164
      %v3439 = vand.u32 2147483647, %v3165
      %v3440 = vand.u32 2147483647, %v3166
      %v3441 = vand.u32 2147483647, %v3167
      %v3442 = vand.u32 2147483647, %v3168
      %v3443 = vand.u32 2147483647, %v3169
      %v3444 = vand.u32 2147483647, %v3170
      %v3445 = vand.u32 2147483647, %v3171
      %v3446 = vand.u32 2147483647, %v3172
      %v3447 = vand.u32 2147483647, %v3173
      %v3448 = vand.u32 2147483647, %v3174
      %v3449 = vand.u32 2147483647, %v3175
      %v3450 = vand.u32 2147483647, %v3176
      %v3451 = vand.u32 2147483647, %v3177
      %v3452 = vand.u32 2147483647, %v3178
      %v3453 = vand.u32 2147483647, %v3179
      %v3454 = vand.u32 2147483647, %v3180
      %v3455 = vand.u32 2147483647, %v3181
      %v3456 = vand.u32 2147483647, %v3182
      %v3457 = vand.u32 2147483647, %v3183
      %v3458 = vand.u32 2147483647, %v3184
      %v3459 = vand.u32 2147483647, %v3185
      %v3460 = vand.u32 2147483647, %v3186
      %v3461 = vand.u32 2147483647, %v3187
      %v3462 = vand.u32 2147483647, %v3188
      %v3463 = vand.u32 2147483647, %v3189
      %v3464 = vand.u32 2147483647, %v3190
      %v3465 = vand.u32 2147483647, %v3191
      %v3466 = vand.u32 2147483647, %v3192
      %v3467 = vand.u32 2147483647, %v3193
      %v3468 = vand.u32 2147483647, %v3194
      %v3469 = vand.u32 2147483647, %v3195
      %v3470 = vand.u32 2147483647, %v3196
      %v3471 = vand.u32 2147483647, %v3197
      %v3472 = vand.u32 2147483647, %v3198
      %v3473 = vand.u32 2147483647, %v3199
      %v3474 = vand.u32 2147483647, %v3200
      %v3475 = vand.u32 2147483647, %v3201
      %v3476 = vand.u32 2147483647, %v3202
      %v3477 = vand.u32 2147483647, %v3203
      %v3478 = vand.u32 2147483647, %v3204
      %v3479 = vand.u32 2147483647, %v3205
      %v3480 = vand.u32 2147483647, %v3206
      %v3481 = vand.u32 2147483647, %v3207
      %v3482 = vand.u32 2147483647, %v3208
      %v3483 = vand.u32 2147483647, %v3209
      %v3484 = vand.u32 2147483647, %v3210
      %v3485 = vand.u32 2147483647, %v3211
      %v3486 = vand.u32 2147483647, %v3212
      %v3487 = vand.u32 2147483647, %v3213
      %v3488 = vand.u32 2147483647, %v3214
      %v3489 = vand.u32 2147483647, %v3215
      %v3490 = vand.u32 2147483647, %v3216
      %v3491 = vand.u32 2147483647, %v3217
      %v3492 = vand.u32 2147483647, %v3218
      %v3493 = vand.u32 2147483647, %v3219
      %v3494 = vand.u32 2147483647, %v3220
      %v3495 = vand.u32 2147483647, %v3221
      %v3496 = vand.u32 2147483647, %v3222
      %v3497 = vand.u32 2147483647, %v3223
      %v3498 = vand.u32 2147483647, %v3224
      %v3499 = vand.u32 2147483647, %v3225
      %v3500 = vand.u32 2147483647, %v3226
      %v3501 = vand.u32 2147483647, %v3227
      %v3502 = vand.u32 2147483647, %v3228
      %v3503 = vand.u32 2147483647, %v3229
      %v3504 = vand.u32 2147483647, %v3230
      %v3505 = vand.u32 2147483647, %v3231
      %v3506 = vand.u32 2147483647, %v3232
      %v3507 = vand.u32 2147483647, %v3233
      %v3508 = vand.u32 2147483647, %v3234
      %v3509 = vand.u32 2147483647, %v3235
      %v3510 = vand.u32 2147483647, %v3236
      %v3511 = vand.u32 2147483647, %v3237
      %v3512 = vand.u32 2147483647, %v3238
      %v3513 = vand.u32 2147483647, %v3239
      %v3514 = vand.u32 2147483647, %v3240
      %v3515 = vand.u32 2147483647, %v3241
      %v3516 = vand.u32 2147483647, %v3242
      %v3517 = vand.u32 2147483647, %v3243
      %v3518 = vand.u32 2147483647, %v3244
      %v3519 = vand.u32 2147483647, %v3245
      %v3520 = vand.u32 2147483647, %v3246
      %v3521 = vand.u32 2147483647, %v3247
      %v3522 = vand.u32 2147483647, %v3248
      %v3523 = vand.u32 2147483647, %v3249
      %v3524 = vand.u32 2147483647, %v3250
      %v3525 = vand.u32 2147483647, %v3251
      %v3526 = vand.u32 2147483647, %v3252
      %v3527 = vand.u32 2147483647, %v3253
      %v3528 = vand.u32 2147483647, %v3254
      %v3529 = vand.u32 2147483647, %v3255
      %v3530 = vand.u32 2147483647, %v3256
      %v3531 = vand.u32 2147483647, %v3257
      %v3532 = vand.u32 2147483647, %v3258
      %v3533 = vand.u32 2147483647, %v3259
      %v3534 = vand.u32 2147483647, %v3260
      %v3535 = vand.u32 2147483647, %v3261
      %v3536 = vand.u32 2147483647, %v3262
      %v3537 = vand.u32 2147483647, %v3263
      %v3538 = vand.u32 2147483647, %v3264
      %v3539 = vand.u32 2147483647, %v3265
      %v3540 = vand.u32 2147483647, %v3266
      %v3541 = vand.u32 2147483647, %v3267
      %v3542 = vand.u32 2147483647, %v3268
      %v3543 = vand.u32 2147483647, %v3269
      %v3544 = vand.u32 2147483647, %v3270
      %v3545 = vand.u32 2147483647, %v3271
      %v3546 = vand.u32 2147483647, %v3272
      %v3547 = vand.u32 2147483647, %v3273
      %v3548 = vand.u32 2147483647, %v3274
      %v3549 = vand.u32 2147483647, %v3275
      %v3550 = vand.u32 2147483647, %v3276
      %v3551 = vand.u32 2147483647, %v3277
      %v3552 = vand.u32 2147483647, %v3278
      %v3553 = vand.u32 2147483647, %v3279
      %v3554 = vand.u32 2147483647, %v3280
      %v3555 = vand.u32 2147483647, %v3281
      %v3556 = vand.u32 2147483647, %v3282
      %v3557 = vand.u32 2147483647, %v3283
      %v3558 = vand.u32 2147483647, %v3284
      %v3559 = vand.u32 2147483647, %v3285
      %v3560 = vand.u32 2147483647, %v3286
      %v3561 = vand.u32 2147483647, %v3287
      %v3562 = vand.u32 2147483647, %v3288
      %v3563 = vand.u32 2147483647, %v3289
      %v3564 = vand.u32 2147483647, %v3290
      %v3565 = vand.u32 2147483647, %v3291
      %v3566 = vand.u32 2147483647, %v3292
      %v3567 = vand.u32 2147483647, %v3293
      %v3568 = vand.u32 2147483647, %v3294
      %v3569 = vand.u32 2147483647, %v3295
      %v3570 = vand.u32 2147483647, %v3296
      %v3571 = vand.u32 2147483647, %v3297
      %v3572 = vand.u32 2147483647, %v3298
      %v3573 = vand.u32 2147483647, %v3299
      %v3574 = vand.u32 2147483647, %v3300
      %v3575 = vand.u32 2147483647, %v3301
      %v3576 = vand.u32 2147483647, %v3302
      %v3577 = vand.u32 2147483647, %v3303
      %v3578 = vand.u32 2147483647, %v3304
      %v3579 = vand.u32 2147483647, %v3305
      %v3580 = vand.u32 2147483647, %v3306
      %v3581 = vand.u32 2147483647, %v3307
      %v3582 = vand.u32 2147483647, %v3308
      %v3583 = vand.u32 2147483647, %v3309
      %v3584 = vand.u32 2147483647, %v3310
      %v3585 = vand.u32 2147483647, %v3311
      %v3586 = vand.u32 2147483647, %v3312
      %v3587 = vand.u32 2147483647, %v3313
      %v3588 = vand.u32 2147483647, %v3314
      %v3589 = vand.u32 2147483647, %v3315
      %v3590 = vand.u32 2147483647, %v3316
      %v3591 = vand.u32 2147483647, %v3317
      %v3592 = vand.u32 2147483647, %v3318
      %v3593 = vand.u32 2147483647, %v3319
      %v3594 = vand.u32 2147483647, %v3320
      %v3595 = vand.u32 2147483647, %v3321
      %v3596 = vand.u32 2147483647, %v3322
      %v3597 = vand.u32 2147483647, %v3323
      %v3598 = vand.u32 2147483647, %v3324
      %v3599 = vand.u32 2147483647, %v3325
      %v3600 = vand.u32 2147483647, %v3326
      %v3601 = vand.u32 2147483647, %v3327
      %v3602 = vand.u32 2147483647, %v3328
      %v3603 = vand.u32 2147483647, %v3329
      %v3604 = vand.u32 2147483647, %v3330
      %v3605 = vand.u32 2147483647, %v3331
      %v3606 = vand.u32 2147483647, %v3332
      %v3607 = vand.u32 2147483647, %v3333
      %v3608 = vand.u32 2147483647, %v3334
      %v3609 = vand.u32 2147483647, %v3335
      %v3610 = vand.u32 2147483647, %v3336
      %v3611 = vand.u32 2147483647, %v3337
      %v3612 = vand.u32 2147483647, %v3338
      %v3613 = vand.u32 2147483647, %v3339
      %v3614 = vand.u32 2147483647, %v3340
      %v3615 = vand.u32 2147483647, %v3341
      %v3616 = vand.u32 2147483647, %v3342
      %v3617 = vand.u32 2147483647, %v3343
      %v3618 = vand.u32 2147483647, %v3344
      %v3619 = vand.u32 2147483647, %v3345
      %v3620 = vand.u32 2147483647, %v3346
      %v3621 = vsub.f32 1.0, %v3347
      %v3622 = vsub.f32 1.0, %v3348
      %v3623 = vsub.f32 1.0, %v3349
      %v3624 = vsub.f32 1.0, %v3350
      %v3625 = vsub.f32 1.0, %v3351
      %v3626 = vsub.f32 1.0, %v3352
      %v3627 = vsub.f32 1.0, %v3353
      %v3628 = vsub.f32 1.0, %v3354
      %v3629 = vsub.f32 1.0, %v3355
      %v3630 = vsub.f32 1.0, %v3356
      %v3631 = vsub.f32 1.0, %v3357
      %v3632 = vsub.f32 1.0, %v3358
      %v3633 = vsub.f32 1.0, %v3359
      %v3634 = vsub.f32 1.0, %v3360
      %v3635 = vsub.f32 1.0, %v3361
      %v3636 = vsub.f32 1.0, %v3362
      %v3637 = vsub.f32 1.0, %v3363
      %v3638 = vsub.f32 1.0, %v3364
      %v3639 = vsub.f32 1.0, %v3365
      %v3640 = vsub.f32 1.0, %v3366
      %v3641 = vsub.f32 1.0, %v3367
      %v3642 = vsub.f32 1.0, %v3368
      %v3643 = vsub.f32 1.0, %v3369
      %v3644 = vsub.f32 1.0, %v3370
      %v3645 = vsub.f32 1.0, %v3371
      %v3646 = vsub.f32 1.0, %v3372
      %v3647 = vsub.f32 1.0, %v3373
      %v3648 = vsub.f32 1.0, %v3374
      %v3649 = vsub.f32 1.0, %v3375
      %v3650 = vsub.f32 1.0, %v3376
      %v3651 = vsub.f32 1.0, %v3377
      %v3652 = vsub.f32 1.0, %v3378
      %v3653 = vsub.f32 1.0, %v3379
      %v3654 = vsub.f32 1.0, %v3380
      %v3655 = vsub.f32 1.0, %v3381
      %v3656 = vsub.f32 1.0, %v3382
      %v3657 = vsub.f32 1.0, %v3383
      %v3658 = vsub.f32 1.0, %v3384
      %v3659 = vsub.f32 1.0, %v3385
      %v3660 = vsub.f32 1.0, %v3386
      %v3661 = vsub.f32 1.0, %v3387
      %v3662 = vsub.f32 1.0, %v3388
      %v3663 = vsub.f32 1.0, %v3389
      %v3664 = vsub.f32 1.0, %v3390
      %v3665 = vsub.f32 1.0, %v3391
      %v3666 = vsub.f32 1.0, %v3392
      %v3667 = vsub.f32 1.0, %v3393
      %v3668 = vsub.f32 1.0, %v3394
      %v3669 = vsub.f32 1.0, %v3395
      %v3670 = vsub.f32 1.0, %v3396
      %v3671 = vsub.f32 1.0, %v3397
      %v3672 = vsub.f32 1.0, %v3398
      %v3673 = vsub.f32 1.0, %v3399
      %v3674 = vsub.f32 1.0, %v3400
      %v3675 = vsub.f32 1.0, %v3401
      %v3676 = vsub.f32 1.0, %v3402
      %v3677 = vsub.f32 1.0, %v3403
      %v3678 = vsub.f32 1.0, %v3404
      %v3679 = vsub.f32 1.0, %v3405
      %v3680 = vsub.f32 1.0, %v3406
      %v3681 = vsub.f32 1.0, %v3407
      %v3682 = vsub.f32 1.0, %v3408
      %v3683 = vsub.f32 1.0, %v3409
      %v3684 = vsub.f32 1.0, %v3410
      %v3685 = vsub.f32 1.0, %v3411
      %v3686 = vsub.f32 1.0, %v3412
      %v3687 = vsub.f32 1.0, %v3413
      %v3688 = vsub.f32 1.0, %v3414
      %v3689 = vsub.f32 1.0, %v3415
      %v3690 = vsub.f32 1.0, %v3416
      %v3691 = vsub.f32 1.0, %v3417
      %v3692 = vsub.f32 1.0, %v3418
      %v3693 = vsub.f32 1.0, %v3419
      %v3694 = vsub.f32 1.0, %v3420
      %v3695 = vsub.f32 1.0, %v3421
      %v3696 = vsub.f32 1.0, %v3422
      %v3697 = vsub.f32 1.0, %v3423
      %v3698 = vsub.f32 1.0, %v3424
      %v3699 = vsub.f32 1.0, %v3425
      %v3700 = vsub.f32 1.0, %v3426
      %v3701 = vsub.f32 1.0, %v3427
      %v3702 = vsub.f32 1.0, %v3428
      %v3703 = vsub.f32 1.0, %v3429
      %v3704 = vsub.f32 1.0, %v3430
      %v3705 = vsub.f32 1.0, %v3431
      %v3706 = vsub.f32 1.0, %v3432
      %v3707 = vsub.f32 1.0, %v3433
      %v3708 = vsub.f32 1.0, %v3434
      %v3709 = vsub.f32 1.0, %v3435
      %v3710 = vsub.f32 1.0, %v3436
      %v3711 = vsub.f32 1.0, %v3437
      %v3712 = vsub.f32 1.0, %v3438
      %v3713 = vsub.f32 1.0, %v3439
      %v3714 = vsub.f32 1.0, %v3440
      %v3715 = vsub.f32 1.0, %v3441
      %v3716 = vsub.f32 1.0, %v3442
      %v3717 = vsub.f32 1.0, %v3443
      %v3718 = vsub.f32 1.0, %v3444
      %v3719 = vsub.f32 1.0, %v3445
      %v3720 = vsub.f32 1.0, %v3446
      %v3721 = vsub.f32 1.0, %v3447
      %v3722 = vsub.f32 1.0, %v3448
      %v3723 = vsub.f32 1.0, %v3449
      %v3724 = vsub.f32 1.0, %v3450
      %v3725 = vsub.f32 1.0, %v3451
      %v3726 = vsub.f32 1.0, %v3452
      %v3727 = vsub.f32 1.0, %v3453
      %v3728 = vsub.f32 1.0, %v3454
      %v3729 = vsub.f32 1.0, %v3455
      %v3730 = vsub.f32 1.0, %v3456
      %v3731 = vsub.f32 1.0, %v3457
      %v3732 = vsub.f32 1.0, %v3458
      %v3733 = vsub.f32 1.0, %v3459
      %v3734 = vsub.f32 1.0, %v3460
      %v3735 = vsub.f32 1.0, %v3461
      %v3736 = vsub.f32 1.0, %v3462
      %v3737 = vsub.f32 1.0, %v3463
      %v3738 = vsub.f32 1.0, %v3464
      %v3739 = vsub.f32 1.0, %v3465
      %v3740 = vsub.f32 1.0, %v3466
      %v3741 = vsub.f32 1.0, %v3467
      %v3742 = vsub.f32 1.0, %v3468
      %v3743 = vsub.f32 1.0, %v3469
      %v3744 = vsub.f32 1.0, %v3470
      %v3745 = vsub.f32 1.0, %v3471
      %v3746 = vsub.f32 1.0, %v3472
      %v3747 = vsub.f32 1.0, %v3473
      %v3748 = vsub.f32 1.0, %v3474
      %v3749 = vsub.f32 1.0, %v3475
      %v3750 = vsub.f32 1.0, %v3476
      %v3751 = vsub.f32 1.0, %v3477
      %v3752 = vsub.f32 1.0, %v3478
      %v3753 = vsub.f32 1.0, %v3479
      %v3754 = vsub.f32 1.0, %v3480
      %v3755 = vsub.f32 1.0, %v3481
      %v3756 = vsub.f32 1.0, %v3482
      %v3757 = vsub.f32 1.0, %v3483
      %v3758 = vsub.f32 1.0, %v3484
      %v3759 = vsub.f32 1.0, %v3485
      %v3760 = vsub.f32 1.0, %v3486
      %v3761 = vsub.f32 1.0, %v3487
      %v3762 = vsub.f32 1.0, %v3488
      %v3763 = vsub.f32 1.0, %v3489
      %v3764 = vsub.f32 1.0, %v3490
      %v3765 = vsub.f32 1.0, %v3491
      %v3766 = vsub.f32 1.0, %v3492
      %v3767 = vsub.f32 1.0, %v3493
      %v3768 = vsub.f32 1.0, %v3494
      %v3769 = vsub.f32 1.0, %v3495
      %v3770 = vsub.f32 1.0, %v3496
      %v3771 = vsub.f32 1.0, %v3497
      %v3772 = vsub.f32 1.0, %v3498
      %v3773 = vsub.f32 1.0, %v3499
      %v3774 = vsub.f32 1.0, %v3500
      %v3775 = vsub.f32 1.0, %v3501
      %v3776 = vsub.f32 1.0, %v3502
      %v3777 = vsub.f32 1.0, %v3503
      %v3778 = vsub.f32 1.0, %v3504
      %v3779 = vsub.f32 1.0, %v3505
      %v3780 = vsub.f32 1.0, %v3506
      %v3781 = vsub.f32 1.0, %v3507
      %v3782 = vsub.f32 1.0, %v3508
      %v3783 = vsub.f32 1.0, %v3509
      %v3784 = vsub.f32 1.0, %v3510
      %v3785 = vsub.f32 1.0, %v3511
      %v3786 = vsub.f32 1.0, %v3512
      %v3787 = vsub.f32 1.0, %v3513
      %v3788 = vsub.f32 1.0, %v3514
      %v3789 = vsub.f32 1.0, %v3515
      %v3790 = vsub.f32 1.0, %v3516
      %v3791 = vsub.f32 1.0, %v3517
      %v3792 = vsub.f32 1.0, %v3518
      %v3793 = vsub.f32 1.0, %v3519
      %v3794 = vsub.f32 1.0, %v3520
      %v3795 = vsub.f32 1.0, %v3521
      %v3796 = vsub.f32 1.0, %v3522
      %v3797 = vsub.f32 1.0, %v3523
      %v3798 = vsub.f32 1.0, %v3524
      %v3799 = vsub.f32 1.0, %v3525
      %v3800 = vsub.f32 1.0, %v3526
      %v3801 = vsub.f32 1.0, %v3527
      %v3802 = vsub.f32 1.0, %v3528
      %v3803 = vsub.f32 1.0, %v3529
      %v3804 = vsub.f32 1.0, %v3530
      %v3805 = vsub.f32 1.0, %v3531
      %v3806 = vsub.f32 1.0, %v3532
      %v3807 = vsub.f32 1.0, %v3533
      %v3808 = vsub.f32 1.0, %v3534
      %v3809 = vsub.f32 1.0, %v3535
      %v3810 = vsub.f32 1.0, %v3536
      %v3811 = vsub.f32 1.0, %v3537
      %v3812 = vsub.f32 1.0, %v3538
      %v3813 = vsub.f32 1.0, %v3539
      %v3814 = vsub.f32 1.0, %v3540
      %v3815 = vsub.f32 1.0, %v3541
      %v3816 = vsub.f32 1.0, %v3542
      %v3817 = vsub.f32 1.0, %v3543
      %v3818 = vsub.f32 1.0, %v3544
      %v3819 = vsub.f32 1.0, %v3545
      %v3820 = vsub.f32 1.0, %v3546
      %v3821 = vsub.f32 1.0, %v3547
      %v3822 = vsub.f32 1.0, %v3548
      %v3823 = vsub.f32 1.0, %v3549
      %v3824 = vsub.f32 1.0, %v3550
      %v3825 = vsub.f32 1.0, %v3551
      %v3826 = vsub.f32 1.0, %v3552
      %v3827 = vsub.f32 1.0, %v3553
      %v3828 = vsub.f32 1.0, %v3554
      %v3829 = vsub.f32 1.0, %v3555
      %v3830 = vsub.f32 1.0, %v3556
      %v3831 = vsub.f32 1.0, %v3557
      %v3832 = vsub.f32 1.0, %v3558
      %v3833 = vsub.f32 1.0, %v3559
      %v3834 = vsub.f32 1.0, %v3560
      %v3835 = vsub.f32 1.0, %v3561
      %v3836 = vsub.f32 1.0, %v3562
      %v3837 = vsub.f32 1.0, %v3563
      %v3838 = vsub.f32 1.0, %v3564
      %v3839 = vsub.f32 1.0, %v3565
      %v3840 = vsub.f32 1.0, %v3566
      %v3841 = vsub.f32 1.0, %v3567
      %v3842 = vsub.f32 1.0, %v3568
      %v3843 = vsub.f32 1.0, %v3569
      %v3844 = vsub.f32 1.0, %v3570
      %v3845 = vsub.f32 1.0, %v3571
      %v3846 = vsub.f32 1.0, %v3572
      %v3847 = vsub.f32 1.0, %v3573
      %v3848 = vsub.f32 1.0, %v3574
      %v3849 = vsub.f32 1.0, %v3575
      %v3850 = vsub.f32 1.0, %v3576
      %v3851 = vsub.f32 1.0, %v3577
      %v3852 = vsub.f32 1.0, %v3578
      %v3853 = vsub.f32 1.0, %v3579
      %v3854 = vsub.f32 1.0, %v3580
      %v3855 = vsub.f32 1.0, %v3581
      %v3856 = vsub.f32 1.0, %v3582
      %v3857 = vsub.f32 1.0, %v3583
      %v3858 = vsub.f32 1.0, %v3584
      %v3859 = vsub.f32 1.0, %v3585
      %v3860 = vsub.f32 1.0, %v3586
      %v3861 = vsub.f32 1.0, %v3587
      %v3862 = vsub.f32 1.0, %v3588
      %v3863 = vsub.f32 1.0, %v3589
      %v3864 = vsub.f32 1.0, %v3590
      %v3865 = vsub.f32 1.0, %v3591
      %v3866 = vsub.f32 1.0, %v3592
      %v3867 = vsub.f32 1.0, %v3593
      %v3868 = vsub.f32 1.0, %v3594
      %v3869 = vsub.f32 1.0, %v3595
      %v3870 = vsub.f32 1.0, %v3596
      %v3871 = vsub.f32 1.0, %v3597
      %v3872 = vsub.f32 1.0, %v3598
      %v3873 = vsub.f32 1.0, %v3599
      %v3874 = vsub.f32 1.0, %v3600
      %v3875 = vsub.f32 1.0, %v3601
      %v3876 = vsub.f32 1.0, %v3602
      %v3877 = vsub.f32 1.0, %v3603
      %v3878 = vsub.f32 1.0, %v3604
      %v3879 = vsub.f32 1.0, %v3605
      %v3880 = vsub.f32 1.0, %v3606
      %v3881 = vsub.f32 1.0, %v3607
      %v3882 = vsub.f32 1.0, %v3608
      %v3883 = vsub.f32 1.0, %v3609
      %v3884 = vsub.f32 1.0, %v3610
      %v3885 = vsub.f32 1.0, %v3611
      %v3886 = vsub.f32 1.0, %v3612
      %v3887 = vsub.f32 1.0, %v3613
      %v3888 = vsub.f32 1.0, %v3614
      %v3889 = vsub.f32 1.0, %v3615
      %v3890 = vsub.f32 1.0, %v3616
      %v3891 = vsub.f32 1.0, %v3617
      %v3892 = vsub.f32 1.0, %v3618
      %v3893 = vsub.f32 1.0, %v3619
      %v3894 = vsub.f32 1.0, %v3620
      %v3895 = vmax.f32 %v3621, 0.0
      %v3896 = vmax.f32 %v3622, 0.0
      %v3897 = vmax.f32 %v3623, 0.0
      %v3898 = vmax.f32 %v3624, 0.0
      %v3899 = vmax.f32 %v3625, 0.0
      %v3900 = vmax.f32 %v3626, 0.0
      %v3901 = vmax.f32 %v3627, 0.0
      %v3902 = vmax.f32 %v3628, 0.0
      %v3903 = vmax.f32 %v3629, 0.0
      %v3904 = vmax.f32 %v3630, 0.0
      %v3905 = vmax.f32 %v3631, 0.0
      %v3906 = vmax.f32 %v3632, 0.0
      %v3907 = vmax.f32 %v3633, 0.0
      %v3908 = vmax.f32 %v3634, 0.0
      %v3909 = vmax.f32 %v3635, 0.0
      %v3910 = vmax.f32 %v3636, 0.0
      %v3911 = vmax.f32 %v3637, 0.0
      %v3912 = vmax.f32 %v3638, 0.0
      %v3913 = vmax.f32 %v3639, 0.0
      %v3914 = vmax.f32 %v3640, 0.0
      %v3915 = vmax.f32 %v3641, 0.0
      %v3916 = vmax.f32 %v3642, 0.0
      %v3917 = vmax.f32 %v3643, 0.0
      %v3918 = vmax.f32 %v3644, 0.0
      %v3919 = vmax.f32 %v3645, 0.0
      %v3920 = vmax.f32 %v3646, 0.0
      %v3921 = vmax.f32 %v3647, 0.0
      %v3922 = vmax.f32 %v3648, 0.0
      %v3923 = vmax.f32 %v3649, 0.0
      %v3924 = vmax.f32 %v3650, 0.0
      %v3925 = vmax.f32 %v3651, 0.0
      %v3926 = vmax.f32 %v3652, 0.0
      %v3927 = vmax.f32 %v3653, 0.0
      %v3928 = vmax.f32 %v3654, 0.0
      %v3929 = vmax.f32 %v3655, 0.0
      %v3930 = vmax.f32 %v3656, 0.0
      %v3931 = vmax.f32 %v3657, 0.0
      %v3932 = vmax.f32 %v3658, 0.0
      %v3933 = vmax.f32 %v3659, 0.0
      %v3934 = vmax.f32 %v3660, 0.0
      %v3935 = vmax.f32 %v3661, 0.0
      %v3936 = vmax.f32 %v3662, 0.0
      %v3937 = vmax.f32 %v3663, 0.0
      %v3938 = vmax.f32 %v3664, 0.0
      %v3939 = vmax.f32 %v3665, 0.0
      %v3940 = vmax.f32 %v3666, 0.0
      %v3941 = vmax.f32 %v3667, 0.0
      %v3942 = vmax.f32 %v3668, 0.0
      %v3943 = vmax.f32 %v3669, 0.0
      %v3944 = vmax.f32 %v3670, 0.0
      %v3945 = vmax.f32 %v3671, 0.0
      %v3946 = vmax.f32 %v3672, 0.0
      %v3947 = vmax.f32 %v3673, 0.0
      %v3948 = vmax.f32 %v3674, 0.0
      %v3949 = vmax.f32 %v3675, 0.0
      %v3950 = vmax.f32 %v3676, 0.0
      %v3951 = vmax.f32 %v3677, 0.0
      %v3952 = vmax.f32 %v3678, 0.0
      %v3953 = vmax.f32 %v3679, 0.0
      %v3954 = vmax.f32 %v3680, 0.0
      %v3955 = vmax.f32 %v3681, 0.0
      %v3956 = vmax.f32 %v3682, 0.0
      %v3957 = vmax.f32 %v3683, 0.0
      %v3958 = vmax.f32 %v3684, 0.0
      %v3959 = vmax.f32 %v3685, 0.0
      %v3960 = vmax.f32 %v3686, 0.0
      %v3961 = vmax.f32 %v3687, 0.0
      %v3962 = vmax.f32 %v3688, 0.0
      %v3963 = vmax.f32 %v3689, 0.0
      %v3964 = vmax.f32 %v3690, 0.0
      %v3965 = vmax.f32 %v3691, 0.0
      %v3966 = vmax.f32 %v3692, 0.0
      %v3967 = vmax.f32 %v3693, 0.0
      %v3968 = vmax.f32 %v3694, 0.0
      %v3969 = vmax.f32 %v3695, 0.0
      %v3970 = vmax.f32 %v3696, 0.0
      %v3971 = vmax.f32 %v3697, 0.0
      %v3972 = vmax.f32 %v3698, 0.0
      %v3973 = vmax.f32 %v3699, 0.0
      %v3974 = vmax.f32 %v3700, 0.0
      %v3975 = vmax.f32 %v3701, 0.0
      %v3976 = vmax.f32 %v3702, 0.0
      %v3977 = vmax.f32 %v3703, 0.0
      %v3978 = vmax.f32 %v3704, 0.0
      %v3979 = vmax.f32 %v3705, 0.0
      %v3980 = vmax.f32 %v3706, 0.0
      %v3981 = vmax.f32 %v3707, 0.0
      %v3982 = vmax.f32 %v3708, 0.0
      %v3983 = vmax.f32 %v3709, 0.0
      %v3984 = vmax.f32 %v3710, 0.0
      %v3985 = vmax.f32 %v3711, 0.0
      %v3986 = vmax.f32 %v3712, 0.0
      %v3987 = vmax.f32 %v3713, 0.0
      %v3988 = vmax.f32 %v3714, 0.0
      %v3989 = vmax.f32 %v3715, 0.0
      %v3990 = vmax.f32 %v3716, 0.0
      %v3991 = vmax.f32 %v3717, 0.0
      %v3992 = vmax.f32 %v3718, 0.0
      %v3993 = vmax.f32 %v3719, 0.0
      %v3994 = vmax.f32 %v3720, 0.0
      %v3995 = vmax.f32 %v3721, 0.0
      %v3996 = vmax.f32 %v3722, 0.0
      %v3997 = vmax.f32 %v3723, 0.0
      %v3998 = vmax.f32 %v3724, 0.0
      %v3999 = vmax.f32 %v3725, 0.0
      %v4000 = vmax.f32 %v3726, 0.0
      %v4001 = vmax.f32 %v3727, 0.0
      %v4002 = vmax.f32 %v3728, 0.0
      %v4003 = vmax.f32 %v3729, 0.0
      %v4004 = vmax.f32 %v3730, 0.0
      %v4005 = vmax.f32 %v3731, 0.0
      %v4006 = vmax.f32 %v3732, 0.0
      %v4007 = vmax.f32 %v3733, 0.0
      %v4008 = vmax.f32 %v3734, 0.0
      %v4009 = vmax.f32 %v3735, 0.0
      %v4010 = vmax.f32 %v3736, 0.0
      %v4011 = vmax.f32 %v3737, 0.0
      %v4012 = vmax.f32 %v3738, 0.0
      %v4013 = vmax.f32 %v3739, 0.0
      %v4014 = vmax.f32 %v3740, 0.0
      %v4015 = vmax.f32 %v3741, 0.0
      %v4016 = vmax.f32 %v3742, 0.0
      %v4017 = vmax.f32 %v3743, 0.0
      %v4018 = vmax.f32 %v3744, 0.0
      %v4019 = vmax.f32 %v3745, 0.0
      %v4020 = vmax.f32 %v3746, 0.0
      %v4021 = vmax.f32 %v3747, 0.0
      %v4022 = vmax.f32 %v3748, 0.0
      %v4023 = vmax.f32 %v3749, 0.0
      %v4024 = vmax.f32 %v3750, 0.0
      %v4025 = vmax.f32 %v3751, 0.0
      %v4026 = vmax.f32 %v3752, 0.0
      %v4027 = vmax.f32 %v3753, 0.0
      %v4028 = vmax.f32 %v3754, 0.0
      %v4029 = vmax.f32 %v3755, 0.0
      %v4030 = vmax.f32 %v3756, 0.0
      %v4031 = vmax.f32 %v3757, 0.0
      %v4032 = vmax.f32 %v3758, 0.0
      %v4033 = vmax.f32 %v3759, 0.0
      %v4034 = vmax.f32 %v3760, 0.0
      %v4035 = vmax.f32 %v3761, 0.0
      %v4036 = vmax.f32 %v3762, 0.0
      %v4037 = vmax.f32 %v3763, 0.0
      %v4038 = vmax.f32 %v3764, 0.0
      %v4039 = vmax.f32 %v3765, 0.0
      %v4040 = vmax.f32 %v3766, 0.0
      %v4041 = vmax.f32 %v3767, 0.0
      %v4042 = vmax.f32 %v3768, 0.0
      %v4043 = vmax.f32 %v3769, 0.0
      %v4044 = vmax.f32 %v3770, 0.0
      %v4045 = vmax.f32 %v3771, 0.0
      %v4046 = vmax.f32 %v3772, 0.0
      %v4047 = vmax.f32 %v3773, 0.0
      %v4048 = vmax.f32 %v3774, 0.0
      %v4049 = vmax.f32 %v3775, 0.0
      %v4050 = vmax.f32 %v3776, 0.0
      %v4051 = vmax.f32 %v3777, 0.0
      %v4052 = vmax.f32 %v3778, 0.0
      %v4053 = vmax.f32 %v3779, 0.0
      %v4054 = vmax.f32 %v3780, 0.0
      %v4055 = vmax.f32 %v3781, 0.0
      %v4056 = vmax.f32 %v3782, 0.0
      %v4057 = vmax.f32 %v3783, 0.0
      %v4058 = vmax.f32 %v3784, 0.0
      %v4059 = vmax.f32 %v3785, 0.0
      %v4060 = vmax.f32 %v3786, 0.0
      %v4061 = vmax.f32 %v3787, 0.0
      %v4062 = vmax.f32 %v3788, 0.0
      %v4063 = vmax.f32 %v3789, 0.0
      %v4064 = vmax.f32 %v3790, 0.0
      %v4065 = vmax.f32 %v3791, 0.0
      %v4066 = vmax.f32 %v3792, 0.0
      %v4067 = vmax.f32 %v3793, 0.0
      %v4068 = vmax.f32 %v3794, 0.0
      %v4069 = vmax.f32 %v3795, 0.0
      %v4070 = vmax.f32 %v3796, 0.0
      %v4071 = vmax.f32 %v3797, 0.0
      %v4072 = vmax.f32 %v3798, 0.0
      %v4073 = vmax.f32 %v3799, 0.0
      %v4074 = vmax.f32 %v3800, 0.0
      %v4075 = vmax.f32 %v3801, 0.0
      %v4076 = vmax.f32 %v3802, 0.0
      %v4077 = vmax.f32 %v3803, 0.0
      %v4078 = vmax.f32 %v3804, 0.0
      %v4079 = vmax.f32 %v3805, 0.0
      %v4080 = vmax.f32 %v3806, 0.0
      %v4081 = vmax.f32 %v3807, 0.0
      %v4082 = vmax.f32 %v3808, 0.0
      %v4083 = vmax.f32 %v3809, 0.0
      %v4084 = vmax.f32 %v3810, 0.0
      %v4085 = vmax.f32 %v3811, 0.0
      %v4086 = vmax.f32 %v3812, 0.0
      %v4087 = vmax.f32 %v3813, 0.0
      %v4088 = vmax.f32 %v3814, 0.0
      %v4089 = vmax.f32 %v3815, 0.0
      %v4090 = vmax.f32 %v3816, 0.0
      %v4091 = vmax.f32 %v3817, 0.0
      %v4092 = vmax.f32 %v3818, 0.0
      %v4093 = vmax.f32 %v3819, 0.0
      %v4094 = vmax.f32 %v3820, 0.0
      %v4095 = vmax.f32 %v3821, 0.0
      %v4096 = vmax.f32 %v3822, 0.0
      %v4097 = vmax.f32 %v3823, 0.0
      %v4098 = vmax.f32 %v3824, 0.0
      %v4099 = vmax.f32 %v3825, 0.0
      %v4100 = vmax.f32 %v3826, 0.0
      %v4101 = vmax.f32 %v3827, 0.0
      %v4102 = vmax.f32 %v3828, 0.0
      %v4103 = vmax.f32 %v3829, 0.0
      %v4104 = vmax.f32 %v3830, 0.0
      %v4105 = vmax.f32 %v3831, 0.0
      %v4106 = vmax.f32 %v3832, 0.0
      %v4107 = vmax.f32 %v3833, 0.0
      %v4108 = vmax.f32 %v3834, 0.0
      %v4109 = vmax.f32 %v3835, 0.0
      %v4110 = vmax.f32 %v3836, 0.0
      %v4111 = vmax.f32 %v3837, 0.0
      %v4112 = vmax.f32 %v3838, 0.0
      %v4113 = vmax.f32 %v3839, 0.0
      %v4114 = vmax.f32 %v3840, 0.0
      %v4115 = vmax.f32 %v3841, 0.0
      %v4116 = vmax.f32 %v3842, 0.0
      %v4117 = vmax.f32 %v3843, 0.0
      %v4118 = vmax.f32 %v3844, 0.0
      %v4119 = vmax.f32 %v3845, 0.0
      %v4120 = vmax.f32 %v3846, 0.0
      %v4121 = vmax.f32 %v3847, 0.0
      %v4122 = vmax.f32 %v3848, 0.0
      %v4123 = vmax.f32 %v3849, 0.0
      %v4124 = vmax.f32 %v3850, 0.0
      %v4125 = vmax.f32 %v3851, 0.0
      %v4126 = vmax.f32 %v3852, 0.0
      %v4127 = vmax.f32 %v3853, 0.0
      %v4128 = vmax.f32 %v3854, 0.0
      %v4129 = vmax.f32 %v3855, 0.0
      %v4130 = vmax.f32 %v3856, 0.0
      %v4131 = vmax.f32 %v3857, 0.0
      %v4132 = vmax.f32 %v3858, 0.0
      %v4133 = vmax.f32 %v3859, 0.0
      %v4134 = vmax.f32 %v3860, 0.0
      %v4135 = vmax.f32 %v3861, 0.0
      %v4136 = vmax.f32 %v3862, 0.0
      %v4137 = vmax.f32 %v3863, 0.0
      %v4138 = vmax.f32 %v3864, 0.0
      %v4139 = vmax.f32 %v3865, 0.0
      %v4140 = vmax.f32 %v3866, 0.0
      %v4141 = vmax.f32 %v3867, 0.0
      %v4142 = vmax.f32 %v3868, 0.0
      %v4143 = vmax.f32 %v3869, 0.0
      %v4144 = vmax.f32 %v3870, 0.0
      %v4145 = vmax.f32 %v3871, 0.0
      %v4146 = vmax.f32 %v3872, 0.0
      %v4147 = vmax.f32 %v3873, 0.0
      %v4148 = vmax.f32 %v3874, 0.0
      %v4149 = vmax.f32 %v3875, 0.0
      %v4150 = vmax.f32 %v3876, 0.0
      %v4151 = vmax.f32 %v3877, 0.0
      %v4152 = vmax.f32 %v3878, 0.0
      %v4153 = vmax.f32 %v3879, 0.0
      %v4154 = vmax.f32 %v3880, 0.0
      %v4155 = vmax.f32 %v3881, 0.0
      %v4156 = vmax.f32 %v3882, 0.0
      %v4157 = vmax.f32 %v3883, 0.0
      %v4158 = vmax.f32 %v3884, 0.0
      %v4159 = vmax.f32 %v3885, 0.0
      %v4160 = vmax.f32 %v3886, 0.0
      %v4161 = vmax.f32 %v3887, 0.0
      %v4162 = vmax.f32 %v3888, 0.0
      %v4163 = vmax.f32 %v3889, 0.0
      %v4164 = vmax.f32 %v3890, 0.0
      %v4165 = vmax.f32 %v3891, 0.0
      %v4166 = vmax.f32 %v3892, 0.0
      %v4167 = vmax.f32 %v3893, 0.0
      %v4168 = vmax.f32 %v3894, 0.0
      %v4169 = vmul.f32 %v1959, %v3895
      %v4170 = vmul.f32 %v1960, %v3896
      %v4171 = vmul.f32 %v1961, %v3897
      %v4172 = vmul.f32 %v1962, %v3898
      %v4173 = vmul.f32 %v1963, %v3899
      %v4174 = vmul.f32 %v1964, %v3900
      %v4175 = vmul.f32 %v1965, %v3901
      %v4176 = vmul.f32 %v1966, %v3902
      %v4177 = vmul.f32 %v1967, %v3903
      %v4178 = vmul.f32 %v1968, %v3904
      %v4179 = vmul.f32 %v1969, %v3905
      %v4180 = vmul.f32 %v1970, %v3906
      %v4181 = vmul.f32 %v1971, %v3907
      %v4182 = vmul.f32 %v1972, %v3908
      %v4183 = vmul.f32 %v1973, %v3909
      %v4184 = vmul.f32 %v1974, %v3910
      %v4185 = vmul.f32 %v1975, %v3911
      %v4186 = vmul.f32 %v1976, %v3912
      %v4187 = vmul.f32 %v1977, %v3913
      %v4188 = vmul.f32 %v1978, %v3914
      %v4189 = vmul.f32 %v1979, %v3915
      %v4190 = vmul.f32 %v1980, %v3916
      %v4191 = vmul.f32 %v1981, %v3917
      %v4192 = vmul.f32 %v1982, %v3918
      %v4193 = vmul.f32 %v1983, %v3919
      %v4194 = vmul.f32 %v1984, %v3920
      %v4195 = vmul.f32 %v1985, %v3921
      %v4196 = vmul.f32 %v1986, %v3922
      %v4197 = vmul.f32 %v1987, %v3923
      %v4198 = vmul.f32 %v1988, %v3924
      %v4199 = vmul.f32 %v1989, %v3925
      %v4200 = vmul.f32 %v1990, %v3926
      %v4201 = vmul.f32 %v1991, %v3927
      %v4202 = vmul.f32 %v1992, %v3928
      %v4203 = vmul.f32 %v1993, %v3929
      %v4204 = vmul.f32 %v1994, %v3930
      %v4205 = vmul.f32 %v1995, %v3931
      %v4206 = vmul.f32 %v1996, %v3932
      %v4207 = vmul.f32 %v1997, %v3933
      %v4208 = vmul.f32 %v1998, %v3934
      %v4209 = vmul.f32 %v1999, %v3935
      %v4210 = vmul.f32 %v2000, %v3936
      %v4211 = vmul.f32 %v2001, %v3937
      %v4212 = vmul.f32 %v2002, %v3938
      %v4213 = vmul.f32 %v2003, %v3939
      %v4214 = vmul.f32 %v2004, %v3940
      %v4215 = vmul.f32 %v2005, %v3941
      %v4216 = vmul.f32 %v2006, %v3942
      %v4217 = vmul.f32 %v2007, %v3943
      %v4218 = vmul.f32 %v2008, %v3944
      %v4219 = vmul.f32 %v2009, %v3945
      %v4220 = vmul.f32 %v2010, %v3946
      %v4221 = vmul.f32 %v2011, %v3947
      %v4222 = vmul.f32 %v2012, %v3948
      %v4223 = vmul.f32 %v2013, %v3949
      %v4224 = vmul.f32 %v2014, %v3950
      %v4225 = vmul.f32 %v2015, %v3951
      %v4226 = vmul.f32 %v2016, %v3952
      %v4227 = vmul.f32 %v2017, %v3953
      %v4228 = vmul.f32 %v2018, %v3954
      %v4229 = vmul.f32 %v2019, %v3955
      %v4230 = vmul.f32 %v2020, %v3956
      %v4231 = vmul.f32 %v2021, %v3957
      %v4232 = vmul.f32 %v2022, %v3958
      %v4233 = vmul.f32 %v2023, %v3959
      %v4234 = vmul.f32 %v2024, %v3960
      %v4235 = vmul.f32 %v2025, %v3961
      %v4236 = vmul.f32 %v2026, %v3962
      %v4237 = vmul.f32 %v2027, %v3963
      %v4238 = vmul.f32 %v2028, %v3964
      %v4239 = vmul.f32 %v2029, %v3965
      %v4240 = vmul.f32 %v2030, %v3966
      %v4241 = vmul.f32 %v2031, %v3967
      %v4242 = vmul.f32 %v2032, %v3968
      %v4243 = vmul.f32 %v2033, %v3969
      %v4244 = vmul.f32 %v2034, %v3970
      %v4245 = vmul.f32 %v2035, %v3971
      %v4246 = vmul.f32 %v2036, %v3972
      %v4247 = vmul.f32 %v2037, %v3973
      %v4248 = vmul.f32 %v2038, %v3974
      %v4249 = vmul.f32 %v2039, %v3975
      %v4250 = vmul.f32 %v2040, %v3976
      %v4251 = vmul.f32 %v2041, %v3977
      %v4252 = vmul.f32 %v2042, %v3978
      %v4253 = vmul.f32 %v2043, %v3979
      %v4254 = vmul.f32 %v2044, %v3980
      %v4255 = vmul.f32 %v2045, %v3981
      %v4256 = vmul.f32 %v2046, %v3982
      %v4257 = vmul.f32 %v2047, %v3983
      %v4258 = vmul.f32 %v2048, %v3984
      %v4259 = vmul.f32 %v2049, %v3985
      %v4260 = vmul.f32 %v2050, %v3986
      %v4261 = vmul.f32 %v2051, %v3987
      %v4262 = vmul.f32 %v2052, %v3988
      %v4263 = vmul.f32 %v2053, %v3989
      %v4264 = vmul.f32 %v2054, %v3990
      %v4265 = vmul.f32 %v2055, %v3991
      %v4266 = vmul.f32 %v2056, %v3992
      %v4267 = vmul.f32 %v2057, %v3993
      %v4268 = vmul.f32 %v2058, %v3994
      %v4269 = vmul.f32 %v2059, %v3995
      %v4270 = vmul.f32 %v2060, %v3996
      %v4271 = vmul.f32 %v2061, %v3997
      %v4272 = vmul.f32 %v2062, %v3998
      %v4273 = vmul.f32 %v2063, %v3999
      %v4274 = vmul.f32 %v2064, %v4000
      %v4275 = vmul.f32 %v2065, %v4001
      %v4276 = vmul.f32 %v2066, %v4002
      %v4277 = vmul.f32 %v2067, %v4003
      %v4278 = vmul.f32 %v2068, %v4004
      %v4279 = vmul.f32 %v2069, %v4005
      %v4280 = vmul.f32 %v2070, %v4006
      %v4281 = vmul.f32 %v2071, %v4007
      %v4282 = vmul.f32 %v2072, %v4008
      %v4283 = vmul.f32 %v2073, %v4009
      %v4284 = vmul.f32 %v2074, %v4010
      %v4285 = vmul.f32 %v2075, %v4011
      %v4286 = vmul.f32 %v2076, %v4012
      %v4287 = vmul.f32 %v2077, %v4013
      %v4288 = vmul.f32 %v2078, %v4014
      %v4289 = vmul.f32 %v2079, %v4015
      %v4290 = vmul.f32 %v2080, %v4016
      %v4291 = vmul.f32 %v2081, %v4017
      %v4292 = vmul.f32 %v2082, %v4018
      %v4293 = vmul.f32 %v2083, %v4019
      %v4294 = vmul.f32 %v2084, %v4020
      %v4295 = vmul.f32 %v2085, %v4021
      %v4296 = vmul.f32 %v2086, %v4022
      %v4297 = vmul.f32 %v2087, %v4023
      %v4298 = vmul.f32 %v2088, %v4024
      %v4299 = vmul.f32 %v2089, %v4025
      %v4300 = vmul.f32 %v2090, %v4026
      %v4301 = vmul.f32 %v2091, %v4027
      %v4302 = vmul.f32 %v2092, %v4028
      %v4303 = vmul.f32 %v2093, %v4029
      %v4304 = vmul.f32 %v2094, %v4030
      %v4305 = vmul.f32 %v2095, %v4031
      %v4306 = vmul.f32 %v2096, %v4032
      %v4307 = vmul.f32 %v2097, %v4033
      %v4308 = vmul.f32 %v2098, %v4034
      %v4309 = vmul.f32 %v2099, %v4035
      %v4310 = vmul.f32 %v2100, %v4036
      %v4311 = vmul.f32 %v2101, %v4037
      %v4312 = vmul.f32 %v2102, %v4038
      %v4313 = vmul.f32 %v2103, %v4039
      %v4314 = vmul.f32 %v2104, %v4040
      %v4315 = vmul.f32 %v2105, %v4041
      %v4316 = vmul.f32 %v2106, %v4042
      %v4317 = vmul.f32 %v2107, %v4043
      %v4318 = vmul.f32 %v2108, %v4044
      %v4319 = vmul.f32 %v2109, %v4045
      %v4320 = vmul.f32 %v2110, %v4046
      %v4321 = vmul.f32 %v2111, %v4047
      %v4322 = vmul.f32 %v2112, %v4048
      %v4323 = vmul.f32 %v2113, %v4049
      %v4324 = vmul.f32 %v2114, %v4050
      %v4325 = vmul.f32 %v2115, %v4051
      %v4326 = vmul.f32 %v2116, %v4052
      %v4327 = vmul.f32 %v2117, %v4053
      %v4328 = vmul.f32 %v2118, %v4054
      %v4329 = vmul.f32 %v2119, %v4055
      %v4330 = vmul.f32 %v2120, %v4056
      %v4331 = vmul.f32 %v2121, %v4057
      %v4332 = vmul.f32 %v2122, %v4058
      %v4333 = vmul.f32 %v2123, %v4059
      %v4334 = vmul.f32 %v2124, %v4060
      %v4335 = vmul.f32 %v2125, %v4061
      %v4336 = vmul.f32 %v2126, %v4062
      %v4337 = vmul.f32 %v2127, %v4063
      %v4338 = vmul.f32 %v2128, %v4064
      %v4339 = vmul.f32 %v2129, %v4065
      %v4340 = vmul.f32 %v2130, %v4066
      %v4341 = vmul.f32 %v2131, %v4067
      %v4342 = vmul.f32 %v2132, %v4068
      %v4343 = vmul.f32 %v2133, %v4069
      %v4344 = vmul.f32 %v2134, %v4070
      %v4345 = vmul.f32 %v2135, %v4071
      %v4346 = vmul.f32 %v2136, %v4072
      %v4347 = vmul.f32 %v2137, %v4073
      %v4348 = vmul.f32 %v2138, %v4074
      %v4349 = vmul.f32 %v2139, %v4075
      %v4350 = vmul.f32 %v2140, %v4076
      %v4351 = vmul.f32 %v2141, %v4077
      %v4352 = vmul.f32 %v2142, %v4078
      %v4353 = vmul.f32 %v2143, %v4079
      %v4354 = vmul.f32 %v2144, %v4080
      %v4355 = vmul.f32 %v2145, %v4081
      %v4356 = vmul.f32 %v2146, %v4082
      %v4357 = vmul.f32 %v2147, %v4083
      %v4358 = vmul.f32 %v2148, %v4084
      %v4359 = vmul.f32 %v2149, %v4085
      %v4360 = vmul.f32 %v2150, %v4086
      %v4361 = vmul.f32 %v2151, %v4087
      %v4362 = vmul.f32 %v2152, %v4088
      %v4363 = vmul.f32 %v2153, %v4089
      %v4364 = vmul.f32 %v2154, %v4090
      %v4365 = vmul.f32 %v2155, %v4091
      %v4366 = vmul.f32 %v2156, %v4092
      %v4367 = vmul.f32 %v2157, %v4093
      %v4368 = vmul.f32 %v2158, %v4094
      %v4369 = vmul.f32 %v2159, %v4095
      %v4370 = vmul.f32 %v2160, %v4096
      %v4371 = vmul.f32 %v2161, %v4097
      %v4372 = vmul.f32 %v2162, %v4098
      %v4373 = vmul.f32 %v2163, %v4099
      %v4374 = vmul.f32 %v2164, %v4100
      %v4375 = vmul.f32 %v2165, %v4101
      %v4376 = vmul.f32 %v2166, %v4102
      %v4377 = vmul.f32 %v2167, %v4103
      %v4378 = vmul.f32 %v2168, %v4104
      %v4379 = vmul.f32 %v2169, %v4105
      %v4380 = vmul.f32 %v2170, %v4106
      %v4381 = vmul.f32 %v2171, %v4107
      %v4382 = vmul.f32 %v2172, %v4108
      %v4383 = vmul.f32 %v2173, %v4109
      %v4384 = vmul.f32 %v2174, %v4110
      %v4385 = vmul.f32 %v2175, %v4111
      %v4386 = vmul.f32 %v2176, %v4112
      %v4387 = vmul.f32 %v2177, %v4113
      %v4388 = vmul.f32 %v2178, %v4114
      %v4389 = vmul.f32 %v2179, %v4115
      %v4390 = vmul.f32 %v2180, %v4116
      %v4391 = vmul.f32 %v2181, %v4117
      %v4392 = vmul.f32 %v2182, %v4118
      %v4393 = vmul.f32 %v2183, %v4119
      %v4394 = vmul.f32 %v2184, %v4120
      %v4395 = vmul.f32 %v2185, %v4121
      %v4396 = vmul.f32 %v2186, %v4122
      %v4397 = vmul.f32 %v2187, %v4123
      %v4398 = vmul.f32 %v2188, %v4124
      %v4399 = vmul.f32 %v2189, %v4125
      %v4400 = vmul.f32 %v2190, %v4126
      %v4401 = vmul.f32 %v2191, %v4127
      %v4402 = vmul.f32 %v2192, %v4128
      %v4403 = vmul.f32 %v2193, %v4129
      %v4404 = vmul.f32 %v2194, %v4130
      %v4405 = vmul.f32 %v2195, %v4131
      %v4406 = vmul.f32 %v2196, %v4132
      %v4407 = vmul.f32 %v2197, %v4133
      %v4408 = vmul.f32 %v2198, %v4134
      %v4409 = vmul.f32 %v2199, %v4135
      %v4410 = vmul.f32 %v2200, %v4136
      %v4411 = vmul.f32 %v2201, %v4137
      %v4412 = vmul.f32 %v2202, %v4138
      %v4413 = vmul.f32 %v2203, %v4139
      %v4414 = vmul.f32 %v2204, %v4140
      %v4415 = vmul.f32 %v2205, %v4141
      %v4416 = vmul.f32 %v2206, %v4142
      %v4417 = vmul.f32 %v2207, %v4143
      %v4418 = vmul.f32 %v2208, %v4144
      %v4419 = vmul.f32 %v2209, %v4145
      %v4420 = vmul.f32 %v2210, %v4146
      %v4421 = vmul.f32 %v2211, %v4147
      %v4422 = vmul.f32 %v2212, %v4148
      %v4423 = vmul.f32 %v2213, %v4149
      %v4424 = vmul.f32 %v2214, %v4150
      %v4425 = vmul.f32 %v2215, %v4151
      %v4426 = vmul.f32 %v2216, %v4152
      %v4427 = vmul.f32 %v2217, %v4153
      %v4428 = vmul.f32 %v2218, %v4154
      %v4429 = vmul.f32 %v2219, %v4155
      %v4430 = vmul.f32 %v2220, %v4156
      %v4431 = vmul.f32 %v2221, %v4157
      %v4432 = vmul.f32 %v2222, %v4158
      %v4433 = vmul.f32 %v2223, %v4159
      %v4434 = vmul.f32 %v2224, %v4160
      %v4435 = vmul.f32 %v2225, %v4161
      %v4436 = vmul.f32 %v2226, %v4162
      %v4437 = vmul.f32 %v2227, %v4163
      %v4438 = vmul.f32 %v2228, %v4164
      %v4439 = vmul.f32 %v2229, %v4165
      %v4440 = vmul.f32 %v2230, %v4166
      %v4441 = vmul.f32 %v2231, %v4167
      %v4442 = vmul.f32 %v2232, %v4168
      %v4443 = vpack.c.bf16 %v4171, %v4169
      %v4444 = vpack.c.bf16 %v4172, %v4170
      %v4445 = vpack.c.bf16 %v4175, %v4173
      %v4446 = vpack.c.bf16 %v4176, %v4174
      %v4447 = vpack.c.bf16 %v4179, %v4177
      %v4448 = vpack.c.bf16 %v4180, %v4178
      %v4449 = vpack.c.bf16 %v4183, %v4181
      %v4450 = vpack.c.bf16 %v4184, %v4182
      %v4451 = vpack.c.bf16 %v4187, %v4185
      %v4452 = vpack.c.bf16 %v4188, %v4186
      %v4453 = vpack.c.bf16 %v4191, %v4189
      %v4454 = vpack.c.bf16 %v4192, %v4190
      %v4455 = vpack.c.bf16 %v4195, %v4193
      %v4456 = vpack.c.bf16 %v4196, %v4194
      %v4457 = vpack.c.bf16 %v4199, %v4197
      %v4458 = vpack.c.bf16 %v4200, %v4198
      %v4459 = vpack.c.bf16 %v4203, %v4201
      %v4460 = vpack.c.bf16 %v4204, %v4202
      %v4461 = vpack.c.bf16 %v4207, %v4205
      %v4462 = vpack.c.bf16 %v4208, %v4206
      %v4463 = vpack.c.bf16 %v4211, %v4209
      %v4464 = vpack.c.bf16 %v4212, %v4210
      %v4465 = vpack.c.bf16 %v4215, %v4213
      %v4466 = vpack.c.bf16 %v4216, %v4214
      %v4467 = vpack.c.bf16 %v4219, %v4217
      %v4468 = vpack.c.bf16 %v4220, %v4218
      %v4469 = vpack.c.bf16 %v4223, %v4221
      %v4470 = vpack.c.bf16 %v4224, %v4222
      %v4471 = vpack.c.bf16 %v4227, %v4225
      %v4472 = vpack.c.bf16 %v4228, %v4226
      %v4473 = vpack.c.bf16 %v4231, %v4229
      %v4474 = vpack.c.bf16 %v4232, %v4230
      %v4475 = vpack.c.bf16 %v4235, %v4233
      %v4476 = vpack.c.bf16 %v4236, %v4234
      %v4477 = vpack.c.bf16 %v4239, %v4237
      %v4478 = vpack.c.bf16 %v4240, %v4238
      %v4479 = vpack.c.bf16 %v4243, %v4241
      %v4480 = vpack.c.bf16 %v4244, %v4242
      %v4481 = vpack.c.bf16 %v4247, %v4245
      %v4482 = vpack.c.bf16 %v4248, %v4246
      %v4483 = vpack.c.bf16 %v4251, %v4249
      %v4484 = vpack.c.bf16 %v4252, %v4250
      %v4485 = vpack.c.bf16 %v4255, %v4253
      %v4486 = vpack.c.bf16 %v4256, %v4254
      %v4487 = vpack.c.bf16 %v4259, %v4257
      %v4488 = vpack.c.bf16 %v4260, %v4258
      %v4489 = vpack.c.bf16 %v4263, %v4261
      %v4490 = vpack.c.bf16 %v4264, %v4262
      %v4491 = vpack.c.bf16 %v4267, %v4265
      %v4492 = vpack.c.bf16 %v4268, %v4266
      %v4493 = vpack.c.bf16 %v4271, %v4269
      %v4494 = vpack.c.bf16 %v4272, %v4270
      %v4495 = vpack.c.bf16 %v4275, %v4273
      %v4496 = vpack.c.bf16 %v4276, %v4274
      %v4497 = vpack.c.bf16 %v4279, %v4277
      %v4498 = vpack.c.bf16 %v4280, %v4278
      %v4499 = vpack.c.bf16 %v4283, %v4281
      %v4500 = vpack.c.bf16 %v4284, %v4282
      %v4501 = vpack.c.bf16 %v4287, %v4285
      %v4502 = vpack.c.bf16 %v4288, %v4286
      %v4503 = vpack.c.bf16 %v4291, %v4289
      %v4504 = vpack.c.bf16 %v4292, %v4290
      %v4505 = vpack.c.bf16 %v4295, %v4293
      %v4506 = vpack.c.bf16 %v4296, %v4294
      %v4507 = vpack.c.bf16 %v4299, %v4297
      %v4508 = vpack.c.bf16 %v4300, %v4298
      %v4509 = vpack.c.bf16 %v4303, %v4301
      %v4510 = vpack.c.bf16 %v4304, %v4302
      %v4511 = vpack.c.bf16 %v4307, %v4305
      %v4512 = vpack.c.bf16 %v4308, %v4306
      %v4513 = vpack.c.bf16 %v4311, %v4309
      %v4514 = vpack.c.bf16 %v4312, %v4310
      %v4515 = vpack.c.bf16 %v4315, %v4313
      %v4516 = vpack.c.bf16 %v4316, %v4314
      %v4517 = vpack.c.bf16 %v4319, %v4317
      %v4518 = vpack.c.bf16 %v4320, %v4318
      %v4519 = vpack.c.bf16 %v4323, %v4321
      %v4520 = vpack.c.bf16 %v4324, %v4322
      %v4521 = vpack.c.bf16 %v4327, %v4325
      %v4522 = vpack.c.bf16 %v4328, %v4326
      %v4523 = vpack.c.bf16 %v4331, %v4329
      %v4524 = vpack.c.bf16 %v4332, %v4330
      %v4525 = vpack.c.bf16 %v4335, %v4333
      %v4526 = vpack.c.bf16 %v4336, %v4334
      %v4527 = vpack.c.bf16 %v4339, %v4337
      %v4528 = vpack.c.bf16 %v4340, %v4338
      %v4529 = vpack.c.bf16 %v4343, %v4341
      %v4530 = vpack.c.bf16 %v4344, %v4342
      %v4531 = vpack.c.bf16 %v4347, %v4345
      %v4532 = vpack.c.bf16 %v4348, %v4346
      %v4533 = vpack.c.bf16 %v4351, %v4349
      %v4534 = vpack.c.bf16 %v4352, %v4350
      %v4535 = vpack.c.bf16 %v4355, %v4353
      %v4536 = vpack.c.bf16 %v4356, %v4354
      %v4537 = vpack.c.bf16 %v4359, %v4357
      %v4538 = vpack.c.bf16 %v4360, %v4358
      %v4539 = vpack.c.bf16 %v4363, %v4361
      %v4540 = vpack.c.bf16 %v4364, %v4362
      %v4541 = vpack.c.bf16 %v4367, %v4365
      %v4542 = vpack.c.bf16 %v4368, %v4366
      %v4543 = vpack.c.bf16 %v4371, %v4369
      %v4544 = vpack.c.bf16 %v4372, %v4370
      %v4545 = vpack.c.bf16 %v4375, %v4373
      %v4546 = vpack.c.bf16 %v4376, %v4374
      %v4547 = vpack.c.bf16 %v4379, %v4377
      %v4548 = vpack.c.bf16 %v4380, %v4378
      %v4549 = vpack.c.bf16 %v4383, %v4381
      %v4550 = vpack.c.bf16 %v4384, %v4382
      %v4551 = vpack.c.bf16 %v4387, %v4385
      %v4552 = vpack.c.bf16 %v4388, %v4386
      %v4553 = vpack.c.bf16 %v4391, %v4389
      %v4554 = vpack.c.bf16 %v4392, %v4390
      %v4555 = vpack.c.bf16 %v4395, %v4393
      %v4556 = vpack.c.bf16 %v4396, %v4394
      %v4557 = vpack.c.bf16 %v4399, %v4397
      %v4558 = vpack.c.bf16 %v4400, %v4398
      %v4559 = vpack.c.bf16 %v4403, %v4401
      %v4560 = vpack.c.bf16 %v4404, %v4402
      %v4561 = vpack.c.bf16 %v4407, %v4405
      %v4562 = vpack.c.bf16 %v4408, %v4406
      %v4563 = vpack.c.bf16 %v4411, %v4409
      %v4564 = vpack.c.bf16 %v4412, %v4410
      %v4565 = vpack.c.bf16 %v4415, %v4413
      %v4566 = vpack.c.bf16 %v4416, %v4414
      %v4567 = vpack.c.bf16 %v4419, %v4417
      %v4568 = vpack.c.bf16 %v4420, %v4418
      %v4569 = vpack.c.bf16 %v4423, %v4421
      %v4570 = vpack.c.bf16 %v4424, %v4422
      %v4571 = vpack.c.bf16 %v4427, %v4425
      %v4572 = vpack.c.bf16 %v4428, %v4426
      %v4573 = vpack.c.bf16 %v4431, %v4429
      %v4574 = vpack.c.bf16 %v4432, %v4430
      %v4575 = vpack.c.bf16 %v4435, %v4433
      %v4576 = vpack.c.bf16 %v4436, %v4434
      %v4577 = vpack.c.bf16 %v4439, %v4437
      %v4578 = vpack.c.bf16 %v4440, %v4438
      %v4579 = vpack.c.bf16 %v4441, %v4441
      %v4580 = vpack.c.bf16 %v4442, %v4442
      %v4581 = vld [vmem:[%s1] sm:$0xff]
      %v4582 = vld [vmem:[%s1 + $0x8] sm:$0xff]
      %v4583 = vld [vmem:[%s1 + $0x10] sm:$0xff]
      %v4584 = vld [vmem:[%s1 + $0x18] sm:$0xff]
      %v4585 = vld [vmem:[%s1 + $0x20] sm:$0xf]
      %v4586 = vld [vmem:[%s1 + $0x24] sm:$0xff]
      %v4587 = vld [vmem:[%s1 + $0x2c] sm:$0xff]
      %v4588 = vld [vmem:[%s1 + $0x34] sm:$0xff]
      %v4589 = vld [vmem:[%s1 + $0x3c] sm:$0xff]
      %v4590 = vld [vmem:[%s1 + $0x44] sm:$0xf]
      %v4591 = vld [vmem:[%s1 + $0x48] sm:$0xff]
      %v4592 = vld [vmem:[%s1 + $0x50] sm:$0xff]
      %v4593 = vld [vmem:[%s1 + $0x58] sm:$0xff]
      %v4594 = vld [vmem:[%s1 + $0x60] sm:$0xff]
      %v4595 = vld [vmem:[%s1 + $0x68] sm:$0xf]
      %v4596 = vld [vmem:[%s1 + $0x6c] sm:$0xff]
      %v4597 = vld [vmem:[%s1 + $0x74] sm:$0xff]
      %v4598 = vld [vmem:[%s1 + $0x7c] sm:$0xff]
      %v4599 = vld [vmem:[%s1 + $0x84] sm:$0xff]
      %v4600 = vld [vmem:[%s1 + $0x8c] sm:$0xf]
      %v4601 = vld [vmem:[%s1 + $0x90] sm:$0xff]
      %v4602 = vld [vmem:[%s1 + $0x98] sm:$0xff]
      %v4603 = vld [vmem:[%s1 + $0xa0] sm:$0xff]
      %v4604 = vld [vmem:[%s1 + $0xa8] sm:$0xff]
      %v4605 = vld [vmem:[%s1 + $0xb0] sm:$0xf]
      %v4606 = vld [vmem:[%s1 + $0xb4] sm:$0xff]
      %v4607 = vld [vmem:[%s1 + $0xbc] sm:$0xff]
      %v4608 = vld [vmem:[%s1 + $0xc4] sm:$0xff]
      %v4609 = vld [vmem:[%s1 + $0xcc] sm:$0xff]
      %v4610 = vld [vmem:[%s1 + $0xd4] sm:$0xf]
      %v4611 = vld [vmem:[%s1 + $0xd8] sm:$0xff]
      %v4612 = vld [vmem:[%s1 + $0xe0] sm:$0xff]
      %v4613 = vld [vmem:[%s1 + $0xe8] sm:$0xff]
      %v4614 = vld [vmem:[%s1 + $0xf0] sm:$0xff]
      %v4615 = vld [vmem:[%s1 + $0xf8] sm:$0xf]
      %v4616 = vld [vmem:[%s1 + $0xfc] sm:$0xff]
      %v4617 = vld [vmem:[%s1 + $0x104] sm:$0xff]
      %v4618 = vld [vmem:[%s1 + $0x10c] sm:$0xff]
      %v4619 = vld [vmem:[%s1 + $0x114] sm:$0xff]
      %v4620 = vld [vmem:[%s1 + $0x11c] sm:$0xf]
      %v4621 = vld [vmem:[%s1 + $0x120] sm:$0xff]
      %v4622 = vld [vmem:[%s1 + $0x128] sm:$0xff]
      %v4623 = vld [vmem:[%s1 + $0x130] sm:$0xff]
      %v4624 = vld [vmem:[%s1 + $0x138] sm:$0xff]
      %v4625 = vld [vmem:[%s1 + $0x140] sm:$0xf]
      %v4626 = vld [vmem:[%s1 + $0x144] sm:$0xff]
      %v4627 = vld [vmem:[%s1 + $0x14c] sm:$0xff]
      %v4628 = vld [vmem:[%s1 + $0x154] sm:$0xff]
      %v4629 = vld [vmem:[%s1 + $0x15c] sm:$0xff]
      %v4630 = vld [vmem:[%s1 + $0x164] sm:$0xf]
      %v4631 = vld [vmem:[%s1 + $0x168] sm:$0xff]
      %v4632 = vld [vmem:[%s1 + $0x170] sm:$0xff]
      %v4633 = vld [vmem:[%s1 + $0x178] sm:$0xff]
      %v4634 = vld [vmem:[%s1 + $0x180] sm:$0xff]
      %v4635 = vld [vmem:[%s1 + $0x188] sm:$0xf]
      %v4636 = vld [vmem:[%s1 + $0x18c] sm:$0xff]
      %v4637 = vld [vmem:[%s1 + $0x194] sm:$0xff]
      %v4638 = vld [vmem:[%s1 + $0x19c] sm:$0xff]
      %v4639 = vld [vmem:[%s1 + $0x1a4] sm:$0xff]
      %v4640 = vld [vmem:[%s1 + $0x1ac] sm:$0xf]
      %v4641 = vld [vmem:[%s1 + $0x1b0] sm:$0x33]
      %v4642 = vld [vmem:[%s1 + $0x1b8] sm:$0x33]
      %v4643 = vld [vmem:[%s1 + $0x1c0] sm:$0x33]
      %v4644 = vld [vmem:[%s1 + $0x1c8] sm:$0x33]
      %v4645 = vld [vmem:[%s1 + $0x1d0] sm:$0x3]
      %v4711 = vunpack.c.l.b16 %v4581
      %v4712 = vunpack.c.h.b16 %v4581
      %v4713 = vunpack.c.l.b16 %v4582
      %v4714 = vunpack.c.h.b16 %v4582
      %v4715 = vunpack.c.l.b16 %v4583
      %v4716 = vunpack.c.h.b16 %v4583
      %v4717 = vunpack.c.l.b16 %v4584
      %v4718 = vunpack.c.h.b16 %v4584
      %v4719 = vunpack.c.l.b16 %v4585
      %v4720 = vunpack.c.l.b16 %v4586
      %v4721 = vunpack.c.h.b16 %v4586
      %v4722 = vunpack.c.l.b16 %v4587
      %v4723 = vunpack.c.h.b16 %v4587
      %v4724 = vunpack.c.l.b16 %v4588
      %v4725 = vunpack.c.h.b16 %v4588
      %v4726 = vunpack.c.l.b16 %v4589
      %v4727 = vunpack.c.h.b16 %v4589
      %v4728 = vunpack.c.l.b16 %v4590
      %v4729 = vunpack.c.l.b16 %v4591
      %v4730 = vunpack.c.h.b16 %v4591
      %v4731 = vunpack.c.l.b16 %v4592
      %v4732 = vunpack.c.h.b16 %v4592
      %v4733 = vunpack.c.l.b16 %v4593
      %v4734 = vunpack.c.h.b16 %v4593
      %v4735 = vunpack.c.l.b16 %v4594
      %v4736 = vunpack.c.h.b16 %v4594
      %v4737 = vunpack.c.l.b16 %v4595
      %v4738 = vunpack.c.l.b16 %v4596
      %v4739 = vunpack.c.h.b16 %v4596
      %v4740 = vunpack.c.l.b16 %v4597
      %v4741 = vunpack.c.h.b16 %v4597
      %v4742 = vunpack.c.l.b16 %v4598
      %v4743 = vunpack.c.h.b16 %v4598
      %v4744 = vunpack.c.l.b16 %v4599
      %v4745 = vunpack.c.h.b16 %v4599
      %v4746 = vunpack.c.l.b16 %v4600
      %v4747 = vunpack.c.l.b16 %v4601
      %v4748 = vunpack.c.h.b16 %v4601
      %v4749 = vunpack.c.l.b16 %v4602
      %v4750 = vunpack.c.h.b16 %v4602
      %v4751 = vunpack.c.l.b16 %v4603
      %v4752 = vunpack.c.h.b16 %v4603
      %v4753 = vunpack.c.l.b16 %v4604
      %v4754 = vunpack.c.h.b16 %v4604
      %v4755 = vunpack.c.l.b16 %v4605
      %v4756 = vunpack.c.l.b16 %v4606
      %v4757 = vunpack.c.h.b16 %v4606
      %v4758 = vunpack.c.l.b16 %v4607
      %v4759 = vunpack.c.h.b16 %v4607
      %v4760 = vunpack.c.l.b16 %v4608
      %v4761 = vunpack.c.h.b16 %v4608
      %v4762 = vunpack.c.l.b16 %v4609
      %v4763 = vunpack.c.h.b16 %v4609
      %v4764 = vunpack.c.l.b16 %v4610
      %v4765 = vunpack.c.l.b16 %v4611
      %v4766 = vunpack.c.h.b16 %v4611
      %v4767 = vunpack.c.l.b16 %v4612
      %v4768 = vunpack.c.h.b16 %v4612
      %v4769 = vunpack.c.l.b16 %v4613
      %v4770 = vunpack.c.h.b16 %v4613
      %v4771 = vunpack.c.l.b16 %v4614
      %v4772 = vunpack.c.h.b16 %v4614
      %v4773 = vunpack.c.l.b16 %v4615
      %v4774 = vunpack.c.l.b16 %v4616
      %v4775 = vunpack.c.h.b16 %v4616
      %v4776 = vunpack.c.l.b16 %v4617
      %v4777 = vunpack.c.h.b16 %v4617
      %v4778 = vunpack.c.l.b16 %v4618
      %v4779 = vunpack.c.h.b16 %v4618
      %v4780 = vunpack.c.l.b16 %v4619
      %v4781 = vunpack.c.h.b16 %v4619
      %v4782 = vunpack.c.l.b16 %v4620
      %v4783 = vunpack.c.l.b16 %v4621
      %v4784 = vunpack.c.h.b16 %v4621
      %v4785 = vunpack.c.l.b16 %v4622
      %v4786 = vunpack.c.h.b16 %v4622
      %v4787 = vunpack.c.l.b16 %v4623
      %v4788 = vunpack.c.h.b16 %v4623
      %v4789 = vunpack.c.l.b16 %v4624
      %v4790 = vunpack.c.h.b16 %v4624
      %v4791 = vunpack.c.l.b16 %v4625
      %v4792 = vunpack.c.l.b16 %v4626
      %v4793 = vunpack.c.h.b16 %v4626
      %v4794 = vunpack.c.l.b16 %v4627
      %v4795 = vunpack.c.h.b16 %v4627
      %v4796 = vunpack.c.l.b16 %v4628
      %v4797 = vunpack.c.h.b16 %v4628
      %v4798 = vunpack.c.l.b16 %v4629
      %v4799 = vunpack.c.h.b16 %v4629
      %v4800 = vunpack.c.l.b16 %v4630
      %v4801 = vunpack.c.l.b16 %v4631
      %v4802 = vunpack.c.h.b16 %v4631
      %v4803 = vunpack.c.l.b16 %v4632
      %v4804 = vunpack.c.h.b16 %v4632
      %v4805 = vunpack.c.l.b16 %v4633
      %v4806 = vunpack.c.h.b16 %v4633
      %v4807 = vunpack.c.l.b16 %v4634
      %v4808 = vunpack.c.h.b16 %v4634
      %v4809 = vunpack.c.l.b16 %v4635
      %v4810 = vunpack.c.l.b16 %v4636
      %v4811 = vunpack.c.h.b16 %v4636
      %v4812 = vunpack.c.l.b16 %v4637
      %v4813 = vunpack.c.h.b16 %v4637
      %v4814 = vunpack.c.l.b16 %v4638
      %v4815 = vunpack.c.h.b16 %v4638
      %v4816 = vunpack.c.l.b16 %v4639
      %v4817 = vunpack.c.h.b16 %v4639
      %v4818 = vunpack.c.l.b16 %v4640
      %v4819 = vunpack.c.l.b16 %v4641
      %v4820 = vunpack.c.h.b16 %v4641
      %v4821 = vunpack.c.l.b16 %v4642
      %v4822 = vunpack.c.h.b16 %v4642
      %v4823 = vunpack.c.l.b16 %v4643
      %v4824 = vunpack.c.h.b16 %v4643
      %v4825 = vunpack.c.l.b16 %v4644
      %v4826 = vunpack.c.h.b16 %v4644
      %v4827 = vunpack.c.l.b16 %v4645
      %v4828 = vpack.c.b16 %v4720, %v4711
      %v4829 = vpack.c.b16 %v4721, %v4712
      %v4830 = vpack.c.b16 %v4722, %v4713
      %v4831 = vpack.c.b16 %v4723, %v4714
      %v4832 = vpack.c.b16 %v4724, %v4715
      %v4833 = vpack.c.b16 %v4725, %v4716
      %v4834 = vpack.c.b16 %v4726, %v4717
      %v4835 = vpack.c.b16 %v4727, %v4718
      %v4836 = vpack.c.b16 %v4728, %v4719
      %v4837 = vpack.c.b16 %v4738, %v4729
      %v4838 = vpack.c.b16 %v4739, %v4730
      %v4839 = vpack.c.b16 %v4740, %v4731
      %v4840 = vpack.c.b16 %v4741, %v4732
      %v4841 = vpack.c.b16 %v4742, %v4733
      %v4842 = vpack.c.b16 %v4743, %v4734
      %v4843 = vpack.c.b16 %v4744, %v4735
      %v4844 = vpack.c.b16 %v4745, %v4736
      %v4845 = vpack.c.b16 %v4746, %v4737
      %v4846 = vpack.c.b16 %v4756, %v4747
      %v4847 = vpack.c.b16 %v4757, %v4748
      %v4848 = vpack.c.b16 %v4758, %v4749
      %v4849 = vpack.c.b16 %v4759, %v4750
      %v4850 = vpack.c.b16 %v4760, %v4751
      %v4851 = vpack.c.b16 %v4761, %v4752
      %v4852 = vpack.c.b16 %v4762, %v4753
      %v4853 = vpack.c.b16 %v4763, %v4754
      %v4854 = vpack.c.b16 %v4764, %v4755
      %v4855 = vpack.c.b16 %v4774, %v4765
      %v4856 = vpack.c.b16 %v4775, %v4766
      %v4857 = vpack.c.b16 %v4776, %v4767
      %v4858 = vpack.c.b16 %v4777, %v4768
      %v4859 = vpack.c.b16 %v4778, %v4769
      %v4860 = vpack.c.b16 %v4779, %v4770
      %v4861 = vpack.c.b16 %v4780, %v4771
      %v4862 = vpack.c.b16 %v4781, %v4772
      %v4863 = vpack.c.b16 %v4782, %v4773
      %v4864 = vpack.c.b16 %v4792, %v4783
      %v4865 = vpack.c.b16 %v4793, %v4784
      %v4866 = vpack.c.b16 %v4794, %v4785
      %v4867 = vpack.c.b16 %v4795, %v4786
      %v4868 = vpack.c.b16 %v4796, %v4787
      %v4869 = vpack.c.b16 %v4797, %v4788
      %v4870 = vpack.c.b16 %v4798, %v4789
      %v4871 = vpack.c.b16 %v4799, %v4790
      %v4872 = vpack.c.b16 %v4800, %v4791
      %v4873 = vpack.c.b16 %v4810, %v4801
      %v4874 = vpack.c.b16 %v4811, %v4802
      %v4875 = vpack.c.b16 %v4812, %v4803
      %v4876 = vpack.c.b16 %v4813, %v4804
      %v4877 = vpack.c.b16 %v4814, %v4805
      %v4878 = vpack.c.b16 %v4815, %v4806
      %v4879 = vpack.c.b16 %v4816, %v4807
      %v4880 = vpack.c.b16 %v4817, %v4808
      %v4881 = vpack.c.b16 %v4818, %v4809
      %v4882 = vpack.c.b16 %v4819, %v4819
      %v4883 = vpack.c.b16 %v4820, %v4820
      %v4884 = vpack.c.b16 %v4821, %v4821
      %v4885 = vpack.c.b16 %v4822, %v4822
      %v4886 = vpack.c.b16 %v4823, %v4823
      %v4887 = vpack.c.b16 %v4824, %v4824
      %v4888 = vpack.c.b16 %v4825, %v4825
      %v4889 = vpack.c.b16 %v4826, %v4826
      %v4890 = vpack.c.b16 %v4827, %v4827
      %vm4947 = vcmask 531456
      %v4949 = vsel %vm4947, %v4836, 0
      %v4952 = vsel %vm4947, %v4845, 0
      %v4955 = vsel %vm4947, %v4854, 0
      %v4958 = vsel %vm4947, %v4863, 0
      %v4961 = vsel %vm4947, %v4872, 0
      %v4964 = vsel %vm4947, %v4881, 0
      %v4967 = vsel %vm4947, %v4890, 0
      %vm4969 = vcmask 1040384
      %v4970 = vsel 0, 4294967295, 65535
      %v4971 = vsel %vm4969, %v4970, 0
      %v4973 = vand.u32 %v4579, %v4971
      %v4976 = vand.u32 %v4580, %v4971
      %4978 = vmatprep.subr.bf16.mxu0 %v4458
      %4979 = vmatpush1.bf16.msra.mxu0 %v4457
      %4980 = vmatprep.subr.bf16.mxu0 %v4456
      %4981 = vmatpush1.bf16.msra.mxu0 %v4455
      %4982 = vmatprep.subr.bf16.mxu0 %v4454
      %4983 = vmatpush1.bf16.msra.mxu0 %v4453
      %4984 = vmatprep.subr.bf16.mxu0 %v4452
      %4985 = vmatpush1.bf16.msra.mxu0 %v4451
      %4986 = vmatprep.subr.bf16.mxu0 %v4450
      %4987 = vmatpush1.bf16.msra.mxu0 %v4449
      %4988 = vmatprep.subr.bf16.mxu0 %v4448
      %4989 = vmatpush1.bf16.msra.mxu0 %v4447
      %4990 = vmatprep.subr.bf16.mxu0 %v4446
      %4991 = vmatpush1.bf16.msra.mxu0 %v4445
      %4992 = vmatprep.subr.bf16.mxu0 %v4444
      %4993 = vmatpush1.bf16.msra.mxu0 %v4443
      %4994 = vmatprep.subr.bf16.mxu0 %v4474
      %4995 = vmatpush2.bf16.msra.mxu0 %v4473
      %4996 = vmatprep.subr.bf16.mxu0 %v4472
      %4997 = vmatpush2.bf16.msra.mxu0 %v4471
      %4998 = vmatprep.subr.bf16.mxu0 %v4470
      %4999 = vmatpush2.bf16.msra.mxu0 %v4469
      %5000 = vmatprep.subr.bf16.mxu0 %v4468
      %5001 = vmatpush2.bf16.msra.mxu0 %v4467
      %5002 = vmatprep.subr.bf16.mxu0 %v4466
      %5003 = vmatpush2.bf16.msra.mxu0 %v4465
      %5004 = vmatprep.subr.bf16.mxu0 %v4464
      %5005 = vmatpush2.bf16.msra.mxu0 %v4463
      %5006 = vmatprep.subr.bf16.mxu0 %v4462
      %5007 = vmatpush2.bf16.msra.mxu0 %v4461
      %5008 = vmatprep.subr.bf16.mxu0 %v4460
      %5009 = vmatpush2.bf16.msra.mxu0 %v4459
      %5010 = vmatprep.mubr.bf16.mxu0 %v4829
      %5011 = vmatmul.mubr.bf16.gmra.mxu0 %v4828
      %v5012 = vpop.f32.mrf.mxu0
      %v5013 = vadd.f32 0.0, %v5012
      %v5014 = vpop.f32.mrf.mxu0
      %v5015 = vadd.f32 0.0, %v5014
      %v5016 = vpop.f32.mrf.mxu0
      %v5017 = vadd.f32 0.0, %v5016
      %v5018 = vpop.f32.mrf.mxu0
      %v5019 = vadd.f32 0.0, %v5018
      %5020 = vmatprep.mubr.bf16.mxu0 %v4838
      %5021 = vmatmul.mubr.bf16.gmra.mxu0 %v4837
      %v5022 = vpop.f32.mrf.mxu0
      %v5023 = vadd.f32 0.0, %v5022
      %v5024 = vpop.f32.mrf.mxu0
      %v5025 = vadd.f32 0.0, %v5024
      %v5026 = vpop.f32.mrf.mxu0
      %v5027 = vadd.f32 0.0, %v5026
      %v5028 = vpop.f32.mrf.mxu0
      %v5029 = vadd.f32 0.0, %v5028
      %5030 = vmatprep.mubr.bf16.mxu0 %v4847
      %5031 = vmatmul.mubr.bf16.gmra.mxu0 %v4846
      %v5032 = vpop.f32.mrf.mxu0
      %v5033 = vadd.f32 0.0, %v5032
      %v5034 = vpop.f32.mrf.mxu0
      %v5035 = vadd.f32 0.0, %v5034
      %v5036 = vpop.f32.mrf.mxu0
      %v5037 = vadd.f32 0.0, %v5036
      %v5038 = vpop.f32.mrf.mxu0
      %v5039 = vadd.f32 0.0, %v5038
      %5040 = vmatprep.mubr.bf16.mxu0 %v4856
      %5041 = vmatmul.mubr.bf16.gmra.mxu0 %v4855
      %v5042 = vpop.f32.mrf.mxu0
      %v5043 = vadd.f32 0.0, %v5042
      %v5044 = vpop.f32.mrf.mxu0
      %v5045 = vadd.f32 0.0, %v5044
      %v5046 = vpop.f32.mrf.mxu0
      %v5047 = vadd.f32 0.0, %v5046
      %v5048 = vpop.f32.mrf.mxu0
      %v5049 = vadd.f32 0.0, %v5048
      %5050 = vmatprep.mubr.bf16.mxu0 %v4865
      %5051 = vmatmul.mubr.bf16.gmra.mxu0 %v4864
      %v5052 = vpop.f32.mrf.mxu0
      %v5053 = vadd.f32 0.0, %v5052
      %v5054 = vpop.f32.mrf.mxu0
      %v5055 = vadd.f32 0.0, %v5054
      %v5056 = vpop.f32.mrf.mxu0
      %v5057 = vadd.f32 0.0, %v5056
      %v5058 = vpop.f32.mrf.mxu0
      %v5059 = vadd.f32 0.0, %v5058
      %5060 = vmatprep.mubr.bf16.mxu0 %v4874
      %5061 = vmatmul.mubr.bf16.gmra.mxu0 %v4873
      %v5062 = vpop.f32.mrf.mxu0
      %v5063 = vadd.f32 0.0, %v5062
      %v5064 = vpop.f32.mrf.mxu0
      %v5065 = vadd.f32 0.0, %v5064
      %v5066 = vpop.f32.mrf.mxu0
      %v5067 = vadd.f32 0.0, %v5066
      %v5068 = vpop.f32.mrf.mxu0
      %v5069 = vadd.f32 0.0, %v5068
      %5070 = vmatprep.mubr.bf16.mxu0 %v4883
      %5071 = vmatmul.mubr.bf16.gmra.mxu0 %v4882
      %v5072 = vpop.f32.mrf.mxu0
      %v5073 = vadd.f32 0.0, %v5072
      %v5074 = vpop.f32.mrf.mxu0
      %v5075 = vadd.f32 0.0, %v5074
      %v5076 = vpop.f32.mrf.mxu0
      %v5077 = vpop.f32.mrf.mxu0
      %5078 = vdwg.mxu0
      %5079 = vmatprep.subr.bf16.mxu0 %v4490
      %5080 = vmatpush1.bf16.msra.mxu0 %v4489
      %5081 = vmatprep.subr.bf16.mxu0 %v4488
      %5082 = vmatpush1.bf16.msra.mxu0 %v4487
      %5083 = vmatprep.subr.bf16.mxu0 %v4486
      %5084 = vmatpush1.bf16.msra.mxu0 %v4485
      %5085 = vmatprep.subr.bf16.mxu0 %v4484
      %5086 = vmatpush1.bf16.msra.mxu0 %v4483
      %5087 = vmatprep.subr.bf16.mxu0 %v4482
      %5088 = vmatpush1.bf16.msra.mxu0 %v4481
      %5089 = vmatprep.subr.bf16.mxu0 %v4480
      %5090 = vmatpush1.bf16.msra.mxu0 %v4479
      %5091 = vmatprep.subr.bf16.mxu0 %v4478
      %5092 = vmatpush1.bf16.msra.mxu0 %v4477
      %5093 = vmatprep.subr.bf16.mxu0 %v4476
      %5094 = vmatpush1.bf16.msra.mxu0 %v4475
      %5095 = vmatprep.subr.bf16.mxu0 %v4506
      %5096 = vmatpush2.bf16.msra.mxu0 %v4505
      %5097 = vmatprep.subr.bf16.mxu0 %v4504
      %5098 = vmatpush2.bf16.msra.mxu0 %v4503
      %5099 = vmatprep.subr.bf16.mxu0 %v4502
      %5100 = vmatpush2.bf16.msra.mxu0 %v4501
      %5101 = vmatprep.subr.bf16.mxu0 %v4500
      %5102 = vmatpush2.bf16.msra.mxu0 %v4499
      %5103 = vmatprep.subr.bf16.mxu0 %v4498
      %5104 = vmatpush2.bf16.msra.mxu0 %v4497
      %5105 = vmatprep.subr.bf16.mxu0 %v4496
      %5106 = vmatpush2.bf16.msra.mxu0 %v4495
      %5107 = vmatprep.subr.bf16.mxu0 %v4494
      %5108 = vmatpush2.bf16.msra.mxu0 %v4493
      %5109 = vmatprep.subr.bf16.mxu0 %v4492
      %5110 = vmatpush2.bf16.msra.mxu0 %v4491
      %5111 = vmatprep.mubr.bf16.mxu0 %v4831
      %5112 = vmatmul.mubr.bf16.gmra.mxu0 %v4830
      %v5113 = vpop.f32.mrf.mxu0
      %v5114 = vadd.f32 %v5013, %v5113
      %v5115 = vpop.f32.mrf.mxu0
      %v5116 = vadd.f32 %v5015, %v5115
      %v5117 = vpop.f32.mrf.mxu0
      %v5118 = vadd.f32 %v5017, %v5117
      %v5119 = vpop.f32.mrf.mxu0
      %v5120 = vadd.f32 %v5019, %v5119
      %5121 = vmatprep.mubr.bf16.mxu0 %v4840
      %5122 = vmatmul.mubr.bf16.gmra.mxu0 %v4839
      %v5123 = vpop.f32.mrf.mxu0
      %v5124 = vadd.f32 %v5023, %v5123
      %v5125 = vpop.f32.mrf.mxu0
      %v5126 = vadd.f32 %v5025, %v5125
      %v5127 = vpop.f32.mrf.mxu0
      %v5128 = vadd.f32 %v5027, %v5127
      %v5129 = vpop.f32.mrf.mxu0
      %v5130 = vadd.f32 %v5029, %v5129
      %5131 = vmatprep.mubr.bf16.mxu0 %v4849
      %5132 = vmatmul.mubr.bf16.gmra.mxu0 %v4848
      %v5133 = vpop.f32.mrf.mxu0
      %v5134 = vadd.f32 %v5033, %v5133
      %v5135 = vpop.f32.mrf.mxu0
      %v5136 = vadd.f32 %v5035, %v5135
      %v5137 = vpop.f32.mrf.mxu0
      %v5138 = vadd.f32 %v5037, %v5137
      %v5139 = vpop.f32.mrf.mxu0
      %v5140 = vadd.f32 %v5039, %v5139
      %5141 = vmatprep.mubr.bf16.mxu0 %v4858
      %5142 = vmatmul.mubr.bf16.gmra.mxu0 %v4857
      %v5143 = vpop.f32.mrf.mxu0
      %v5144 = vadd.f32 %v5043, %v5143
      %v5145 = vpop.f32.mrf.mxu0
      %v5146 = vadd.f32 %v5045, %v5145
      %v5147 = vpop.f32.mrf.mxu0
      %v5148 = vadd.f32 %v5047, %v5147
      %v5149 = vpop.f32.mrf.mxu0
      %v5150 = vadd.f32 %v5049, %v5149
      %5151 = vmatprep.mubr.bf16.mxu0 %v4867
      %5152 = vmatmul.mubr.bf16.gmra.mxu0 %v4866
      %v5153 = vpop.f32.mrf.mxu0
      %v5154 = vadd.f32 %v5053, %v5153
      %v5155 = vpop.f32.mrf.mxu0
      %v5156 = vadd.f32 %v5055, %v5155
      %v5157 = vpop.f32.mrf.mxu0
      %v5158 = vadd.f32 %v5057, %v5157
      %v5159 = vpop.f32.mrf.mxu0
      %v5160 = vadd.f32 %v5059, %v5159
      %5161 = vmatprep.mubr.bf16.mxu0 %v4876
      %5162 = vmatmul.mubr.bf16.gmra.mxu0 %v4875
      %v5163 = vpop.f32.mrf.mxu0
      %v5164 = vadd.f32 %v5063, %v5163
      %v5165 = vpop.f32.mrf.mxu0
      %v5166 = vadd.f32 %v5065, %v5165
      %v5167 = vpop.f32.mrf.mxu0
      %v5168 = vadd.f32 %v5067, %v5167
      %v5169 = vpop.f32.mrf.mxu0
      %v5170 = vadd.f32 %v5069, %v5169
      %5171 = vmatprep.mubr.bf16.mxu0 %v4885
      %5172 = vmatmul.mubr.bf16.gmra.mxu0 %v4884
      %v5173 = vpop.f32.mrf.mxu0
      %v5174 = vadd.f32 %v5073, %v5173
      %v5175 = vpop.f32.mrf.mxu0
      %v5176 = vadd.f32 %v5075, %v5175
      %v5177 = vpop.f32.mrf.mxu0
      %v5178 = vpop.f32.mrf.mxu0
      %5179 = vdwg.mxu0
      %5180 = vmatprep.subr.bf16.mxu0 %v4522
      %5181 = vmatpush1.bf16.msra.mxu0 %v4521
      %5182 = vmatprep.subr.bf16.mxu0 %v4520
      %5183 = vmatpush1.bf16.msra.mxu0 %v4519
      %5184 = vmatprep.subr.bf16.mxu0 %v4518
      %5185 = vmatpush1.bf16.msra.mxu0 %v4517
      %5186 = vmatprep.subr.bf16.mxu0 %v4516
      %5187 = vmatpush1.bf16.msra.mxu0 %v4515
      %5188 = vmatprep.subr.bf16.mxu0 %v4514
      %5189 = vmatpush1.bf16.msra.mxu0 %v4513
      %5190 = vmatprep.subr.bf16.mxu0 %v4512
      %5191 = vmatpush1.bf16.msra.mxu0 %v4511
      %5192 = vmatprep.subr.bf16.mxu0 %v4510
      %5193 = vmatpush1.bf16.msra.mxu0 %v4509
      %5194 = vmatprep.subr.bf16.mxu0 %v4508
      %5195 = vmatpush1.bf16.msra.mxu0 %v4507
      %5196 = vmatprep.subr.bf16.mxu0 %v4538
      %5197 = vmatpush2.bf16.msra.mxu0 %v4537
      %5198 = vmatprep.subr.bf16.mxu0 %v4536
      %5199 = vmatpush2.bf16.msra.mxu0 %v4535
      %5200 = vmatprep.subr.bf16.mxu0 %v4534
      %5201 = vmatpush2.bf16.msra.mxu0 %v4533
      %5202 = vmatprep.subr.bf16.mxu0 %v4532
      %5203 = vmatpush2.bf16.msra.mxu0 %v4531
      %5204 = vmatprep.subr.bf16.mxu0 %v4530
      %5205 = vmatpush2.bf16.msra.mxu0 %v4529
      %5206 = vmatprep.subr.bf16.mxu0 %v4528
      %5207 = vmatpush2.bf16.msra.mxu0 %v4527
      %5208 = vmatprep.subr.bf16.mxu0 %v4526
      %5209 = vmatpush2.bf16.msra.mxu0 %v4525
      %5210 = vmatprep.subr.bf16.mxu0 %v4524
      %5211 = vmatpush2.bf16.msra.mxu0 %v4523
      %5212 = vmatprep.mubr.bf16.mxu0 %v4833
      %5213 = vmatmul.mubr.bf16.gmra.mxu0 %v4832
      %v5214 = vpop.f32.mrf.mxu0
      %v5215 = vadd.f32 %v5114, %v5214
      %v5216 = vpop.f32.mrf.mxu0
      %v5217 = vadd.f32 %v5116, %v5216
      %v5218 = vpop.f32.mrf.mxu0
      %v5219 = vadd.f32 %v5118, %v5218
      %v5220 = vpop.f32.mrf.mxu0
      %v5221 = vadd.f32 %v5120, %v5220
      %5222 = vmatprep.mubr.bf16.mxu0 %v4842
      %5223 = vmatmul.mubr.bf16.gmra.mxu0 %v4841
      %v5224 = vpop.f32.mrf.mxu0
      %v5225 = vadd.f32 %v5124, %v5224
      %v5226 = vpop.f32.mrf.mxu0
      %v5227 = vadd.f32 %v5126, %v5226
      %v5228 = vpop.f32.mrf.mxu0
      %v5229 = vadd.f32 %v5128, %v5228
      %v5230 = vpop.f32.mrf.mxu0
      %v5231 = vadd.f32 %v5130, %v5230
      %5232 = vmatprep.mubr.bf16.mxu0 %v4851
      %5233 = vmatmul.mubr.bf16.gmra.mxu0 %v4850
      %v5234 = vpop.f32.mrf.mxu0
      %v5235 = vadd.f32 %v5134, %v5234
      %v5236 = vpop.f32.mrf.mxu0
      %v5237 = vadd.f32 %v5136, %v5236
      %v5238 = vpop.f32.mrf.mxu0
      %v5239 = vadd.f32 %v5138, %v5238
      %v5240 = vpop.f32.mrf.mxu0
      %v5241 = vadd.f32 %v5140, %v5240
      %5242 = vmatprep.mubr.bf16.mxu0 %v4860
      %5243 = vmatmul.mubr.bf16.gmra.mxu0 %v4859
      %v5244 = vpop.f32.mrf.mxu0
      %v5245 = vadd.f32 %v5144, %v5244
      %v5246 = vpop.f32.mrf.mxu0
      %v5247 = vadd.f32 %v5146, %v5246
      %v5248 = vpop.f32.mrf.mxu0
      %v5249 = vadd.f32 %v5148, %v5248
      %v5250 = vpop.f32.mrf.mxu0
      %v5251 = vadd.f32 %v5150, %v5250
      %5252 = vmatprep.mubr.bf16.mxu0 %v4869
      %5253 = vmatmul.mubr.bf16.gmra.mxu0 %v4868
      %v5254 = vpop.f32.mrf.mxu0
      %v5255 = vadd.f32 %v5154, %v5254
      %v5256 = vpop.f32.mrf.mxu0
      %v5257 = vadd.f32 %v5156, %v5256
      %v5258 = vpop.f32.mrf.mxu0
      %v5259 = vadd.f32 %v5158, %v5258
      %v5260 = vpop.f32.mrf.mxu0
      %v5261 = vadd.f32 %v5160, %v5260
      %5262 = vmatprep.mubr.bf16.mxu0 %v4878
      %5263 = vmatmul.mubr.bf16.gmra.mxu0 %v4877
      %v5264 = vpop.f32.mrf.mxu0
      %v5265 = vadd.f32 %v5164, %v5264
      %v5266 = vpop.f32.mrf.mxu0
      %v5267 = vadd.f32 %v5166, %v5266
      %v5268 = vpop.f32.mrf.mxu0
      %v5269 = vadd.f32 %v5168, %v5268
      %v5270 = vpop.f32.mrf.mxu0
      %v5271 = vadd.f32 %v5170, %v5270
      %5272 = vmatprep.mubr.bf16.mxu0 %v4887
      %5273 = vmatmul.mubr.bf16.gmra.mxu0 %v4886
      %v5274 = vpop.f32.mrf.mxu0
      %v5275 = vadd.f32 %v5174, %v5274
      %v5276 = vpop.f32.mrf.mxu0
      %v5277 = vadd.f32 %v5176, %v5276
      %v5278 = vpop.f32.mrf.mxu0
      %v5279 = vpop.f32.mrf.mxu0
      %5280 = vdwg.mxu0
      %5281 = vmatprep.subr.bf16.mxu0 %v4554
      %5282 = vmatpush1.bf16.msra.mxu0 %v4553
      %5283 = vmatprep.subr.bf16.mxu0 %v4552
      %5284 = vmatpush1.bf16.msra.mxu0 %v4551
      %5285 = vmatprep.subr.bf16.mxu0 %v4550
      %5286 = vmatpush1.bf16.msra.mxu0 %v4549
      %5287 = vmatprep.subr.bf16.mxu0 %v4548
      %5288 = vmatpush1.bf16.msra.mxu0 %v4547
      %5289 = vmatprep.subr.bf16.mxu0 %v4546
      %5290 = vmatpush1.bf16.msra.mxu0 %v4545
      %5291 = vmatprep.subr.bf16.mxu0 %v4544
      %5292 = vmatpush1.bf16.msra.mxu0 %v4543
      %5293 = vmatprep.subr.bf16.mxu0 %v4542
      %5294 = vmatpush1.bf16.msra.mxu0 %v4541
      %5295 = vmatprep.subr.bf16.mxu0 %v4540
      %5296 = vmatpush1.bf16.msra.mxu0 %v4539
      %5297 = vmatprep.subr.bf16.mxu0 %v4570
      %5298 = vmatpush2.bf16.msra.mxu0 %v4569
      %5299 = vmatprep.subr.bf16.mxu0 %v4568
      %5300 = vmatpush2.bf16.msra.mxu0 %v4567
      %5301 = vmatprep.subr.bf16.mxu0 %v4566
      %5302 = vmatpush2.bf16.msra.mxu0 %v4565
      %5303 = vmatprep.subr.bf16.mxu0 %v4564
      %5304 = vmatpush2.bf16.msra.mxu0 %v4563
      %5305 = vmatprep.subr.bf16.mxu0 %v4562
      %5306 = vmatpush2.bf16.msra.mxu0 %v4561
      %5307 = vmatprep.subr.bf16.mxu0 %v4560
      %5308 = vmatpush2.bf16.msra.mxu0 %v4559
      %5309 = vmatprep.subr.bf16.mxu0 %v4558
      %5310 = vmatpush2.bf16.msra.mxu0 %v4557
      %5311 = vmatprep.subr.bf16.mxu0 %v4556
      %5312 = vmatpush2.bf16.msra.mxu0 %v4555
      %5313 = vmatprep.mubr.bf16.mxu0 %v4835
      %5314 = vmatmul.mubr.bf16.gmra.mxu0 %v4834
      %v5315 = vpop.f32.mrf.mxu0
      %v5316 = vadd.f32 %v5215, %v5315
      %v5317 = vpop.f32.mrf.mxu0
      %v5318 = vadd.f32 %v5217, %v5317
      %v5319 = vpop.f32.mrf.mxu0
      %v5320 = vadd.f32 %v5219, %v5319
      %v5321 = vpop.f32.mrf.mxu0
      %v5322 = vadd.f32 %v5221, %v5321
      %5323 = vmatprep.mubr.bf16.mxu0 %v4844
      %5324 = vmatmul.mubr.bf16.gmra.mxu0 %v4843
      %v5325 = vpop.f32.mrf.mxu0
      %v5326 = vadd.f32 %v5225, %v5325
      %v5327 = vpop.f32.mrf.mxu0
      %v5328 = vadd.f32 %v5227, %v5327
      %v5329 = vpop.f32.mrf.mxu0
      %v5330 = vadd.f32 %v5229, %v5329
      %v5331 = vpop.f32.mrf.mxu0
      %v5332 = vadd.f32 %v5231, %v5331
      %5333 = vmatprep.mubr.bf16.mxu0 %v4853
      %5334 = vmatmul.mubr.bf16.gmra.mxu0 %v4852
      %v5335 = vpop.f32.mrf.mxu0
      %v5336 = vadd.f32 %v5235, %v5335
      %v5337 = vpop.f32.mrf.mxu0
      %v5338 = vadd.f32 %v5237, %v5337
      %v5339 = vpop.f32.mrf.mxu0
      %v5340 = vadd.f32 %v5239, %v5339
      %v5341 = vpop.f32.mrf.mxu0
      %v5342 = vadd.f32 %v5241, %v5341
      %5343 = vmatprep.mubr.bf16.mxu0 %v4862
      %5344 = vmatmul.mubr.bf16.gmra.mxu0 %v4861
      %v5345 = vpop.f32.mrf.mxu0
      %v5346 = vadd.f32 %v5245, %v5345
      %v5347 = vpop.f32.mrf.mxu0
      %v5348 = vadd.f32 %v5247, %v5347
      %v5349 = vpop.f32.mrf.mxu0
      %v5350 = vadd.f32 %v5249, %v5349
      %v5351 = vpop.f32.mrf.mxu0
      %v5352 = vadd.f32 %v5251, %v5351
      %5353 = vmatprep.mubr.bf16.mxu0 %v4871
      %5354 = vmatmul.mubr.bf16.gmra.mxu0 %v4870
      %v5355 = vpop.f32.mrf.mxu0
      %v5356 = vadd.f32 %v5255, %v5355
      %v5357 = vpop.f32.mrf.mxu0
      %v5358 = vadd.f32 %v5257, %v5357
      %v5359 = vpop.f32.mrf.mxu0
      %v5360 = vadd.f32 %v5259, %v5359
      %v5361 = vpop.f32.mrf.mxu0
      %v5362 = vadd.f32 %v5261, %v5361
      %5363 = vmatprep.mubr.bf16.mxu0 %v4880
      %5364 = vmatmul.mubr.bf16.gmra.mxu0 %v4879
      %v5365 = vpop.f32.mrf.mxu0
      %v5366 = vadd.f32 %v5265, %v5365
      %v5367 = vpop.f32.mrf.mxu0
      %v5368 = vadd.f32 %v5267, %v5367
      %v5369 = vpop.f32.mrf.mxu0
      %v5370 = vadd.f32 %v5269, %v5369
      %v5371 = vpop.f32.mrf.mxu0
      %v5372 = vadd.f32 %v5271, %v5371
      %5373 = vmatprep.mubr.bf16.mxu0 %v4889
      %5374 = vmatmul.mubr.bf16.gmra.mxu0 %v4888
      %v5375 = vpop.f32.mrf.mxu0
      %v5376 = vadd.f32 %v5275, %v5375
      %v5377 = vpop.f32.mrf.mxu0
      %v5378 = vadd.f32 %v5277, %v5377
      %v5379 = vpop.f32.mrf.mxu0
      %v5380 = vpop.f32.mrf.mxu0
      %5381 = vdwg.mxu0
      %5382 = vmatprep.subr.bf16.mxu0 0
      %5383 = vmatpush1.bf16.msra.mxu0 0
      %5384 = vmatprep.subr.bf16.mxu0 0
      %5385 = vmatpush1.bf16.msra.mxu0 0
      %5386 = vmatprep.subr.bf16.mxu0 0
      %5387 = vmatpush1.bf16.msra.mxu0 0
      %5388 = vmatprep.subr.bf16.mxu0 %v4976
      %5389 = vmatpush1.bf16.msra.mxu0 %v4973
      %5390 = vmatprep.subr.bf16.mxu0 %v4578
      %5391 = vmatpush1.bf16.msra.mxu0 %v4577
      %5392 = vmatprep.subr.bf16.mxu0 %v4576
      %5393 = vmatpush1.bf16.msra.mxu0 %v4575
      %5394 = vmatprep.subr.bf16.mxu0 %v4574
      %5395 = vmatpush1.bf16.msra.mxu0 %v4573
      %5396 = vmatprep.subr.bf16.mxu0 %v4572
      %5397 = vmatpush1.bf16.msra.mxu0 %v4571
      %5398 = vmatprep.subr.bf16.mxu0 0
      %5399 = vmatpush2.bf16.msra.mxu0 0
      %5400 = vmatprep.subr.bf16.mxu0 0
      %5401 = vmatpush2.bf16.msra.mxu0 0
      %5402 = vmatprep.subr.bf16.mxu0 0
      %5403 = vmatpush2.bf16.msra.mxu0 0
      %5404 = vmatprep.subr.bf16.mxu0 0
      %5405 = vmatpush2.bf16.msra.mxu0 0
      %5406 = vmatprep.subr.bf16.mxu0 0
      %5407 = vmatpush2.bf16.msra.mxu0 0
      %5408 = vmatprep.subr.bf16.mxu0 0
      %5409 = vmatpush2.bf16.msra.mxu0 0
      %5410 = vmatprep.subr.bf16.mxu0 0
      %5411 = vmatpush2.bf16.msra.mxu0 0
      %5412 = vmatprep.subr.bf16.mxu0 0
      %5413 = vmatpush2.bf16.msra.mxu0 0
      %5414 = vmatprep.mubr.bf16.mxu0 0
      %5415 = vmatmul.mubr.bf16.gmra.mxu0 %v4949
      %v5416 = vpop.f32.mrf.mxu0
      %v5417 = vadd.f32 %v5316, %v5416
      %v5418 = vpop.f32.mrf.mxu0
      %v5419 = vadd.f32 %v5318, %v5418
      %v5420 = vpop.f32.mrf.mxu0
      %v5421 = vadd.f32 %v5320, %v5420
      %v5422 = vpop.f32.mrf.mxu0
      %v5423 = vadd.f32 %v5322, %v5422
      %5424 = vmatprep.mubr.bf16.mxu0 0
      %5425 = vmatmul.mubr.bf16.gmra.mxu0 %v4952
      %v5426 = vpop.f32.mrf.mxu0
      %v5427 = vadd.f32 %v5326, %v5426
      %v5428 = vpop.f32.mrf.mxu0
      %v5429 = vadd.f32 %v5328, %v5428
      %v5430 = vpop.f32.mrf.mxu0
      %v5431 = vadd.f32 %v5330, %v5430
      %v5432 = vpop.f32.mrf.mxu0
      %v5433 = vadd.f32 %v5332, %v5432
      %5434 = vmatprep.mubr.bf16.mxu0 0
      %5435 = vmatmul.mubr.bf16.gmra.mxu0 %v4955
      %v5436 = vpop.f32.mrf.mxu0
      %v5437 = vadd.f32 %v5336, %v5436
      %v5438 = vpop.f32.mrf.mxu0
      %v5439 = vadd.f32 %v5338, %v5438
      %v5440 = vpop.f32.mrf.mxu0
      %v5441 = vadd.f32 %v5340, %v5440
      %v5442 = vpop.f32.mrf.mxu0
      %v5443 = vadd.f32 %v5342, %v5442
      %5444 = vmatprep.mubr.bf16.mxu0 0
      %5445 = vmatmul.mubr.bf16.gmra.mxu0 %v4958
      %v5446 = vpop.f32.mrf.mxu0
      %v5447 = vadd.f32 %v5346, %v5446
      %v5448 = vpop.f32.mrf.mxu0
      %v5449 = vadd.f32 %v5348, %v5448
      %v5450 = vpop.f32.mrf.mxu0
      %v5451 = vadd.f32 %v5350, %v5450
      %v5452 = vpop.f32.mrf.mxu0
      %v5453 = vadd.f32 %v5352, %v5452
      %5454 = vmatprep.mubr.bf16.mxu0 0
      %5455 = vmatmul.mubr.bf16.gmra.mxu0 %v4961
      %v5456 = vpop.f32.mrf.mxu0
      %v5457 = vadd.f32 %v5356, %v5456
      %v5458 = vpop.f32.mrf.mxu0
      %v5459 = vadd.f32 %v5358, %v5458
      %v5460 = vpop.f32.mrf.mxu0
      %v5461 = vadd.f32 %v5360, %v5460
      %v5462 = vpop.f32.mrf.mxu0
      %v5463 = vadd.f32 %v5362, %v5462
      %5464 = vmatprep.mubr.bf16.mxu0 0
      %5465 = vmatmul.mubr.bf16.gmra.mxu0 %v4964
      %v5466 = vpop.f32.mrf.mxu0
      %v5467 = vadd.f32 %v5366, %v5466
      %v5468 = vpop.f32.mrf.mxu0
      %v5469 = vadd.f32 %v5368, %v5468
      %v5470 = vpop.f32.mrf.mxu0
      %v5471 = vadd.f32 %v5370, %v5470
      %v5472 = vpop.f32.mrf.mxu0
      %v5473 = vadd.f32 %v5372, %v5472
      %5474 = vmatprep.mubr.bf16.mxu0 0
      %5475 = vmatmul.mubr.bf16.gmra.mxu0 %v4967
      %v5476 = vpop.f32.mrf.mxu0
      %v5477 = vadd.f32 %v5376, %v5476
      %v5478 = vpop.f32.mrf.mxu0
      %v5479 = vadd.f32 %v5378, %v5478
      %v5480 = vpop.f32.mrf.mxu0
      %v5481 = vpop.f32.mrf.mxu0
      %5482 = vdwg.mxu0
      %v5483 = vld [vmem:[%s4] sm:$0xff]
      %v5484 = vld [vmem:[%s4 + $0x8] sm:$0xff]
      %v5485 = vld [vmem:[%s4 + $0x10] sm:$0xff]
      %v5486 = vld [vmem:[%s4 + $0x18] sm:$0xff]
      %v5487 = vld [vmem:[%s4 + $0x20] sm:$0xff]
      %v5488 = vld [vmem:[%s4 + $0x28] sm:$0xff]
      %v5489 = vld [vmem:[%s4 + $0x30] sm:$0xff]
      %v5490 = vld [vmem:[%s4 + $0x38] sm:$0xff]
      %v5491 = vld [vmem:[%s4 + $0x40] sm:$0xff]
      %v5492 = vld [vmem:[%s4 + $0x48] sm:$0xff]
      %v5493 = vld [vmem:[%s4 + $0x50] sm:$0xff]
      %v5494 = vld [vmem:[%s4 + $0x58] sm:$0xff]
      %v5495 = vld [vmem:[%s4 + $0x60] sm:$0x7]
      %v5496 = vlaneseq
      %v5497 = vshrl.u32 %v5496, 7
      %v5498 = vsub.s32 2, %v5497
      %v5499 = vrot.slane %v295, %v5498
      %v5500 = vlaneseq
      %v5501 = vshrl.u32 %v5500, 7
      %v5502 = vsub.s32 6, %v5501
      %v5503 = vrot.slane %v295, %v5502
      %v5506 = vlaneseq
      %v5507 = vshrl.u32 %v5506, 7
      %v5508 = vsub.s32 2, %v5507
      %v5509 = vrot.slane %v5499, %v5508
      %v5510 = vlaneseq
      %v5511 = vshrl.u32 %v5510, 7
      %v5512 = vsub.s32 2, %v5511
      %v5513 = vrot.slane %v5503, %v5512
      %5515 = vset.pattern.permute.xlu0 0
      %5516 = vperm.xlu0 %5515, %v5483
      %v5517 = vpop.permute.xlu0 %5516
      %5520 = vset.pattern.permute.xlu0 0
      %5521 = vperm.xlu0 %5520, %v5484
      %v5522 = vpop.permute.xlu0 %5521
      %5525 = vset.pattern.permute.xlu0 0
      %5526 = vperm.xlu0 %5525, %v5485
      %v5527 = vpop.permute.xlu0 %5526
      %5530 = vset.pattern.permute.xlu0 0
      %5531 = vperm.xlu0 %5530, %v5486
      %v5532 = vpop.permute.xlu0 %5531
      %5535 = vset.pattern.permute.xlu0 0
      %5536 = vperm.xlu0 %5535, %v5487
      %v5537 = vpop.permute.xlu0 %5536
      %5540 = vset.pattern.permute.xlu0 0
      %5541 = vperm.xlu0 %5540, %v5488
      %v5542 = vpop.permute.xlu0 %5541
      %5545 = vset.pattern.permute.xlu0 0
      %5546 = vperm.xlu0 %5545, %v5489
      %v5547 = vpop.permute.xlu0 %5546
      %5550 = vset.pattern.permute.xlu0 0
      %5551 = vperm.xlu0 %5550, %v5490
      %v5552 = vpop.permute.xlu0 %5551
      %5555 = vset.pattern.permute.xlu0 0
      %5556 = vperm.xlu0 %5555, %v5491
      %v5557 = vpop.permute.xlu0 %5556
      %5560 = vset.pattern.permute.xlu0 0
      %5561 = vperm.xlu0 %5560, %v5492
      %v5562 = vpop.permute.xlu0 %5561
      %5565 = vset.pattern.permute.xlu0 0
      %5566 = vperm.xlu0 %5565, %v5493
      %v5567 = vpop.permute.xlu0 %5566
      %5570 = vset.pattern.permute.xlu0 0
      %5571 = vperm.xlu0 %5570, %v5494
      %v5572 = vpop.permute.xlu0 %5571
      %5575 = vset.pattern.permute.xlu0 0
      %5576 = vperm.xlu0 %5575, %v5495
      %v5577 = vpop.permute.xlu0 %5576
      %v5579 = vsub.f32 %v5509, %v5517
      %v5580 = vsub.f32 %v5513, %v5517
      %v5581 = vsub.f32 %v5509, %v5522
      %v5582 = vsub.f32 %v5513, %v5522
      %v5583 = vsub.f32 %v5509, %v5527
      %v5584 = vsub.f32 %v5513, %v5527
      %v5585 = vsub.f32 %v5509, %v5532
      %v5586 = vsub.f32 %v5513, %v5532
      %v5587 = vsub.f32 %v5509, %v5537
      %v5588 = vsub.f32 %v5513, %v5537
      %v5589 = vsub.f32 %v5509, %v5542
      %v5590 = vsub.f32 %v5513, %v5542
      %v5591 = vsub.f32 %v5509, %v5547
      %v5592 = vsub.f32 %v5513, %v5547
      %v5593 = vsub.f32 %v5509, %v5552
      %v5594 = vsub.f32 %v5513, %v5552
      %v5595 = vsub.f32 %v5509, %v5557
      %v5596 = vsub.f32 %v5513, %v5557
      %v5597 = vsub.f32 %v5509, %v5562
      %v5598 = vsub.f32 %v5513, %v5562
      %v5599 = vsub.f32 %v5509, %v5567
      %v5600 = vsub.f32 %v5513, %v5567
      %v5601 = vsub.f32 %v5509, %v5572
      %v5602 = vsub.f32 %v5513, %v5572
      %v5603 = vsub.f32 %v5509, %v5577
      %v5604 = vsub.f32 %v5513, %v5577
      %v5605 = vand.u32 2147483647, %v5579
      %v5606 = vand.u32 2147483647, %v5580
      %v5607 = vand.u32 2147483647, %v5581
      %v5608 = vand.u32 2147483647, %v5582
      %v5609 = vand.u32 2147483647, %v5583
      %v5610 = vand.u32 2147483647, %v5584
      %v5611 = vand.u32 2147483647, %v5585
      %v5612 = vand.u32 2147483647, %v5586
      %v5613 = vand.u32 2147483647, %v5587
      %v5614 = vand.u32 2147483647, %v5588
      %v5615 = vand.u32 2147483647, %v5589
      %v5616 = vand.u32 2147483647, %v5590
      %v5617 = vand.u32 2147483647, %v5591
      %v5618 = vand.u32 2147483647, %v5592
      %v5619 = vand.u32 2147483647, %v5593
      %v5620 = vand.u32 2147483647, %v5594
      %v5621 = vand.u32 2147483647, %v5595
      %v5622 = vand.u32 2147483647, %v5596
      %v5623 = vand.u32 2147483647, %v5597
      %v5624 = vand.u32 2147483647, %v5598
      %v5625 = vand.u32 2147483647, %v5599
      %v5626 = vand.u32 2147483647, %v5600
      %v5627 = vand.u32 2147483647, %v5601
      %v5628 = vand.u32 2147483647, %v5602
      %v5629 = vand.u32 2147483647, %v5603
      %v5630 = vand.u32 2147483647, %v5604
      %v5631 = vsub.f32 1.0, %v5605
      %v5632 = vsub.f32 1.0, %v5606
      %v5633 = vsub.f32 1.0, %v5607
      %v5634 = vsub.f32 1.0, %v5608
      %v5635 = vsub.f32 1.0, %v5609
      %v5636 = vsub.f32 1.0, %v5610
      %v5637 = vsub.f32 1.0, %v5611
      %v5638 = vsub.f32 1.0, %v5612
      %v5639 = vsub.f32 1.0, %v5613
      %v5640 = vsub.f32 1.0, %v5614
      %v5641 = vsub.f32 1.0, %v5615
      %v5642 = vsub.f32 1.0, %v5616
      %v5643 = vsub.f32 1.0, %v5617
      %v5644 = vsub.f32 1.0, %v5618
      %v5645 = vsub.f32 1.0, %v5619
      %v5646 = vsub.f32 1.0, %v5620
      %v5647 = vsub.f32 1.0, %v5621
      %v5648 = vsub.f32 1.0, %v5622
      %v5649 = vsub.f32 1.0, %v5623
      %v5650 = vsub.f32 1.0, %v5624
      %v5651 = vsub.f32 1.0, %v5625
      %v5652 = vsub.f32 1.0, %v5626
      %v5653 = vsub.f32 1.0, %v5627
      %v5654 = vsub.f32 1.0, %v5628
      %v5655 = vsub.f32 1.0, %v5629
      %v5656 = vsub.f32 1.0, %v5630
      %v5657 = vmax.f32 %v5631, 0.0
      %v5658 = vmax.f32 %v5632, 0.0
      %v5659 = vmax.f32 %v5633, 0.0
      %v5660 = vmax.f32 %v5634, 0.0
      %v5661 = vmax.f32 %v5635, 0.0
      %v5662 = vmax.f32 %v5636, 0.0
      %v5663 = vmax.f32 %v5637, 0.0
      %v5664 = vmax.f32 %v5638, 0.0
      %v5665 = vmax.f32 %v5639, 0.0
      %v5666 = vmax.f32 %v5640, 0.0
      %v5667 = vmax.f32 %v5641, 0.0
      %v5668 = vmax.f32 %v5642, 0.0
      %v5669 = vmax.f32 %v5643, 0.0
      %v5670 = vmax.f32 %v5644, 0.0
      %v5671 = vmax.f32 %v5645, 0.0
      %v5672 = vmax.f32 %v5646, 0.0
      %v5673 = vmax.f32 %v5647, 0.0
      %v5674 = vmax.f32 %v5648, 0.0
      %v5675 = vmax.f32 %v5649, 0.0
      %v5676 = vmax.f32 %v5650, 0.0
      %v5677 = vmax.f32 %v5651, 0.0
      %v5678 = vmax.f32 %v5652, 0.0
      %v5679 = vmax.f32 %v5653, 0.0
      %v5680 = vmax.f32 %v5654, 0.0
      %v5681 = vmax.f32 %v5655, 0.0
      %v5682 = vmax.f32 %v5656, 0.0
      %v5683 = vld [vmem:[%s5] sm:$0x7]
      %v5684 = vmul.f32 %v5417, %v5657
      %v5685 = vmul.f32 %v5419, %v5658
      %v5686 = vmul.f32 %v5421, %v5659
      %v5687 = vmul.f32 %v5423, %v5660
      %v5688 = vmul.f32 %v5427, %v5661
      %v5689 = vmul.f32 %v5429, %v5662
      %v5690 = vmul.f32 %v5431, %v5663
      %v5691 = vmul.f32 %v5433, %v5664
      %v5692 = vmul.f32 %v5437, %v5665
      %v5693 = vmul.f32 %v5439, %v5666
      %v5694 = vmul.f32 %v5441, %v5667
      %v5695 = vmul.f32 %v5443, %v5668
      %v5696 = vmul.f32 %v5447, %v5669
      %v5697 = vmul.f32 %v5449, %v5670
      %v5698 = vmul.f32 %v5451, %v5671
      %v5699 = vmul.f32 %v5453, %v5672
      %v5700 = vmul.f32 %v5457, %v5673
      %v5701 = vmul.f32 %v5459, %v5674
      %v5702 = vmul.f32 %v5461, %v5675
      %v5703 = vmul.f32 %v5463, %v5676
      %v5704 = vmul.f32 %v5467, %v5677
      %v5705 = vmul.f32 %v5469, %v5678
      %v5706 = vmul.f32 %v5471, %v5679
      %v5707 = vmul.f32 %v5473, %v5680
      %v5708 = vmul.f32 %v5477, %v5681
      %v5709 = vmul.f32 %v5479, %v5682
      %vm5710 = vcmask 809984
      %v5712 = vsel %vm5710, %v5683, 0
      %vm5714 = vcmask 1042432
      %v5716 = vsel %vm5714, %v5708, 0
      %v5719 = vsel %vm5714, %v5709, 0
      %5721 = vmatprep.subr.mxu0 0.0
      %5722 = vmatpush1.msra.mxu0 0.0
      %5723 = vmatprep.subr.mxu0 0.0
      %5724 = vmatpush1.msra.mxu0 0.0
      %5725 = vmatprep.subr.mxu0 0.0
      %5726 = vmatpush1.msra.mxu0 0.0
      %5727 = vmatprep.subr.mxu0 %v5719
      %5728 = vmatpush1.msra.mxu0 %v5716
      %5729 = vmatprep.subr.mxu0 %v5707
      %5730 = vmatpush1.msra.mxu0 %v5706
      %5731 = vmatprep.subr.mxu0 %v5705
      %5732 = vmatpush1.msra.mxu0 %v5704
      %5733 = vmatprep.subr.mxu0 %v5703
      %5734 = vmatpush1.msra.mxu0 %v5702
      %5735 = vmatprep.subr.mxu0 %v5701
      %5736 = vmatpush1.msra.mxu0 %v5700
      %5737 = vmatprep.subr.mxu0 %v5699
      %5738 = vmatpush1.msra.mxu0 %v5698
      %5739 = vmatprep.subr.mxu0 %v5697
      %5740 = vmatpush1.msra.mxu0 %v5696
      %5741 = vmatprep.subr.mxu0 %v5695
      %5742 = vmatpush1.msra.mxu0 %v5694
      %5743 = vmatprep.subr.mxu0 %v5693
      %5744 = vmatpush1.msra.mxu0 %v5692
      %5745 = vmatprep.subr.mxu0 %v5691
      %5746 = vmatpush1.msra.mxu0 %v5690
      %5747 = vmatprep.subr.mxu0 %v5689
      %5748 = vmatpush1.msra.mxu0 %v5688
      %5749 = vmatprep.subr.mxu0 %v5687
      %5750 = vmatpush1.msra.mxu0 %v5686
      %5751 = vmatprep.subr.mxu0 %v5685
      %5752 = vmatpush1.msra.mxu0 %v5684
      %5753 = vmatprep.subr.mxu0 0.0
      %5754 = vmatpush2.msra.mxu0 0.0
      %5755 = vmatprep.subr.mxu0 0.0
      %5756 = vmatpush2.msra.mxu0 0.0
      %5757 = vmatprep.subr.mxu0 0.0
      %5758 = vmatpush2.msra.mxu0 0.0
      %5759 = vmatprep.subr.mxu0 0.0
      %5760 = vmatpush2.msra.mxu0 0.0
      %5761 = vmatprep.subr.mxu0 0.0
      %5762 = vmatpush2.msra.mxu0 0.0
      %5763 = vmatprep.subr.mxu0 0.0
      %5764 = vmatpush2.msra.mxu0 0.0
      %5765 = vmatprep.subr.mxu0 0.0
      %5766 = vmatpush2.msra.mxu0 0.0
      %5767 = vmatprep.subr.mxu0 0.0
      %5768 = vmatpush2.msra.mxu0 0.0
      %5769 = vmatprep.subr.mxu0 0.0
      %5770 = vmatpush2.msra.mxu0 0.0
      %5771 = vmatprep.subr.mxu0 0.0
      %5772 = vmatpush2.msra.mxu0 0.0
      %5773 = vmatprep.subr.mxu0 0.0
      %5774 = vmatpush2.msra.mxu0 0.0
      %5775 = vmatprep.subr.mxu0 0.0
      %5776 = vmatpush2.msra.mxu0 0.0
      %5777 = vmatprep.subr.mxu0 0.0
      %5778 = vmatpush2.msra.mxu0 0.0
      %5779 = vmatprep.subr.mxu0 0.0
      %5780 = vmatpush2.msra.mxu0 0.0
      %5781 = vmatprep.subr.mxu0 0.0
      %5782 = vmatpush2.msra.mxu0 0.0
      %5783 = vmatprep.subr.mxu0 0.0
      %5784 = vmatpush2.msra.mxu0 0.0
      %5785 = vmatprep.mubr.f32.mxu0 0.0
      %5786 = vmatmul.mubr.f32.gmra.mxu0 %v5712
      %v5787 = vpop.f32.mrf.mxu0
      %v5788 = vadd.f32 0.0, %v5787
      %v5789 = vpop.f32.mrf.mxu0
      %v5790 = vadd.f32 0.0, %v5789
      %5791 = vdwg.mxu0
      %v5794 = vcombine.low %v5788, %v5790
      %5796 = vst [vmem:[%s289] sm:$0x77] %v5794
      %s5797 = smul.u32 2, %s22
      %p5798 = scmp.lt.s32.totalorder %s21, 1
      %s5799 = scalar_select %p5798, %s21, 1
      %p5800 = scmp.lt.s32.totalorder %s5797, 1
      %s5801 = scalar_select %p5800, %s5797, 1
      %s5802 = smul.addr %s5799, 2
      %s5803 = sadd.s32 %s5801, %s5802
      %s5804 = smul.addr %s5803, 4
      %s5805 = scalar_lea.vmem %s6, %s5804
      // Predicated region
      $region45: #{generator3dlut_hr_lut_forward.1} parent=43 // pred_check
        %p5806 = pneg %p182
      $region46: #{generator3dlut_hr_lut_forward.1} parent=43 // pred_check_branch
        %5808 = sbr.rel (%p5806) target = $region48
      $region47: #{generator3dlut_hr_lut_forward.1} parent=43 // pred_region
        %s5809 = smul.u32 2, %s22
      $region48: #{generator3dlut_hr_lut_forward.1} parent=43 // pred_fallthru
        _
    $region44: #{generator3dlut_hr_lut_forward.1} parent=5 // pred_fallthru
      _
    %p5810 = scmp.le.s32.totalorder 2, %s12
    // Predicated region
    $region49: #{generator3dlut_hr_lut_forward.1} parent=5 // pred_check
      %p5811 = pneg %p5810
    $region50: #{generator3dlut_hr_lut_forward.1} parent=5 // pred_check_branch
      %5813 = sbr.rel (%p5811) target = $region52
    $region51: #{generator3dlut_hr_lut_forward.1} parent=5 // pred_region
      %s5814 = ssub.s32 %s12, 2
      // Predicated region
      $region53: #{generator3dlut_hr_lut_forward.1} parent=51 // pred_check
        %p5815 = pneg %p188
      $region54: #{generator3dlut_hr_lut_forward.1} parent=51 // pred_check_branch
        %5817 = sbr.rel (%p5815) target = $region56
      $region55: #{generator3dlut_hr_lut_forward.1} parent=51 // pred_region
        %s5818 = smul.u32 2, %s24
        %p5819 = scmp.lt.s32.totalorder %s23, 1
        %s5820 = scalar_select %p5819, %s23, 1
        %p5821 = scmp.lt.s32.totalorder %s5818, 1
        %s5822 = scalar_select %p5821, %s5818, 1
        %s5823 = smul.addr %s5820, 2
        %s5824 = sadd.s32 %s5822, %s5823
        %s5825 = smul.addr %s5824, 4
        %s5826 = scalar_lea.vmem %s6, %s5825
      $region56: #{generator3dlut_hr_lut_forward.1} parent=51 // pred_fallthru
        _
    $region52: #{generator3dlut_hr_lut_forward.1} parent=5 // pred_fallthru
      _
  $region6: #{generator3dlut_hr_lut_forward.1} parent=0 // loop_footer
    %s16 = sadd.s32 1, %s12
  $region7: #{generator3dlut_hr_lut_forward.1} parent=0 // loop_footer_branch
    %11 = sbr.rel target = $region3
  $region8: #{generator3dlut_hr_lut_forward.1} parent=0 // loop_exit
    _

</llo_original>
